<compile_context>
chip_gen: v6e
topology: v6e:2x2x1
jax: 0.10.0
libtpu: 0.0.40
codegen_flags: <defaults>
</compile_context>

<pallas_src>
import functools

import jax
import jax.numpy as jnp
from jax import lax
from jax.experimental import pallas as pl
from jax.experimental.pallas import tpu as pltpu


# ---------------------------------------------------------------------------
# Kernel: per-grid-step fused QKV projection + multi-head attention.
#   x_ref:     (block_b, S, H)              bf16 activations
#   w_ref:     (H, 3H)                      fused [Wq*scale | Wk | Wv], bf16, resident
#   b_ref:     (1, 3H)                      fused bias (f32, Q part pre-scaled), resident
#   mask_ref:  (block_b, mH, S, S)          additive mask (mH = 1 or num_head)
#   out_ref:   (block_b, num_head, S, D)    attention output (f32)
#   probs_ref: (block_b, num_head, S, S)    softmax probabilities (f32)
# ---------------------------------------------------------------------------
def fused_attn_kernel(x_ref, w_ref, b_ref, mask_ref, out_ref, probs_ref, *,
                      num_head, dim_head, compute_dtype):
    block_b, S, H = x_ref.shape

    # Fused QKV projection: one MXU pass over all rows of this block,
    # bf16 operands, f32 accumulation, then ONE cast back to bf16.
    x = x_ref[...].reshape(block_b * S, H)                         # bf16
    qkv = (jnp.dot(x, w_ref[...], preferred_element_type=jnp.float32)
           + b_ref[...]).astype(compute_dtype)                     # (block_b*S, 3H)

    contract_last = (((1,), (1,)), ((), ()))   # q . k^T without an explicit transpose
    mask_bcast = mask_ref.shape[1] == 1

    for bb in range(block_b):
        qkv_b = qkv[bb * S:(bb + 1) * S]                           # (S, 3H)
        if mask_bcast:
            mask_b = mask_ref[bb, 0].astype(jnp.float32)           # (S, S)
        for h in range(num_head):
            lo, hi = h * dim_head, (h + 1) * dim_head
            q_h = qkv_b[:, lo:hi]                                  # scale pre-folded
            k_h = qkv_b[:, H + lo:H + hi]
            v_h = qkv_b[:, 2 * H + lo:2 * H + hi]
            m = mask_b if mask_bcast else mask_ref[bb, h].astype(jnp.float32)

            scores = lax.dot_general(
                q_h, k_h, contract_last,
                preferred_element_type=jnp.float32) + m            # (S, S) f32

            # Exact softmax in f32 (stored probs must sum to 1).
            smax = jnp.max(scores, axis=-1, keepdims=True)
            e = jnp.exp(scores - smax)
            probs = e / jnp.sum(e, axis=-1, keepdims=True)

            probs_ref[bb, h] = probs                               # aligned (S,S) tile
            out_ref[bb, h] = jnp.dot(probs.astype(compute_dtype), v_h,
                                     preferred_element_type=jnp.float32)


# ---------------------------------------------------------------------------
# One-time parameter fusion (hoisted out of the per-call path).
# Module computes scores / scaling with scaling = dim_head ** -0.5, i.e.
# scores * sqrt(dim_head); we fold sqrt(dim_head) into Wq / bq here.
# ---------------------------------------------------------------------------
def fuse_qkv_params(params, *, dim_head, compute_dtype=jnp.bfloat16):
    score_scale = float(dim_head) ** 0.5
    w_fused = jnp.concatenate(
        [params["wq"].T * score_scale, params["wk"].T, params["wv"].T],
        axis=1).astype(compute_dtype)                              # (H, 3H)
    b_fused = jnp.concatenate(
        [params["bq"] * score_scale, params["bk"], params["bv"]]
    ).astype(jnp.float32)[None, :]                                 # (1, 3H)
    return w_fused, b_fused


# ---------------------------------------------------------------------------
# Wrapper: takes pre-fused weights (build them once with fuse_qkv_params).
# ---------------------------------------------------------------------------
def mixcoder_self_attention(hidden_states, attention_mask, w_fused, b_fused, *,
                            num_head, dim_head, block_b=1,
                            compute_dtype=jnp.bfloat16):
    B, S, H = hidden_states.shape
    assert H == num_head * dim_head
    assert B % block_b == 0
    mH = attention_mask.shape[1]
    assert mH in (1, num_head)

    # Halve the x DMA bytes (compute still accumulates in f32).
    x = hidden_states.astype(compute_dtype)

    kernel = functools.partial(
        fused_attn_kernel,
        num_head=num_head, dim_head=dim_head, compute_dtype=compute_dtype)

    # Explicit VMEM budget: double-buffered blocks + headroom for intermediates.
    per_buf = (block_b * S * H * 2                       # x (bf16)
               + H * 3 * H * 2                           # fused weight (bf16)
               + 3 * H * 4                               # fused bias (f32)
               + block_b * mH * S * S * 4                # mask
               + block_b * num_head * S * dim_head * 4   # out
               + block_b * num_head * S * S * 4)         # probs
    vmem_limit = int(min(128 * 2**20, max(32 * 2**20, 4 * per_buf)))

    out, probs = pl.pallas_call(
        kernel,
        grid=(B // block_b,),
        in_specs=[
            pl.BlockSpec((block_b, S, H), lambda b: (b, 0, 0)),        # x
            pl.BlockSpec((H, 3 * H), lambda b: (0, 0)),                # fused W (resident)
            pl.BlockSpec((1, 3 * H), lambda b: (0, 0)),                # fused bias (resident)
            pl.BlockSpec((block_b, mH, S, S), lambda b: (b, 0, 0, 0)), # mask
        ],
        out_specs=[
            pl.BlockSpec((block_b, num_head, S, dim_head), lambda b: (b, 0, 0, 0)),
            pl.BlockSpec((block_b, num_head, S, S), lambda b: (b, 0, 0, 0)),
        ],
        out_shape=[
            jax.ShapeDtypeStruct((B, num_head, S, dim_head), jnp.float32),
            jax.ShapeDtypeStruct((B, num_head, S, S), jnp.float32),
        ],
        compiler_params=pltpu.CompilerParams(
            dimension_semantics=("parallel",),
            vmem_limit_bytes=vmem_limit),
    )(x, w_fused, b_fused, attention_mask)

    return out, probs


# ---------------------------------------------------------------------------
# Pure-JAX reference (mirrors the PyTorch forward). `compute_dtype` lets us
# build a precision-matched (bf16 operands, f32 accumulate) reference as well
# as the exact f32 reference.
# ---------------------------------------------------------------------------
def reference(hidden_states, attention_mask, params, *, num_head, dim_head,
              compute_dtype=jnp.float32):
    B, S, H = hidden_states.shape
    scaling = dim_head ** (-0.5)
    cd = compute_dtype

    def proj(w, b):
        y = jnp.dot(hidden_states.reshape(B * S, H).astype(cd),
                    w.T.astype(cd),
                    preferred_element_type=jnp.float32) + b
        return y.reshape(B, S, num_head, dim_head).transpose(0, 2, 1, 3)

    q = proj(params["wq"], params["bq"])
    k = proj(params["wk"], params["bk"])
    v = proj(params["wv"], params["bv"])

    scores = jnp.einsum("bhqd,bhkd->bhqk", q.astype(cd), k.astype(cd),
                        preferred_element_type=jnp.float32) / scaling
    scores = scores + attention_mask
    probs = jax.nn.softmax(scores, axis=-1)
    out = jnp.einsum("bhqk,bhkd->bhqd", probs.astype(cd), v.astype(cd),
                     preferred_element_type=jnp.float32)
    return out, probs


if __name__ == "__main__":
    num_head, dim_head = 8, 64
    hidden = num_head * dim_head                      # 512
    B, S = 2, 8

    key = jax.random.PRNGKey(0)
    ks = jax.random.split(key, 10)

    params = {
        "wq": 0.02 * jax.random.normal(ks[0], (hidden, hidden), jnp.float32),
        "bq": 0.01 * jax.random.normal(ks[1], (hidden,), jnp.float32),
        "wk": 0.02 * jax.random.normal(ks[2], (hidden, hidden), jnp.float32),
        "bk": 0.01 * jax.random.normal(ks[3], (hidden,), jnp.float32),
        "wv": 0.02 * jax.random.normal(ks[4], (hidden, hidden), jnp.float32),
        "bv": 0.01 * jax.random.normal(ks[5], (hidden,), jnp.float32),
        # out_proj exists in __init__ but is unused in forward(); kept for parity.
        "wo": 0.02 * jax.random.normal(ks[6], (hidden, hidden), jnp.float32),
        "bo": 0.01 * jax.random.normal(ks[7], (hidden,), jnp.float32),
    }

    hidden_states = jax.random.normal(ks[8], (B, S, hidden), jnp.float32)
    attention_mask = 0.1 * jax.random.normal(ks[9], (B, 1, S, S), jnp.float32)

    # Hoisted one-time weight fusion (score scale folded into Q columns).
    w_fused, b_fused = fuse_qkv_params(params, dim_head=dim_head)

    out, probs = mixcoder_self_attention(
        hidden_states, attention_mask, w_fused, b_fused,
        num_head=num_head, dim_head=dim_head, block_b=1)
    jax.block_until_ready((out, probs))

    assert out.shape == (B, num_head, S, dim_head)
    assert probs.shape == (B, num_head, S, S)

    # (1) Tight check against a precision-matched reference (bf16 matmul
    #     operands, f32 accumulation).
    ref_out_bf16, ref_probs_bf16 = reference(
        hidden_states, attention_mask, params,
        num_head=num_head, dim_head=dim_head, compute_dtype=jnp.bfloat16)
    assert jnp.allclose(out, ref_out_bf16, rtol=1e-2, atol=1e-2), (
        float(jnp.max(jnp.abs(out - ref_out_bf16))))
    assert jnp.allclose(probs, ref_probs_bf16, rtol=1e-2, atol=1e-2), (
        float(jnp.max(jnp.abs(probs - ref_probs_bf16))))

    # (2) Loose sanity check against exact-f32 module semantics (slack covers
    #     the intentional bf16 MXU compute).
    ref_out_f32, ref_probs_f32 = reference(
        hidden_states, attention_mask, params,
        num_head=num_head, dim_head=dim_head, compute_dtype=jnp.float32)
    assert jnp.allclose(out, ref_out_f32, rtol=8e-2, atol=8e-2), (
        float(jnp.max(jnp.abs(out - ref_out_f32))))
    assert jnp.allclose(probs, ref_probs_f32, rtol=8e-2, atol=8e-2), (
        float(jnp.max(jnp.abs(probs - ref_probs_f32))))

    # Exact softmax => rows sum to 1 to f32 precision.
    assert jnp.allclose(jnp.sum(probs, axis=-1), 1.0, atol=1e-3)

    print("KERNEL_OK")
</pallas_src>

<mosaic_0001>
module attributes {stable_mosaic.version = 11 : i64} {
  func.func @fused_attn_kernel(%arg0: i32, %arg1: memref<1x8x512xbf16, #tpu.memory_space<vmem>>, %arg2: memref<512x1536xbf16, #tpu.memory_space<vmem>>, %arg3: memref<1x1536xf32, #tpu.memory_space<vmem>>, %arg4: memref<1x1x8x8xf32, #tpu.memory_space<vmem>>, %arg5: memref<1x8x8x64xf32, #tpu.memory_space<vmem>>, %arg6: memref<1x8x8x8xf32, #tpu.memory_space<vmem>>) attributes {dimension_semantics = [#tpu.dimension_semantics<parallel>], iteration_bounds = array<i64: 2>, scalar_prefetch = 0 : i64, scratch_operands = 0 : i64, tpu.core_type = #tpu.core_type<tc>, window_params = [{transform_indices = @transform_0, window_bounds = array<i64: 1, 8, 512>}, {pipeline_mode = #tpu.pipeline_mode<synchronous>, transform_indices = @transform_1, window_bounds = array<i64: 512, 1536>}, {pipeline_mode = #tpu.pipeline_mode<synchronous>, transform_indices = @transform_2, window_bounds = array<i64: 1, 1536>}, {transform_indices = @transform_3, window_bounds = array<i64: 1, 1, 8, 8>}, {transform_indices = @transform_4, window_bounds = array<i64: 1, 8, 8, 64>}, {transform_indices = @transform_5, window_bounds = array<i64: 1, 8, 8, 8>}]} {
    %c0 = arith.constant 0 : index
    %c0_0 = arith.constant 0 : index
    %c0_1 = arith.constant 0 : index
    %0 = vector.load %arg1[%c0, %c0_0, %c0_1] : memref<1x8x512xbf16, #tpu.memory_space<vmem>>, vector<1x8x512xbf16>
    %1 = vector.shape_cast %0 : vector<1x8x512xbf16> to vector<8x512xbf16>
    %c0_2 = arith.constant 0 : index
    %c0_3 = arith.constant 0 : index
    %2 = vector.load %arg2[%c0_2, %c0_3] : memref<512x1536xbf16, #tpu.memory_space<vmem>>, vector<512x1536xbf16>
    %cst = arith.constant dense<0.000000e+00> : vector<8x1536xf32>
    %3 = tpu.matmul %1, %2, %cst {dimension_numbers = #tpu.dot_dimension_numbers<[1], [0], [0], [1], [0, 0, 1, 1], [], []>} : vector<8x512xbf16>, vector<512x1536xbf16>, vector<8x1536xf32> -> vector<8x1536xf32>
    %c0_4 = arith.constant 0 : index
    %c0_5 = arith.constant 0 : index
    %4 = vector.load %arg3[%c0_4, %c0_5] : memref<1x1536xf32, #tpu.memory_space<vmem>>, vector<1x1536xf32>
    %5 = vector.broadcast %4 : vector<1x1536xf32> to vector<8x1536xf32>
    %6 = arith.addf %3, %5 : vector<8x1536xf32>
    %7 = arith.truncf %6 : vector<8x1536xf32> to vector<8x1536xbf16>
    %c0_6 = arith.constant 0 : index
    %c0_7 = arith.constant 0 : index
    %c0_8 = arith.constant 0 : index
    %c0_9 = arith.constant 0 : index
    %8 = vector.load %arg4[%c0_6, %c0_7, %c0_8, %c0_9] : memref<1x1x8x8xf32, #tpu.memory_space<vmem>>, vector<1x1x8x8xf32>
    %9 = vector.shape_cast %8 : vector<1x1x8x8xf32> to vector<8x8xf32>
    %10 = vector.extract_strided_slice %7 {offsets = [0, 0], sizes = [8, 64], strides = [1, 1]} : vector<8x1536xbf16> to vector<8x64xbf16>
    %11 = vector.extract_strided_slice %7 {offsets = [0, 512], sizes = [8, 64], strides = [1, 1]} : vector<8x1536xbf16> to vector<8x64xbf16>
    %12 = vector.extract_strided_slice %7 {offsets = [0, 1024], sizes = [8, 64], strides = [1, 1]} : vector<8x1536xbf16> to vector<8x64xbf16>
    %cst_10 = arith.constant dense<0.000000e+00> : vector<8x8xf32>
    %13 = tpu.matmul %10, %11, %cst_10 {dimension_numbers = #tpu.dot_dimension_numbers<[1], [1], [0], [0], [0, 0, 1, 0], [], []>} : vector<8x64xbf16>, vector<8x64xbf16>, vector<8x8xf32> -> vector<8x8xf32>
    %14 = arith.addf %13, %9 : vector<8x8xf32>
    %cst_11 = arith.constant dense<0xFF800000> : vector<8xf32>
    %15 = vector.multi_reduction <maximumf>, %14, %cst_11 [1] : vector<8x8xf32> to vector<8xf32>
    %16 = vector.shape_cast %15 : vector<8xf32> to vector<8x1xf32>
    %17 = vector.broadcast %16 : vector<8x1xf32> to vector<8x8xf32>
    %18 = arith.subf %14, %17 : vector<8x8xf32>
    %19 = math.exp %18 : vector<8x8xf32>
    %cst_12 = arith.constant dense<0.000000e+00> : vector<8xf32>
    %20 = vector.multi_reduction <add>, %19, %cst_12 [1] : vector<8x8xf32> to vector<8xf32>
    %21 = vector.shape_cast %20 : vector<8xf32> to vector<8x1xf32>
    %22 = vector.broadcast %21 : vector<8x1xf32> to vector<8x8xf32>
    %23 = arith.divf %19, %22 : vector<8x8xf32>
    %c0_13 = arith.constant 0 : index
    %c0_14 = arith.constant 0 : index
    %c0_15 = arith.constant 0 : index
    %c0_16 = arith.constant 0 : index
    %24 = vector.load %arg6[%c0_13, %c0_14, %c0_15, %c0_16] : memref<1x8x8x8xf32, #tpu.memory_space<vmem>>, vector<1x1x8x8xf32>
    %25 = vector.shape_cast %24 : vector<1x1x8x8xf32> to vector<8x8xf32>
    %26 = vector.shape_cast %23 : vector<8x8xf32> to vector<1x1x8x8xf32>
    tpu.vector_store %arg6[%c0_13, %c0_14, %c0_15, %c0_16], %26 {strides = array<i32>} : memref<1x8x8x8xf32, #tpu.memory_space<vmem>>, vector<1x1x8x8xf32>,
    %27 = arith.truncf %23 : vector<8x8xf32> to vector<8x8xbf16>
    %cst_17 = arith.constant dense<0.000000e+00> : vector<8x64xf32>
    %28 = tpu.matmul %27, %12, %cst_17 {dimension_numbers = #tpu.dot_dimension_numbers<[1], [0], [0], [1], [0, 0, 1, 1], [], []>} : vector<8x8xbf16>, vector<8x64xbf16>, vector<8x64xf32> -> vector<8x64xf32>
    %c0_18 = arith.constant 0 : index
    %c0_19 = arith.constant 0 : index
    %c0_20 = arith.constant 0 : index
    %c0_21 = arith.constant 0 : index
    %29 = vector.load %arg5[%c0_18, %c0_19, %c0_20, %c0_21] : memref<1x8x8x64xf32, #tpu.memory_space<vmem>>, vector<1x1x8x64xf32>
    %30 = vector.shape_cast %29 : vector<1x1x8x64xf32> to vector<8x64xf32>
    %31 = vector.shape_cast %28 : vector<8x64xf32> to vector<1x1x8x64xf32>
    tpu.vector_store %arg5[%c0_18, %c0_19, %c0_20, %c0_21], %31 {strides = array<i32>} : memref<1x8x8x64xf32, #tpu.memory_space<vmem>>, vector<1x1x8x64xf32>,
    %32 = vector.extract_strided_slice %7 {offsets = [0, 64], sizes = [8, 64], strides = [1, 1]} : vector<8x1536xbf16> to vector<8x64xbf16>
    %33 = vector.extract_strided_slice %7 {offsets = [0, 576], sizes = [8, 64], strides = [1, 1]} : vector<8x1536xbf16> to vector<8x64xbf16>
    %34 = vector.extract_strided_slice %7 {offsets = [0, 1088], sizes = [8, 64], strides = [1, 1]} : vector<8x1536xbf16> to vector<8x64xbf16>
    %cst_22 = arith.constant dense<0.000000e+00> : vector<8x8xf32>
    %35 = tpu.matmul %32, %33, %cst_22 {dimension_numbers = #tpu.dot_dimension_numbers<[1], [1], [0], [0], [0, 0, 1, 0], [], []>} : vector<8x64xbf16>, vector<8x64xbf16>, vector<8x8xf32> -> vector<8x8xf32>
    %36 = arith.addf %35, %9 : vector<8x8xf32>
    %cst_23 = arith.constant dense<0xFF800000> : vector<8xf32>
    %37 = vector.multi_reduction <maximumf>, %36, %cst_23 [1] : vector<8x8xf32> to vector<8xf32>
    %38 = vector.shape_cast %37 : vector<8xf32> to vector<8x1xf32>
    %39 = vector.broadcast %38 : vector<8x1xf32> to vector<8x8xf32>
    %40 = arith.subf %36, %39 : vector<8x8xf32>
    %41 = math.exp %40 : vector<8x8xf32>
    %cst_24 = arith.constant dense<0.000000e+00> : vector<8xf32>
    %42 = vector.multi_reduction <add>, %41, %cst_24 [1] : vector<8x8xf32> to vector<8xf32>
    %43 = vector.shape_cast %42 : vector<8xf32> to vector<8x1xf32>
    %44 = vector.broadcast %43 : vector<8x1xf32> to vector<8x8xf32>
    %45 = arith.divf %41, %44 : vector<8x8xf32>
    %c0_25 = arith.constant 0 : index
    %c1 = arith.constant 1 : index
    %c0_26 = arith.constant 0 : index
    %c0_27 = arith.constant 0 : index
    %46 = vector.load %arg6[%c0_25, %c1, %c0_26, %c0_27] : memref<1x8x8x8xf32, #tpu.memory_space<vmem>>, vector<1x1x8x8xf32>
    %47 = vector.shape_cast %46 : vector<1x1x8x8xf32> to vector<8x8xf32>
    %48 = vector.shape_cast %45 : vector<8x8xf32> to vector<1x1x8x8xf32>
    tpu.vector_store %arg6[%c0_25, %c1, %c0_26, %c0_27], %48 {strides = array<i32>} : memref<1x8x8x8xf32, #tpu.memory_space<vmem>>, vector<1x1x8x8xf32>,
    %49 = arith.truncf %45 : vector<8x8xf32> to vector<8x8xbf16>
    %cst_28 = arith.constant dense<0.000000e+00> : vector<8x64xf32>
    %50 = tpu.matmul %49, %34, %cst_28 {dimension_numbers = #tpu.dot_dimension_numbers<[1], [0], [0], [1], [0, 0, 1, 1], [], []>} : vector<8x8xbf16>, vector<8x64xbf16>, vector<8x64xf32> -> vector<8x64xf32>
    %c0_29 = arith.constant 0 : index
    %c1_30 = arith.constant 1 : index
    %c0_31 = arith.constant 0 : index
    %c0_32 = arith.constant 0 : index
    %51 = vector.load %arg5[%c0_29, %c1_30, %c0_31, %c0_32] : memref<1x8x8x64xf32, #tpu.memory_space<vmem>>, vector<1x1x8x64xf32>
    %52 = vector.shape_cast %51 : vector<1x1x8x64xf32> to vector<8x64xf32>
    %53 = vector.shape_cast %50 : vector<8x64xf32> to vector<1x1x8x64xf32>
    tpu.vector_store %arg5[%c0_29, %c1_30, %c0_31, %c0_32], %53 {strides = array<i32>} : memref<1x8x8x64xf32, #tpu.memory_space<vmem>>, vector<1x1x8x64xf32>,
    %54 = vector.extract_strided_slice %7 {offsets = [0, 128], sizes = [8, 64], strides = [1, 1]} : vector<8x1536xbf16> to vector<8x64xbf16>
    %55 = vector.extract_strided_slice %7 {offsets = [0, 640], sizes = [8, 64], strides = [1, 1]} : vector<8x1536xbf16> to vector<8x64xbf16>
    %56 = vector.extract_strided_slice %7 {offsets = [0, 1152], sizes = [8, 64], strides = [1, 1]} : vector<8x1536xbf16> to vector<8x64xbf16>
    %cst_33 = arith.constant dense<0.000000e+00> : vector<8x8xf32>
    %57 = tpu.matmul %54, %55, %cst_33 {dimension_numbers = #tpu.dot_dimension_numbers<[1], [1], [0], [0], [0, 0, 1, 0], [], []>} : vector<8x64xbf16>, vector<8x64xbf16>, vector<8x8xf32> -> vector<8x8xf32>
    %58 = arith.addf %57, %9 : vector<8x8xf32>
    %cst_34 = arith.constant dense<0xFF800000> : vector<8xf32>
    %59 = vector.multi_reduction <maximumf>, %58, %cst_34 [1] : vector<8x8xf32> to vector<8xf32>
    %60 = vector.shape_cast %59 : vector<8xf32> to vector<8x1xf32>
    %61 = vector.broadcast %60 : vector<8x1xf32> to vector<8x8xf32>
    %62 = arith.subf %58, %61 : vector<8x8xf32>
    %63 = math.exp %62 : vector<8x8xf32>
    %cst_35 = arith.constant dense<0.000000e+00> : vector<8xf32>
    %64 = vector.multi_reduction <add>, %63, %cst_35 [1] : vector<8x8xf32> to vector<8xf32>
    %65 = vector.shape_cast %64 : vector<8xf32> to vector<8x1xf32>
    %66 = vector.broadcast %65 : vector<8x1xf32> to vector<8x8xf32>
    %67 = arith.divf %63, %66 : vector<8x8xf32>
    %c0_36 = arith.constant 0 : index
    %c2 = arith.constant 2 : index
    %c0_37 = arith.constant 0 : index
    %c0_38 = arith.constant 0 : index
    %68 = vector.load %arg6[%c0_36, %c2, %c0_37, %c0_38] : memref<1x8x8x8xf32, #tpu.memory_space<vmem>>, vector<1x1x8x8xf32>
    %69 = vector.shape_cast %68 : vector<1x1x8x8xf32> to vector<8x8xf32>
    %70 = vector.shape_cast %67 : vector<8x8xf32> to vector<1x1x8x8xf32>
    tpu.vector_store %arg6[%c0_36, %c2, %c0_37, %c0_38], %70 {strides = array<i32>} : memref<1x8x8x8xf32, #tpu.memory_space<vmem>>, vector<1x1x8x8xf32>,
    %71 = arith.truncf %67 : vector<8x8xf32> to vector<8x8xbf16>
    %cst_39 = arith.constant dense<0.000000e+00> : vector<8x64xf32>
    %72 = tpu.matmul %71, %56, %cst_39 {dimension_numbers = #tpu.dot_dimension_numbers<[1], [0], [0], [1], [0, 0, 1, 1], [], []>} : vector<8x8xbf16>, vector<8x64xbf16>, vector<8x64xf32> -> vector<8x64xf32>
    %c0_40 = arith.constant 0 : index
    %c2_41 = arith.constant 2 : index
    %c0_42 = arith.constant 0 : index
    %c0_43 = arith.constant 0 : index
    %73 = vector.load %arg5[%c0_40, %c2_41, %c0_42, %c0_43] : memref<1x8x8x64xf32, #tpu.memory_space<vmem>>, vector<1x1x8x64xf32>
    %74 = vector.shape_cast %73 : vector<1x1x8x64xf32> to vector<8x64xf32>
    %75 = vector.shape_cast %72 : vector<8x64xf32> to vector<1x1x8x64xf32>
    tpu.vector_store %arg5[%c0_40, %c2_41, %c0_42, %c0_43], %75 {strides = array<i32>} : memref<1x8x8x64xf32, #tpu.memory_space<vmem>>, vector<1x1x8x64xf32>,
    %76 = vector.extract_strided_slice %7 {offsets = [0, 192], sizes = [8, 64], strides = [1, 1]} : vector<8x1536xbf16> to vector<8x64xbf16>
    %77 = vector.extract_strided_slice %7 {offsets = [0, 704], sizes = [8, 64], strides = [1, 1]} : vector<8x1536xbf16> to vector<8x64xbf16>
    %78 = vector.extract_strided_slice %7 {offsets = [0, 1216], sizes = [8, 64], strides = [1, 1]} : vector<8x1536xbf16> to vector<8x64xbf16>
    %cst_44 = arith.constant dense<0.000000e+00> : vector<8x8xf32>
    %79 = tpu.matmul %76, %77, %cst_44 {dimension_numbers = #tpu.dot_dimension_numbers<[1], [1], [0], [0], [0, 0, 1, 0], [], []>} : vector<8x64xbf16>, vector<8x64xbf16>, vector<8x8xf32> -> vector<8x8xf32>
    %80 = arith.addf %79, %9 : vector<8x8xf32>
    %cst_45 = arith.constant dense<0xFF800000> : vector<8xf32>
    %81 = vector.multi_reduction <maximumf>, %80, %cst_45 [1] : vector<8x8xf32> to vector<8xf32>
    %82 = vector.shape_cast %81 : vector<8xf32> to vector<8x1xf32>
    %83 = vector.broadcast %82 : vector<8x1xf32> to vector<8x8xf32>
    %84 = arith.subf %80, %83 : vector<8x8xf32>
    %85 = math.exp %84 : vector<8x8xf32>
    %cst_46 = arith.constant dense<0.000000e+00> : vector<8xf32>
    %86 = vector.multi_reduction <add>, %85, %cst_46 [1] : vector<8x8xf32> to vector<8xf32>
    %87 = vector.shape_cast %86 : vector<8xf32> to vector<8x1xf32>
    %88 = vector.broadcast %87 : vector<8x1xf32> to vector<8x8xf32>
    %89 = arith.divf %85, %88 : vector<8x8xf32>
    %c0_47 = arith.constant 0 : index
    %c3 = arith.constant 3 : index
    %c0_48 = arith.constant 0 : index
    %c0_49 = arith.constant 0 : index
    %90 = vector.load %arg6[%c0_47, %c3, %c0_48, %c0_49] : memref<1x8x8x8xf32, #tpu.memory_space<vmem>>, vector<1x1x8x8xf32>
    %91 = vector.shape_cast %90 : vector<1x1x8x8xf32> to vector<8x8xf32>
    %92 = vector.shape_cast %89 : vector<8x8xf32> to vector<1x1x8x8xf32>
    tpu.vector_store %arg6[%c0_47, %c3, %c0_48, %c0_49], %92 {strides = array<i32>} : memref<1x8x8x8xf32, #tpu.memory_space<vmem>>, vector<1x1x8x8xf32>,
    %93 = arith.truncf %89 : vector<8x8xf32> to vector<8x8xbf16>
    %cst_50 = arith.constant dense<0.000000e+00> : vector<8x64xf32>
    %94 = tpu.matmul %93, %78, %cst_50 {dimension_numbers = #tpu.dot_dimension_numbers<[1], [0], [0], [1], [0, 0, 1, 1], [], []>} : vector<8x8xbf16>, vector<8x64xbf16>, vector<8x64xf32> -> vector<8x64xf32>
    %c0_51 = arith.constant 0 : index
    %c3_52 = arith.constant 3 : index
    %c0_53 = arith.constant 0 : index
    %c0_54 = arith.constant 0 : index
    %95 = vector.load %arg5[%c0_51, %c3_52, %c0_53, %c0_54] : memref<1x8x8x64xf32, #tpu.memory_space<vmem>>, vector<1x1x8x64xf32>
    %96 = vector.shape_cast %95 : vector<1x1x8x64xf32> to vector<8x64xf32>
    %97 = vector.shape_cast %94 : vector<8x64xf32> to vector<1x1x8x64xf32>
    tpu.vector_store %arg5[%c0_51, %c3_52, %c0_53, %c0_54], %97 {strides = array<i32>} : memref<1x8x8x64xf32, #tpu.memory_space<vmem>>, vector<1x1x8x64xf32>,
    %98 = vector.extract_strided_slice %7 {offsets = [0, 256], sizes = [8, 64], strides = [1, 1]} : vector<8x1536xbf16> to vector<8x64xbf16>
    %99 = vector.extract_strided_slice %7 {offsets = [0, 768], sizes = [8, 64], strides = [1, 1]} : vector<8x1536xbf16> to vector<8x64xbf16>
    %100 = vector.extract_strided_slice %7 {offsets = [0, 1280], sizes = [8, 64], strides = [1, 1]} : vector<8x1536xbf16> to vector<8x64xbf16>
    %cst_55 = arith.constant dense<0.000000e+00> : vector<8x8xf32>
    %101 = tpu.matmul %98, %99, %cst_55 {dimension_numbers = #tpu.dot_dimension_numbers<[1], [1], [0], [0], [0, 0, 1, 0], [], []>} : vector<8x64xbf16>, vector<8x64xbf16>, vector<8x8xf32> -> vector<8x8xf32>
    %102 = arith.addf %101, %9 : vector<8x8xf32>
    %cst_56 = arith.constant dense<0xFF800000> : vector<8xf32>
    %103 = vector.multi_reduction <maximumf>, %102, %cst_56 [1] : vector<8x8xf32> to vector<8xf32>
    %104 = vector.shape_cast %103 : vector<8xf32> to vector<8x1xf32>
    %105 = vector.broadcast %104 : vector<8x1xf32> to vector<8x8xf32>
    %106 = arith.subf %102, %105 : vector<8x8xf32>
    %107 = math.exp %106 : vector<8x8xf32>
    %cst_57 = arith.constant dense<0.000000e+00> : vector<8xf32>
    %108 = vector.multi_reduction <add>, %107, %cst_57 [1] : vector<8x8xf32> to vector<8xf32>
    %109 = vector.shape_cast %108 : vector<8xf32> to vector<8x1xf32>
    %110 = vector.broadcast %109 : vector<8x1xf32> to vector<8x8xf32>
    %111 = arith.divf %107, %110 : vector<8x8xf32>
    %c0_58 = arith.constant 0 : index
    %c4 = arith.constant 4 : index
    %c0_59 = arith.constant 0 : index
    %c0_60 = arith.constant 0 : index
    %112 = vector.load %arg6[%c0_58, %c4, %c0_59, %c0_60] : memref<1x8x8x8xf32, #tpu.memory_space<vmem>>, vector<1x1x8x8xf32>
    %113 = vector.shape_cast %112 : vector<1x1x8x8xf32> to vector<8x8xf32>
    %114 = vector.shape_cast %111 : vector<8x8xf32> to vector<1x1x8x8xf32>
    tpu.vector_store %arg6[%c0_58, %c4, %c0_59, %c0_60], %114 {strides = array<i32>} : memref<1x8x8x8xf32, #tpu.memory_space<vmem>>, vector<1x1x8x8xf32>,
    %115 = arith.truncf %111 : vector<8x8xf32> to vector<8x8xbf16>
    %cst_61 = arith.constant dense<0.000000e+00> : vector<8x64xf32>
    %116 = tpu.matmul %115, %100, %cst_61 {dimension_numbers = #tpu.dot_dimension_numbers<[1], [0], [0], [1], [0, 0, 1, 1], [], []>} : vector<8x8xbf16>, vector<8x64xbf16>, vector<8x64xf32> -> vector<8x64xf32>
    %c0_62 = arith.constant 0 : index
    %c4_63 = arith.constant 4 : index
    %c0_64 = arith.constant 0 : index
    %c0_65 = arith.constant 0 : index
    %117 = vector.load %arg5[%c0_62, %c4_63, %c0_64, %c0_65] : memref<1x8x8x64xf32, #tpu.memory_space<vmem>>, vector<1x1x8x64xf32>
    %118 = vector.shape_cast %117 : vector<1x1x8x64xf32> to vector<8x64xf32>
    %119 = vector.shape_cast %116 : vector<8x64xf32> to vector<1x1x8x64xf32>
    tpu.vector_store %arg5[%c0_62, %c4_63, %c0_64, %c0_65], %119 {strides = array<i32>} : memref<1x8x8x64xf32, #tpu.memory_space<vmem>>, vector<1x1x8x64xf32>,
    %120 = vector.extract_strided_slice %7 {offsets = [0, 320], sizes = [8, 64], strides = [1, 1]} : vector<8x1536xbf16> to vector<8x64xbf16>
    %121 = vector.extract_strided_slice %7 {offsets = [0, 832], sizes = [8, 64], strides = [1, 1]} : vector<8x1536xbf16> to vector<8x64xbf16>
    %122 = vector.extract_strided_slice %7 {offsets = [0, 1344], sizes = [8, 64], strides = [1, 1]} : vector<8x1536xbf16> to vector<8x64xbf16>
    %cst_66 = arith.constant dense<0.000000e+00> : vector<8x8xf32>
    %123 = tpu.matmul %120, %121, %cst_66 {dimension_numbers = #tpu.dot_dimension_numbers<[1], [1], [0], [0], [0, 0, 1, 0], [], []>} : vector<8x64xbf16>, vector<8x64xbf16>, vector<8x8xf32> -> vector<8x8xf32>
    %124 = arith.addf %123, %9 : vector<8x8xf32>
    %cst_67 = arith.constant dense<0xFF800000> : vector<8xf32>
    %125 = vector.multi_reduction <maximumf>, %124, %cst_67 [1] : vector<8x8xf32> to vector<8xf32>
    %126 = vector.shape_cast %125 : vector<8xf32> to vector<8x1xf32>
    %127 = vector.broadcast %126 : vector<8x1xf32> to vector<8x8xf32>
    %128 = arith.subf %124, %127 : vector<8x8xf32>
    %129 = math.exp %128 : vector<8x8xf32>
    %cst_68 = arith.constant dense<0.000000e+00> : vector<8xf32>
    %130 = vector.multi_reduction <add>, %129, %cst_68 [1] : vector<8x8xf32> to vector<8xf32>
    %131 = vector.shape_cast %130 : vector<8xf32> to vector<8x1xf32>
    %132 = vector.broadcast %131 : vector<8x1xf32> to vector<8x8xf32>
    %133 = arith.divf %129, %132 : vector<8x8xf32>
    %c0_69 = arith.constant 0 : index
    %c5 = arith.constant 5 : index
    %c0_70 = arith.constant 0 : index
    %c0_71 = arith.constant 0 : index
    %134 = vector.load %arg6[%c0_69, %c5, %c0_70, %c0_71] : memref<1x8x8x8xf32, #tpu.memory_space<vmem>>, vector<1x1x8x8xf32>
    %135 = vector.shape_cast %134 : vector<1x1x8x8xf32> to vector<8x8xf32>
    %136 = vector.shape_cast %133 : vector<8x8xf32> to vector<1x1x8x8xf32>
    tpu.vector_store %arg6[%c0_69, %c5, %c0_70, %c0_71], %136 {strides = array<i32>} : memref<1x8x8x8xf32, #tpu.memory_space<vmem>>, vector<1x1x8x8xf32>,
    %137 = arith.truncf %133 : vector<8x8xf32> to vector<8x8xbf16>
    %cst_72 = arith.constant dense<0.000000e+00> : vector<8x64xf32>
    %138 = tpu.matmul %137, %122, %cst_72 {dimension_numbers = #tpu.dot_dimension_numbers<[1], [0], [0], [1], [0, 0, 1, 1], [], []>} : vector<8x8xbf16>, vector<8x64xbf16>, vector<8x64xf32> -> vector<8x64xf32>
    %c0_73 = arith.constant 0 : index
    %c5_74 = arith.constant 5 : index
    %c0_75 = arith.constant 0 : index
    %c0_76 = arith.constant 0 : index
    %139 = vector.load %arg5[%c0_73, %c5_74, %c0_75, %c0_76] : memref<1x8x8x64xf32, #tpu.memory_space<vmem>>, vector<1x1x8x64xf32>
    %140 = vector.shape_cast %139 : vector<1x1x8x64xf32> to vector<8x64xf32>
    %141 = vector.shape_cast %138 : vector<8x64xf32> to vector<1x1x8x64xf32>
    tpu.vector_store %arg5[%c0_73, %c5_74, %c0_75, %c0_76], %141 {strides = array<i32>} : memref<1x8x8x64xf32, #tpu.memory_space<vmem>>, vector<1x1x8x64xf32>,
    %142 = vector.extract_strided_slice %7 {offsets = [0, 384], sizes = [8, 64], strides = [1, 1]} : vector<8x1536xbf16> to vector<8x64xbf16>
    %143 = vector.extract_strided_slice %7 {offsets = [0, 896], sizes = [8, 64], strides = [1, 1]} : vector<8x1536xbf16> to vector<8x64xbf16>
    %144 = vector.extract_strided_slice %7 {offsets = [0, 1408], sizes = [8, 64], strides = [1, 1]} : vector<8x1536xbf16> to vector<8x64xbf16>
    %cst_77 = arith.constant dense<0.000000e+00> : vector<8x8xf32>
    %145 = tpu.matmul %142, %143, %cst_77 {dimension_numbers = #tpu.dot_dimension_numbers<[1], [1], [0], [0], [0, 0, 1, 0], [], []>} : vector<8x64xbf16>, vector<8x64xbf16>, vector<8x8xf32> -> vector<8x8xf32>
    %146 = arith.addf %145, %9 : vector<8x8xf32>
    %cst_78 = arith.constant dense<0xFF800000> : vector<8xf32>
    %147 = vector.multi_reduction <maximumf>, %146, %cst_78 [1] : vector<8x8xf32> to vector<8xf32>
    %148 = vector.shape_cast %147 : vector<8xf32> to vector<8x1xf32>
    %149 = vector.broadcast %148 : vector<8x1xf32> to vector<8x8xf32>
    %150 = arith.subf %146, %149 : vector<8x8xf32>
    %151 = math.exp %150 : vector<8x8xf32>
    %cst_79 = arith.constant dense<0.000000e+00> : vector<8xf32>
    %152 = vector.multi_reduction <add>, %151, %cst_79 [1] : vector<8x8xf32> to vector<8xf32>
    %153 = vector.shape_cast %152 : vector<8xf32> to vector<8x1xf32>
    %154 = vector.broadcast %153 : vector<8x1xf32> to vector<8x8xf32>
    %155 = arith.divf %151, %154 : vector<8x8xf32>
    %c0_80 = arith.constant 0 : index
    %c6 = arith.constant 6 : index
    %c0_81 = arith.constant 0 : index
    %c0_82 = arith.constant 0 : index
    %156 = vector.load %arg6[%c0_80, %c6, %c0_81, %c0_82] : memref<1x8x8x8xf32, #tpu.memory_space<vmem>>, vector<1x1x8x8xf32>
    %157 = vector.shape_cast %156 : vector<1x1x8x8xf32> to vector<8x8xf32>
    %158 = vector.shape_cast %155 : vector<8x8xf32> to vector<1x1x8x8xf32>
    tpu.vector_store %arg6[%c0_80, %c6, %c0_81, %c0_82], %158 {strides = array<i32>} : memref<1x8x8x8xf32, #tpu.memory_space<vmem>>, vector<1x1x8x8xf32>,
    %159 = arith.truncf %155 : vector<8x8xf32> to vector<8x8xbf16>
    %cst_83 = arith.constant dense<0.000000e+00> : vector<8x64xf32>
    %160 = tpu.matmul %159, %144, %cst_83 {dimension_numbers = #tpu.dot_dimension_numbers<[1], [0], [0], [1], [0, 0, 1, 1], [], []>} : vector<8x8xbf16>, vector<8x64xbf16>, vector<8x64xf32> -> vector<8x64xf32>
    %c0_84 = arith.constant 0 : index
    %c6_85 = arith.constant 6 : index
    %c0_86 = arith.constant 0 : index
    %c0_87 = arith.constant 0 : index
    %161 = vector.load %arg5[%c0_84, %c6_85, %c0_86, %c0_87] : memref<1x8x8x64xf32, #tpu.memory_space<vmem>>, vector<1x1x8x64xf32>
    %162 = vector.shape_cast %161 : vector<1x1x8x64xf32> to vector<8x64xf32>
    %163 = vector.shape_cast %160 : vector<8x64xf32> to vector<1x1x8x64xf32>
    tpu.vector_store %arg5[%c0_84, %c6_85, %c0_86, %c0_87], %163 {strides = array<i32>} : memref<1x8x8x64xf32, #tpu.memory_space<vmem>>, vector<1x1x8x64xf32>,
    %164 = vector.extract_strided_slice %7 {offsets = [0, 448], sizes = [8, 64], strides = [1, 1]} : vector<8x1536xbf16> to vector<8x64xbf16>
    %165 = vector.extract_strided_slice %7 {offsets = [0, 960], sizes = [8, 64], strides = [1, 1]} : vector<8x1536xbf16> to vector<8x64xbf16>
    %166 = vector.extract_strided_slice %7 {offsets = [0, 1472], sizes = [8, 64], strides = [1, 1]} : vector<8x1536xbf16> to vector<8x64xbf16>
    %cst_88 = arith.constant dense<0.000000e+00> : vector<8x8xf32>
    %167 = tpu.matmul %164, %165, %cst_88 {dimension_numbers = #tpu.dot_dimension_numbers<[1], [1], [0], [0], [0, 0, 1, 0], [], []>} : vector<8x64xbf16>, vector<8x64xbf16>, vector<8x8xf32> -> vector<8x8xf32>
    %168 = arith.addf %167, %9 : vector<8x8xf32>
    %cst_89 = arith.constant dense<0xFF800000> : vector<8xf32>
    %169 = vector.multi_reduction <maximumf>, %168, %cst_89 [1] : vector<8x8xf32> to vector<8xf32>
    %170 = vector.shape_cast %169 : vector<8xf32> to vector<8x1xf32>
    %171 = vector.broadcast %170 : vector<8x1xf32> to vector<8x8xf32>
    %172 = arith.subf %168, %171 : vector<8x8xf32>
    %173 = math.exp %172 : vector<8x8xf32>
    %cst_90 = arith.constant dense<0.000000e+00> : vector<8xf32>
    %174 = vector.multi_reduction <add>, %173, %cst_90 [1] : vector<8x8xf32> to vector<8xf32>
    %175 = vector.shape_cast %174 : vector<8xf32> to vector<8x1xf32>
    %176 = vector.broadcast %175 : vector<8x1xf32> to vector<8x8xf32>
    %177 = arith.divf %173, %176 : vector<8x8xf32>
    %c0_91 = arith.constant 0 : index
    %c7 = arith.constant 7 : index
    %c0_92 = arith.constant 0 : index
    %c0_93 = arith.constant 0 : index
    %178 = vector.load %arg6[%c0_91, %c7, %c0_92, %c0_93] : memref<1x8x8x8xf32, #tpu.memory_space<vmem>>, vector<1x1x8x8xf32>
    %179 = vector.shape_cast %178 : vector<1x1x8x8xf32> to vector<8x8xf32>
    %180 = vector.shape_cast %177 : vector<8x8xf32> to vector<1x1x8x8xf32>
    tpu.vector_store %arg6[%c0_91, %c7, %c0_92, %c0_93], %180 {strides = array<i32>} : memref<1x8x8x8xf32, #tpu.memory_space<vmem>>, vector<1x1x8x8xf32>,
    %181 = arith.truncf %177 : vector<8x8xf32> to vector<8x8xbf16>
    %cst_94 = arith.constant dense<0.000000e+00> : vector<8x64xf32>
    %182 = tpu.matmul %181, %166, %cst_94 {dimension_numbers = #tpu.dot_dimension_numbers<[1], [0], [0], [1], [0, 0, 1, 1], [], []>} : vector<8x8xbf16>, vector<8x64xbf16>, vector<8x64xf32> -> vector<8x64xf32>
    %c0_95 = arith.constant 0 : index
    %c7_96 = arith.constant 7 : index
    %c0_97 = arith.constant 0 : index
    %c0_98 = arith.constant 0 : index
    %183 = vector.load %arg5[%c0_95, %c7_96, %c0_97, %c0_98] : memref<1x8x8x64xf32, #tpu.memory_space<vmem>>, vector<1x1x8x64xf32>
    %184 = vector.shape_cast %183 : vector<1x1x8x64xf32> to vector<8x64xf32>
    %185 = vector.shape_cast %182 : vector<8x64xf32> to vector<1x1x8x64xf32>
    tpu.vector_store %arg5[%c0_95, %c7_96, %c0_97, %c0_98], %185 {strides = array<i32>} : memref<1x8x8x64xf32, #tpu.memory_space<vmem>>, vector<1x1x8x64xf32>,
    return
  }
  func.func @transform_0(%arg0: i32) -> (i32, i32, i32) {
    %c0_i32 = arith.constant 0 : i32
    %c0_i32_0 = arith.constant 0 : i32
    %c0_i32_1 = arith.constant 0 : i32
    return %arg0, %c0_i32, %c0_i32_0 : i32, i32, i32
  }
  func.func @transform_1(%arg0: i32) -> (i32, i32) {
    %c0_i32 = arith.constant 0 : i32
    %c0_i32_0 = arith.constant 0 : i32
    %c0_i32_1 = arith.constant 0 : i32
    return %c0_i32, %c0_i32_0 : i32, i32
  }
  func.func @transform_2(%arg0: i32) -> (i32, i32) {
    %c0_i32 = arith.constant 0 : i32
    %c0_i32_0 = arith.constant 0 : i32
    %c0_i32_1 = arith.constant 0 : i32
    return %c0_i32, %c0_i32_0 : i32, i32
  }
  func.func @transform_3(%arg0: i32) -> (i32, i32, i32, i32) {
    %c0_i32 = arith.constant 0 : i32
    %c0_i32_0 = arith.constant 0 : i32
    %c0_i32_1 = arith.constant 0 : i32
    %c0_i32_2 = arith.constant 0 : i32
    return %arg0, %c0_i32, %c0_i32_0, %c0_i32_1 : i32, i32, i32, i32
  }
  func.func @transform_4(%arg0: i32) -> (i32, i32, i32, i32) {
    %c0_i32 = arith.constant 0 : i32
    %c0_i32_0 = arith.constant 0 : i32
    %c0_i32_1 = arith.constant 0 : i32
    %c0_i32_2 = arith.constant 0 : i32
    return %arg0, %c0_i32, %c0_i32_0, %c0_i32_1 : i32, i32, i32, i32
  }
  func.func @transform_5(%arg0: i32) -> (i32, i32, i32, i32) {
    %c0_i32 = arith.constant 0 : i32
    %c0_i32_0 = arith.constant 0 : i32
    %c0_i32_1 = arith.constant 0 : i32
    %c0_i32_2 = arith.constant 0 : i32
    return %arg0, %c0_i32, %c0_i32_0, %c0_i32_1 : i32, i32, i32, i32
  }
}

</mosaic_0001>

<llo_original>
// kernel: tpu_custom_call.1
$region0: #{tpu_custom_call.1}
  #allocation0 [shape = 'u32[]', space=smem, size = 0x4, offset = 0x4, fixed_abs, tag = 'smem constant byte address 0x4 - core index']
  #allocation1 [shape = 'u32[144,128]{1,0:T(1,128)}', space=vmem, size = 0x12000, scoped, tag = 'internal scratch']
  %s0 = inlined_call_operand.hbm [shape: bf16[2,8,512], index: 0, kind: input, shape index: {}]
  %s1 = inlined_call_operand.hbm [shape: bf16[512,1536], index: 1, kind: input, shape index: {}]
  %s2 = inlined_call_operand.hbm [shape: f32[1,1536], index: 2, kind: input, shape index: {}]
  %s3 = inlined_call_operand.hbm [shape: f32[2,1,8,8], index: 3, kind: input, shape index: {}]
  %s4 = inlined_call_operand.hbm [shape: f32[2,8,8,64], index: 4, kind: output, shape index: {0}]
  %s5 = inlined_call_operand.hbm [shape: f32[2,8,8,8], index: 5, kind: output, shape index: {1}]
  %6 = xla_tuple %s4, %s5
  %s7 = sld [smem:[#allocation0]]
  $region73: #{tpu_custom_call.1} parent=0
    _
  %s9 = ssub.s32 1, %s7
  %s10 = scalar_select 0, %s9, %s7
  $region1: #{tpu_custom_call.1} parent=0
    #allocation2 [shape = 'u8[16384]{0}', space=vmem, size = 0x4000, scoped, tag = 'input window, operand 0']
    #allocation3 [shape = 's32[2]{0}', space=sflag, size = 0x8, scoped, tag = 'scoped memory for tpu_custom_call.1']
    #allocation4 [shape = 's32[2]{0}', space=sflag, size = 0x8, scoped, tag = 'scoped memory for tpu_custom_call.1']
    #allocation5 [shape = 'u8[1572864]{0}', space=vmem, size = 0x180000, scoped, tag = 'input window, operand 1, single buffered']
    #allocation6 [shape = 's32[1]{0}', space=sflag, size = 0x4, scoped, tag = 'scoped memory for tpu_custom_call.1']
    #allocation7 [shape = 'u8[6144]{0}', space=vmem, size = 0x1800, scoped, tag = 'input window, operand 2, single buffered']
    #allocation8 [shape = 'u8[8192]{0}', space=vmem, size = 0x2000, scoped, tag = 'input window, operand 3']
    #allocation9 [shape = 's32[2]{0}', space=sflag, size = 0x8, scoped, tag = 'scoped memory for tpu_custom_call.1']
    #allocation10 [shape = 'u8[65536]{0}', space=vmem, size = 0x10000, scoped, tag = 'output window, operand 0']
    #allocation11 [shape = 'u8[65536]{0}', space=vmem, size = 0x10000, scoped, tag = 'output window, operand 1']
    #allocation12 [shape = 's32[2]{0}', space=sflag, size = 0x8, scoped, tag = 'scoped memory for tpu_custom_call.1']
    %11 = vsyncpa [#allocation3], 0
    %s12 = scalar_lea.sflag [#allocation3], 1
    %13 = vsyncpa %s12, 0
    %14 = vsyncpa [#allocation6], 0
    %15 = vsyncpa [#allocation9], 0
    %s16 = scalar_lea.sflag [#allocation9], 1
    %17 = vsyncpa %s16, 0
    %18 = vsyncpa [#allocation4], 0
    %s19 = scalar_lea.sflag [#allocation4], 1
    %20 = vsyncpa %s19, 0
    %21 = vsyncpa [#allocation12], 0
    %s22 = scalar_lea.sflag [#allocation12], 1
    %23 = vsyncpa %s22, 0
    loop: start=0, step=1, limit=4
    $region2: #{tpu_custom_call.1} parent=1 // loop_pre_header
      _
    $region3: #{tpu_custom_call.1} parent=1 // loop_header
      %s25 = sphi 0, %s29
      %p26 = scmp.ge.s32.totalorder %s25, 4
      %s35 = sphi 0, %s37
      %s38 = sphi 0, %s35
      %s39 = sphi 0, %s38
      %s55 = sphi 0, %s39
      %s59 = sphi 0, %s59
      %s61 = sphi 0, %s59
      %s62 = sphi 0, %s61
      %s76 = sphi 0, %s62
      %s80 = sphi 0, %s80
      %s82 = sphi 0, %s80
      %s83 = sphi 0, %s82
      %s97 = sphi 0, %s83
      %s103 = sphi 0, %s105
      %s106 = sphi 0, %s103
      %s107 = sphi 0, %s106
      %s123 = sphi 0, %s107
      %s129 = sphi 0, %s131
      %s132 = sphi 0, %s129
      %s133 = sphi 0, %s132
      %s149 = sphi 0, %s133
      %s155 = sphi 0, %s157
      %s158 = sphi 0, %s155
      %s159 = sphi 0, %s158
      %s175 = sphi 0, %s159
    $region4: #{tpu_custom_call.1} parent=1 // loop_header_branch
      %28 = sbr.rel (%p26) target = $region8
    $region5: #{tpu_custom_call.1} parent=1 // loop_body
      %s30 = ssub.s32 %s25, 1
      %s31 = ssub.s32 %s25, 2
      %s32 = sadd.s32 %s25, 1
      %s33 = ssub.s32 %s25, %s32
      %p34 = scmp.eq.s32.totalorder %s33, 0
      %s36 = sadd.s32 %s35, 1
      %s37 = scalar_select %p34, %s35, %s36
      %p40 = pneg %p34
      %p41 = scmp.eq.s32.totalorder %s25, 1
      %p42 = por %p40, %p41
      %p43 = scmp.ne.s32.totalorder %s35, %s38
      %p44 = scmp.eq.s32.totalorder %s25, 0
      %p45 = por %p43, %p44
      %p46 = scmp.ne.s32.totalorder %s35, %s38
      %p47 = scmp.eq.s32.totalorder %s30, 1
      %p48 = por %p46, %p47
      %p49 = scmp.ne.s32.totalorder %s38, %s39
      %p50 = scmp.eq.s32.totalorder %s30, 0
      %p51 = por %p49, %p50
      %p52 = scmp.ne.s32.totalorder %s38, %s39
      %p53 = scmp.eq.s32.totalorder %s31, 1
      %p54 = por %p52, %p53
      %p56 = scmp.ne.s32.totalorder %s39, %s55
      %p57 = scmp.eq.s32.totalorder %s31, 0
      %p58 = por %p56, %p57
      %s60 = sadd.s32 %s59, 1
      %p63 = scmp.eq.s32.totalorder %s25, 1
      %p64 = scmp.ne.s32.totalorder %s59, %s61
      %p65 = scmp.eq.s32.totalorder %s25, 0
      %p66 = por %p64, %p65
      %p67 = scmp.ne.s32.totalorder %s59, %s61
      %p68 = scmp.eq.s32.totalorder %s30, 1
      %p69 = por %p67, %p68
      %p70 = scmp.ne.s32.totalorder %s61, %s62
      %p71 = scmp.eq.s32.totalorder %s30, 0
      %p72 = por %p70, %p71
      %p73 = scmp.ne.s32.totalorder %s61, %s62
      %p74 = scmp.eq.s32.totalorder %s31, 1
      %p75 = por %p73, %p74
      %p77 = scmp.ne.s32.totalorder %s62, %s76
      %p78 = scmp.eq.s32.totalorder %s31, 0
      %p79 = por %p77, %p78
      %s81 = sadd.s32 %s80, 1
      %p84 = scmp.eq.s32.totalorder %s25, 1
      %p85 = scmp.ne.s32.totalorder %s80, %s82
      %p86 = scmp.eq.s32.totalorder %s25, 0
      %p87 = por %p85, %p86
      %p88 = scmp.ne.s32.totalorder %s80, %s82
      %p89 = scmp.eq.s32.totalorder %s30, 1
      %p90 = por %p88, %p89
      %p91 = scmp.ne.s32.totalorder %s82, %s83
      %p92 = scmp.eq.s32.totalorder %s30, 0
      %p93 = por %p91, %p92
      %p94 = scmp.ne.s32.totalorder %s82, %s83
      %p95 = scmp.eq.s32.totalorder %s31, 1
      %p96 = por %p94, %p95
      %p98 = scmp.ne.s32.totalorder %s83, %s97
      %p99 = scmp.eq.s32.totalorder %s31, 0
      %p100 = por %p98, %p99
      %s101 = ssub.s32 %s25, %s32
      %p102 = scmp.eq.s32.totalorder %s101, 0
      %s104 = sadd.s32 %s103, 1
      %s105 = scalar_select %p102, %s103, %s104
      %p108 = pneg %p102
      %p109 = scmp.eq.s32.totalorder %s25, 1
      %p110 = por %p108, %p109
      %p111 = scmp.ne.s32.totalorder %s103, %s106
      %p112 = scmp.eq.s32.totalorder %s25, 0
      %p113 = por %p111, %p112
      %p114 = scmp.ne.s32.totalorder %s103, %s106
      %p115 = scmp.eq.s32.totalorder %s30, 1
      %p116 = por %p114, %p115
      %p117 = scmp.ne.s32.totalorder %s106, %s107
      %p118 = scmp.eq.s32.totalorder %s30, 0
      %p119 = por %p117, %p118
      %p120 = scmp.ne.s32.totalorder %s106, %s107
      %p121 = scmp.eq.s32.totalorder %s31, 1
      %p122 = por %p120, %p121
      %p124 = scmp.ne.s32.totalorder %s107, %s123
      %p125 = scmp.eq.s32.totalorder %s31, 0
      %p126 = por %p124, %p125
      %s127 = ssub.s32 %s25, %s32
      %p128 = scmp.eq.s32.totalorder %s127, 0
      %s130 = sadd.s32 %s129, 1
      %s131 = scalar_select %p128, %s129, %s130
      %p134 = pneg %p128
      %p135 = scmp.eq.s32.totalorder %s25, 1
      %p136 = por %p134, %p135
      %p137 = scmp.ne.s32.totalorder %s129, %s132
      %p138 = scmp.eq.s32.totalorder %s25, 0
      %p139 = por %p137, %p138
      %p140 = scmp.ne.s32.totalorder %s129, %s132
      %p141 = scmp.eq.s32.totalorder %s30, 1
      %p142 = por %p140, %p141
      %p143 = scmp.ne.s32.totalorder %s132, %s133
      %p144 = scmp.eq.s32.totalorder %s30, 0
      %p145 = por %p143, %p144
      %p146 = scmp.ne.s32.totalorder %s132, %s133
      %p147 = scmp.eq.s32.totalorder %s31, 1
      %p148 = por %p146, %p147
      %p150 = scmp.ne.s32.totalorder %s133, %s149
      %p151 = scmp.eq.s32.totalorder %s31, 0
      %p152 = por %p150, %p151
      %s153 = ssub.s32 %s25, %s32
      %p154 = scmp.eq.s32.totalorder %s153, 0
      %s156 = sadd.s32 %s155, 1
      %s157 = scalar_select %p154, %s155, %s156
      %p160 = pneg %p154
      %p161 = scmp.eq.s32.totalorder %s25, 1
      %p162 = por %p160, %p161
      %p163 = scmp.ne.s32.totalorder %s155, %s158
      %p164 = scmp.eq.s32.totalorder %s25, 0
      %p165 = por %p163, %p164
      %p166 = scmp.ne.s32.totalorder %s155, %s158
      %p167 = scmp.eq.s32.totalorder %s30, 1
      %p168 = por %p166, %p167
      %p169 = scmp.ne.s32.totalorder %s158, %s159
      %p170 = scmp.eq.s32.totalorder %s30, 0
      %p171 = por %p169, %p170
      %p172 = scmp.ne.s32.totalorder %s158, %s159
      %p173 = scmp.eq.s32.totalorder %s31, 1
      %p174 = por %p172, %p173
      %p176 = scmp.ne.s32.totalorder %s159, %s175
      %p177 = scmp.eq.s32.totalorder %s31, 0
      %p178 = por %p176, %p177
      %p179 = scmp.le.s32.totalorder 1, %s25
      %p180 = scmp.lt.s32.totalorder %s25, 3
      %p181 = pnand %p179, %p180
      %p182 = pneg %p181
      // Predicated region
      $region9: #{tpu_custom_call.1} parent=5 // pred_check
        _
      $region10: #{tpu_custom_call.1} parent=5 // pred_check_branch
        %184 = sbr.rel (%p181) target = $region12
      $region11: #{tpu_custom_call.1} parent=5 // pred_region
        %s185 = ssub.s32 %s25, 1
        // Predicated region
        $region13: #{tpu_custom_call.1} parent=11 // pred_check
          %p186 = pneg %p72
        $region14: #{tpu_custom_call.1} parent=11 // pred_check_branch
          %188 = sbr.rel (%p186) target = $region16
        $region15: #{tpu_custom_call.1} parent=11 // pred_region
          %s190 = ssub.s32 49152, 49152
          %191 = vsyncadd [#allocation6], %s190
          %s192 = sshll.u32 [#allocation5], 4
          %s193 = int_to_ptr.vmem [resolvable:$true] %s192
          %198 = dma.hbm_to_vmem [thread:$0]  %s1, 49152, %s193, [#allocation6], 768, 768, 48
        $region16: #{tpu_custom_call.1} parent=11 // pred_fallthru
          _
        // Predicated region
        $region17: #{tpu_custom_call.1} parent=11 // pred_check
          %p199 = pneg %p93
        $region18: #{tpu_custom_call.1} parent=11 // pred_check_branch
          %201 = sbr.rel (%p199) target = $region20
        $region19: #{tpu_custom_call.1} parent=11 // pred_region
          %s203 = ssub.s32 192, 192
          %204 = vsyncadd [#allocation6], %s203
          %s206 = sshll.u32 [#allocation7], 4
          %s207 = int_to_ptr.vmem [resolvable:$true] %s206
          %209 = dma.hbm_to_vmem [thread:$0]  %s2, 192, %s207, [#allocation6]
        $region20: #{tpu_custom_call.1} parent=11 // pred_fallthru
          _
      $region12: #{tpu_custom_call.1} parent=5 // pred_fallthru
        _
      %p210 = scmp.lt.s32.totalorder %s25, 2
      // Predicated region
      $region21: #{tpu_custom_call.1} parent=5 // pred_check
        %p211 = pneg %p210
      $region22: #{tpu_custom_call.1} parent=5 // pred_check_branch
        %213 = sbr.rel (%p211) target = $region24
      $region23: #{tpu_custom_call.1} parent=5 // pred_region
        // Predicated region
        $region25: #{tpu_custom_call.1} parent=23 // pred_check
          %p214 = pneg %p45
        $region26: #{tpu_custom_call.1} parent=23 // pred_check_branch
          %216 = sbr.rel (%p214) target = $region28
        $region27: #{tpu_custom_call.1} parent=23 // pred_region
          %s217 = sand.u32 %s35, 1
          %s218 = scalar_lea.sflag [#allocation3], %s217
          %s219 = sand.u32 %s35, 1
          %s220 = smul.addr %s219, 16
          %s221 = scalar_lea.vmem [#allocation2], %s220
          %s223 = ssub.s32 256, 256
          %224 = vsyncadd %s218, %s223
          %s225 = smul.addr %s25, 4
          %s226 = smul.addr %s225, 64
          %s227 = scalar_lea.hbm %s0, %s226
          %s229 = sshll.u32 %s221, 4
          %s230 = int_to_ptr.vmem [resolvable:$true] %s229
          %232 = dma.hbm_to_vmem [thread:$0]  %s227, 256, %s230, %s218
        $region28: #{tpu_custom_call.1} parent=23 // pred_fallthru
          _
        // Predicated region
        $region29: #{tpu_custom_call.1} parent=23 // pred_check
          %p233 = pneg %p113
        $region30: #{tpu_custom_call.1} parent=23 // pred_check_branch
          %235 = sbr.rel (%p233) target = $region32
        $region31: #{tpu_custom_call.1} parent=23 // pred_region
          %s236 = sand.u32 %s103, 1
          %s237 = scalar_lea.sflag [#allocation9], %s236
          %s238 = sand.u32 %s103, 1
          %s239 = smul.addr %s238, 8
          %s240 = scalar_lea.vmem [#allocation8], %s239
          %s242 = ssub.s32 128, 128
          %243 = vsyncadd %s237, %s242
          %s244 = smul.addr %s25, 128
          %s245 = scalar_lea.hbm %s3, %s244
          %s247 = sshll.u32 %s240, 4
          %s248 = int_to_ptr.vmem [resolvable:$true] %s247
          %250 = dma.hbm_to_vmem [thread:$0]  %s245, 128, %s248, %s237
        $region32: #{tpu_custom_call.1} parent=23 // pred_fallthru
          _
      $region24: #{tpu_custom_call.1} parent=5 // pred_fallthru
        _
      %p251 = scmp.le.s32.totalorder 1, %s25
      %p252 = scmp.lt.s32.totalorder %s25, 3
      %p253 = pnand %p251, %p252
      %p254 = pneg %p253
      // Predicated region
      $region33: #{tpu_custom_call.1} parent=5 // pred_check
        _
      $region34: #{tpu_custom_call.1} parent=5 // pred_check_branch
        %256 = sbr.rel (%p253) target = $region36
      $region35: #{tpu_custom_call.1} parent=5 // pred_region
        %s257 = ssub.s32 %s25, 1
        %s258 = sand.u32 %s38, 1
        %s259 = scalar_lea.sflag [#allocation3], %s258
        %s260 = sand.u32 %s38, 1
        %s261 = smul.addr %s260, 16
        %s262 = scalar_lea.vmem [#allocation2], %s261
        // Predicated region
        $region37: #{tpu_custom_call.1} parent=35 // pred_check
          %p263 = pneg %p51
        $region38: #{tpu_custom_call.1} parent=35 // pred_check_branch
          %265 = sbr.rel (%p263) target = $region40
        $region39: #{tpu_custom_call.1} parent=35 // pred_region
          %266 = dma.done %s259, 256
        $region40: #{tpu_custom_call.1} parent=35 // pred_fallthru
          _
        // Predicated region
        $region41: #{tpu_custom_call.1} parent=35 // pred_check
          %p267 = pneg %p72
        $region42: #{tpu_custom_call.1} parent=35 // pred_check_branch
          %269 = sbr.rel (%p267) target = $region44
        $region43: #{tpu_custom_call.1} parent=35 // pred_region
          %270 = dma.done [#allocation6], 49152
        $region44: #{tpu_custom_call.1} parent=35 // pred_fallthru
          _
        // Predicated region
        $region45: #{tpu_custom_call.1} parent=35 // pred_check
          %p271 = pneg %p93
        $region46: #{tpu_custom_call.1} parent=35 // pred_check_branch
          %273 = sbr.rel (%p271) target = $region48
        $region47: #{tpu_custom_call.1} parent=35 // pred_region
          %274 = dma.done [#allocation6], 192
        $region48: #{tpu_custom_call.1} parent=35 // pred_fallthru
          _
        %s275 = sand.u32 %s106, 1
        %s276 = scalar_lea.sflag [#allocation9], %s275
        %s277 = sand.u32 %s106, 1
        %s278 = smul.addr %s277, 8
        %s279 = scalar_lea.vmem [#allocation8], %s278
        // Predicated region
        $region49: #{tpu_custom_call.1} parent=35 // pred_check
          %p280 = pneg %p119
        $region50: #{tpu_custom_call.1} parent=35 // pred_check_branch
          %282 = sbr.rel (%p280) target = $region52
        $region51: #{tpu_custom_call.1} parent=35 // pred_region
          %283 = dma.done %s276, 128
        $region52: #{tpu_custom_call.1} parent=35 // pred_fallthru
          _
        %s284 = sand.u32 %s38, 1
        %s285 = scalar_lea.sflag [#allocation3], %s284
        %s286 = sand.u32 %s38, 1
        %s287 = smul.addr %s286, 16
        %s288 = scalar_lea.vmem [#allocation2], %s287
        %p289 = pneg %p51
        %p290 = pneg %p48
        %p291 = pneg %p72
        %p292 = pneg %p69
        %p293 = pneg %p93
        %p294 = pneg %p90
        %s295 = sand.u32 %s106, 1
        %s296 = scalar_lea.sflag [#allocation9], %s295
        %s297 = sand.u32 %s106, 1
        %s298 = smul.addr %s297, 8
        %s299 = scalar_lea.vmem [#allocation8], %s298
        %p300 = pneg %p119
        %p301 = pneg %p116
        %p302 = pneg %p145
        %p303 = pneg %p142
        %s304 = sand.u32 %s132, 1
        %s305 = scalar_lea.sflag [#allocation4], %s304
        %s306 = sand.u32 %s132, 1
        %s307 = smul.addr %s306, 64
        %s308 = scalar_lea.vmem [#allocation10], %s307
        %p309 = pneg %p171
        %p310 = pneg %p168
        %s311 = sand.u32 %s158, 1
        %s312 = scalar_lea.sflag [#allocation12], %s311
        %s313 = sand.u32 %s158, 1
        %s314 = smul.addr %s313, 64
        %s315 = scalar_lea.vmem [#allocation11], %s314
        %v317 = vld [vmem:[%s262] sm:$0xff]
        %v318 = vld [vmem:[%s262 + $0x8] sm:$0xff]
        %v319 = vld [vmem:[#allocation5] sm:$0xff]
        %v320 = vld [vmem:[#allocation5 + $0x8] sm:$0xff]
        %v321 = vld [vmem:[#allocation5 + $0x10] sm:$0xff]
        %v322 = vld [vmem:[#allocation5 + $0x18] sm:$0xff]
        %v323 = vld [vmem:[#allocation5 + $0x20] sm:$0xff]
        %v324 = vld [vmem:[#allocation5 + $0x28] sm:$0xff]
        %v325 = vld [vmem:[#allocation5 + $0x30] sm:$0xff]
        %v326 = vld [vmem:[#allocation5 + $0x38] sm:$0xff]
        %v327 = vld [vmem:[#allocation5 + $0x40] sm:$0xff]
        %v328 = vld [vmem:[#allocation5 + $0x48] sm:$0xff]
        %v329 = vld [vmem:[#allocation5 + $0x50] sm:$0xff]
        %v330 = vld [vmem:[#allocation5 + $0x58] sm:$0xff]
        %v331 = vld [vmem:[#allocation5 + $0x60] sm:$0xff]
        %v332 = vld [vmem:[#allocation5 + $0x68] sm:$0xff]
        %v333 = vld [vmem:[#allocation5 + $0x70] sm:$0xff]
        %v334 = vld [vmem:[#allocation5 + $0x78] sm:$0xff]
        %v335 = vld [vmem:[#allocation5 + $0x80] sm:$0xff]
        %v336 = vld [vmem:[#allocation5 + $0x88] sm:$0xff]
        %v337 = vld [vmem:[#allocation5 + $0x90] sm:$0xff]
        %v338 = vld [vmem:[#allocation5 + $0x98] sm:$0xff]
        %v339 = vld [vmem:[#allocation5 + $0xa0] sm:$0xff]
        %v340 = vld [vmem:[#allocation5 + $0xa8] sm:$0xff]
        %v341 = vld [vmem:[#allocation5 + $0xb0] sm:$0xff]
        %v342 = vld [vmem:[#allocation5 + $0xb8] sm:$0xff]
        %v343 = vld [vmem:[#allocation5 + $0xc0] sm:$0xff]
        %v344 = vld [vmem:[#allocation5 + $0xc8] sm:$0xff]
        %v345 = vld [vmem:[#allocation5 + $0xd0] sm:$0xff]
        %v346 = vld [vmem:[#allocation5 + $0xd8] sm:$0xff]
        %v347 = vld [vmem:[#allocation5 + $0xe0] sm:$0xff]
        %v348 = vld [vmem:[#allocation5 + $0xe8] sm:$0xff]
        %v349 = vld [vmem:[#allocation5 + $0xf0] sm:$0xff]
        %v350 = vld [vmem:[#allocation5 + $0xf8] sm:$0xff]
        %v351 = vld [vmem:[#allocation5 + $0x100] sm:$0xff]
        %v352 = vld [vmem:[#allocation5 + $0x108] sm:$0xff]
        %v353 = vld [vmem:[#allocation5 + $0x110] sm:$0xff]
        %v354 = vld [vmem:[#allocation5 + $0x118] sm:$0xff]
        %v355 = vld [vmem:[#allocation5 + $0x120] sm:$0xff]
        %v356 = vld [vmem:[#allocation5 + $0x128] sm:$0xff]
        %v357 = vld [vmem:[#allocation5 + $0x130] sm:$0xff]
        %v358 = vld [vmem:[#allocation5 + $0x138] sm:$0xff]
        %v359 = vld [vmem:[#allocation5 + $0x140] sm:$0xff]
        %v360 = vld [vmem:[#allocation5 + $0x148] sm:$0xff]
        %v361 = vld [vmem:[#allocation5 + $0x150] sm:$0xff]
        %v362 = vld [vmem:[#allocation5 + $0x158] sm:$0xff]
        %v363 = vld [vmem:[#allocation5 + $0x160] sm:$0xff]
        %v364 = vld [vmem:[#allocation5 + $0x168] sm:$0xff]
        %v365 = vld [vmem:[#allocation5 + $0x170] sm:$0xff]
        %v366 = vld [vmem:[#allocation5 + $0x178] sm:$0xff]
        %v367 = vld [vmem:[#allocation5 + $0x180] sm:$0xff]
        %v368 = vld [vmem:[#allocation5 + $0x188] sm:$0xff]
        %v369 = vld [vmem:[#allocation5 + $0x190] sm:$0xff]
        %v370 = vld [vmem:[#allocation5 + $0x198] sm:$0xff]
        %v371 = vld [vmem:[#allocation5 + $0x1a0] sm:$0xff]
        %v372 = vld [vmem:[#allocation5 + $0x1a8] sm:$0xff]
        %v373 = vld [vmem:[#allocation5 + $0x1b0] sm:$0xff]
        %v374 = vld [vmem:[#allocation5 + $0x1b8] sm:$0xff]
        %v375 = vld [vmem:[#allocation5 + $0x1c0] sm:$0xff]
        %v376 = vld [vmem:[#allocation5 + $0x1c8] sm:$0xff]
        %v377 = vld [vmem:[#allocation5 + $0x1d0] sm:$0xff]
        %v378 = vld [vmem:[#allocation5 + $0x1d8] sm:$0xff]
        %v379 = vld [vmem:[#allocation5 + $0x1e0] sm:$0xff]
        %v380 = vld [vmem:[#allocation5 + $0x1e8] sm:$0xff]
        %v381 = vld [vmem:[#allocation5 + $0x1f0] sm:$0xff]
        %v382 = vld [vmem:[#allocation5 + $0x1f8] sm:$0xff]
        %v383 = vld [vmem:[#allocation5 + $0x200] sm:$0xff]
        %v384 = vld [vmem:[#allocation5 + $0x208] sm:$0xff]
        %v385 = vld [vmem:[#allocation5 + $0x210] sm:$0xff]
        %v386 = vld [vmem:[#allocation5 + $0x218] sm:$0xff]
        %v387 = vld [vmem:[#allocation5 + $0x220] sm:$0xff]
        %v388 = vld [vmem:[#allocation5 + $0x228] sm:$0xff]
        %v389 = vld [vmem:[#allocation5 + $0x230] sm:$0xff]
        %v390 = vld [vmem:[#allocation5 + $0x238] sm:$0xff]
        %v391 = vld [vmem:[#allocation5 + $0x240] sm:$0xff]
        %v392 = vld [vmem:[#allocation5 + $0x248] sm:$0xff]
        %v393 = vld [vmem:[#allocation5 + $0x250] sm:$0xff]
        %v394 = vld [vmem:[#allocation5 + $0x258] sm:$0xff]
        %v395 = vld [vmem:[#allocation5 + $0x260] sm:$0xff]
        %v396 = vld [vmem:[#allocation5 + $0x268] sm:$0xff]
        %v397 = vld [vmem:[#allocation5 + $0x270] sm:$0xff]
        %v398 = vld [vmem:[#allocation5 + $0x278] sm:$0xff]
        %v399 = vld [vmem:[#allocation5 + $0x280] sm:$0xff]
        %v400 = vld [vmem:[#allocation5 + $0x288] sm:$0xff]
        %v401 = vld [vmem:[#allocation5 + $0x290] sm:$0xff]
        %v402 = vld [vmem:[#allocation5 + $0x298] sm:$0xff]
        %v403 = vld [vmem:[#allocation5 + $0x2a0] sm:$0xff]
        %v404 = vld [vmem:[#allocation5 + $0x2a8] sm:$0xff]
        %v405 = vld [vmem:[#allocation5 + $0x2b0] sm:$0xff]
        %v406 = vld [vmem:[#allocation5 + $0x2b8] sm:$0xff]
        %v407 = vld [vmem:[#allocation5 + $0x2c0] sm:$0xff]
        %v408 = vld [vmem:[#allocation5 + $0x2c8] sm:$0xff]
        %v409 = vld [vmem:[#allocation5 + $0x2d0] sm:$0xff]
        %v410 = vld [vmem:[#allocation5 + $0x2d8] sm:$0xff]
        %v411 = vld [vmem:[#allocation5 + $0x2e0] sm:$0xff]
        %v412 = vld [vmem:[#allocation5 + $0x2e8] sm:$0xff]
        %v413 = vld [vmem:[#allocation5 + $0x2f0] sm:$0xff]
        %v414 = vld [vmem:[#allocation5 + $0x2f8] sm:$0xff]
        %v415 = vld [vmem:[#allocation5 + $0x300] sm:$0xff]
        %v416 = vld [vmem:[#allocation5 + $0x308] sm:$0xff]
        %v417 = vld [vmem:[#allocation5 + $0x310] sm:$0xff]
        %v418 = vld [vmem:[#allocation5 + $0x318] sm:$0xff]
        %v419 = vld [vmem:[#allocation5 + $0x320] sm:$0xff]
        %v420 = vld [vmem:[#allocation5 + $0x328] sm:$0xff]
        %v421 = vld [vmem:[#allocation5 + $0x330] sm:$0xff]
        %v422 = vld [vmem:[#allocation5 + $0x338] sm:$0xff]
        %v423 = vld [vmem:[#allocation5 + $0x340] sm:$0xff]
        %v424 = vld [vmem:[#allocation5 + $0x348] sm:$0xff]
        %v425 = vld [vmem:[#allocation5 + $0x350] sm:$0xff]
        %v426 = vld [vmem:[#allocation5 + $0x358] sm:$0xff]
        %v427 = vld [vmem:[#allocation5 + $0x360] sm:$0xff]
        %v428 = vld [vmem:[#allocation5 + $0x368] sm:$0xff]
        %v429 = vld [vmem:[#allocation5 + $0x370] sm:$0xff]
        %v430 = vld [vmem:[#allocation5 + $0x378] sm:$0xff]
        %v431 = vld [vmem:[#allocation5 + $0x380] sm:$0xff]
        %v432 = vld [vmem:[#allocation5 + $0x388] sm:$0xff]
        %v433 = vld [vmem:[#allocation5 + $0x390] sm:$0xff]
        %v434 = vld [vmem:[#allocation5 + $0x398] sm:$0xff]
        %v435 = vld [vmem:[#allocation5 + $0x3a0] sm:$0xff]
        %v436 = vld [vmem:[#allocation5 + $0x3a8] sm:$0xff]
        %v437 = vld [vmem:[#allocation5 + $0x3b0] sm:$0xff]
        %v438 = vld [vmem:[#allocation5 + $0x3b8] sm:$0xff]
        %v439 = vld [vmem:[#allocation5 + $0x3c0] sm:$0xff]
        %v440 = vld [vmem:[#allocation5 + $0x3c8] sm:$0xff]
        %v441 = vld [vmem:[#allocation5 + $0x3d0] sm:$0xff]
        %v442 = vld [vmem:[#allocation5 + $0x3d8] sm:$0xff]
        %v443 = vld [vmem:[#allocation5 + $0x3e0] sm:$0xff]
        %v444 = vld [vmem:[#allocation5 + $0x3e8] sm:$0xff]
        %v445 = vld [vmem:[#allocation5 + $0x3f0] sm:$0xff]
        %v446 = vld [vmem:[#allocation5 + $0x3f8] sm:$0xff]
        %v447 = vld [vmem:[#allocation5 + $0x400] sm:$0xff]
        %v448 = vld [vmem:[#allocation5 + $0x408] sm:$0xff]
        %v449 = vld [vmem:[#allocation5 + $0x410] sm:$0xff]
        %v450 = vld [vmem:[#allocation5 + $0x418] sm:$0xff]
        %v451 = vld [vmem:[#allocation5 + $0x420] sm:$0xff]
        %v452 = vld [vmem:[#allocation5 + $0x428] sm:$0xff]
        %v453 = vld [vmem:[#allocation5 + $0x430] sm:$0xff]
        %v454 = vld [vmem:[#allocation5 + $0x438] sm:$0xff]
        %v455 = vld [vmem:[#allocation5 + $0x440] sm:$0xff]
        %v456 = vld [vmem:[#allocation5 + $0x448] sm:$0xff]
        %v457 = vld [vmem:[#allocation5 + $0x450] sm:$0xff]
        %v458 = vld [vmem:[#allocation5 + $0x458] sm:$0xff]
        %v459 = vld [vmem:[#allocation5 + $0x460] sm:$0xff]
        %v460 = vld [vmem:[#allocation5 + $0x468] sm:$0xff]
        %v461 = vld [vmem:[#allocation5 + $0x470] sm:$0xff]
        %v462 = vld [vmem:[#allocation5 + $0x478] sm:$0xff]
        %v463 = vld [vmem:[#allocation5 + $0x480] sm:$0xff]
        %v464 = vld [vmem:[#allocation5 + $0x488] sm:$0xff]
        %v465 = vld [vmem:[#allocation5 + $0x490] sm:$0xff]
        %v466 = vld [vmem:[#allocation5 + $0x498] sm:$0xff]
        %v467 = vld [vmem:[#allocation5 + $0x4a0] sm:$0xff]
        %v468 = vld [vmem:[#allocation5 + $0x4a8] sm:$0xff]
        %v469 = vld [vmem:[#allocation5 + $0x4b0] sm:$0xff]
        %v470 = vld [vmem:[#allocation5 + $0x4b8] sm:$0xff]
        %v471 = vld [vmem:[#allocation5 + $0x4c0] sm:$0xff]
        %v472 = vld [vmem:[#allocation5 + $0x4c8] sm:$0xff]
        %v473 = vld [vmem:[#allocation5 + $0x4d0] sm:$0xff]
        %v474 = vld [vmem:[#allocation5 + $0x4d8] sm:$0xff]
        %v475 = vld [vmem:[#allocation5 + $0x4e0] sm:$0xff]
        %v476 = vld [vmem:[#allocation5 + $0x4e8] sm:$0xff]
        %v477 = vld [vmem:[#allocation5 + $0x4f0] sm:$0xff]
        %v478 = vld [vmem:[#allocation5 + $0x4f8] sm:$0xff]
        %v479 = vld [vmem:[#allocation5 + $0x500] sm:$0xff]
        %v480 = vld [vmem:[#allocation5 + $0x508] sm:$0xff]
        %v481 = vld [vmem:[#allocation5 + $0x510] sm:$0xff]
        %v482 = vld [vmem:[#allocation5 + $0x518] sm:$0xff]
        %v483 = vld [vmem:[#allocation5 + $0x520] sm:$0xff]
        %v484 = vld [vmem:[#allocation5 + $0x528] sm:$0xff]
        %v485 = vld [vmem:[#allocation5 + $0x530] sm:$0xff]
        %v486 = vld [vmem:[#allocation5 + $0x538] sm:$0xff]
        %v487 = vld [vmem:[#allocation5 + $0x540] sm:$0xff]
        %v488 = vld [vmem:[#allocation5 + $0x548] sm:$0xff]
        %v489 = vld [vmem:[#allocation5 + $0x550] sm:$0xff]
        %v490 = vld [vmem:[#allocation5 + $0x558] sm:$0xff]
        %v491 = vld [vmem:[#allocation5 + $0x560] sm:$0xff]
        %v492 = vld [vmem:[#allocation5 + $0x568] sm:$0xff]
        %v493 = vld [vmem:[#allocation5 + $0x570] sm:$0xff]
        %v494 = vld [vmem:[#allocation5 + $0x578] sm:$0xff]
        %v495 = vld [vmem:[#allocation5 + $0x580] sm:$0xff]
        %v496 = vld [vmem:[#allocation5 + $0x588] sm:$0xff]
        %v497 = vld [vmem:[#allocation5 + $0x590] sm:$0xff]
        %v498 = vld [vmem:[#allocation5 + $0x598] sm:$0xff]
        %v499 = vld [vmem:[#allocation5 + $0x5a0] sm:$0xff]
        %v500 = vld [vmem:[#allocation5 + $0x5a8] sm:$0xff]
        %v501 = vld [vmem:[#allocation5 + $0x5b0] sm:$0xff]
        %v502 = vld [vmem:[#allocation5 + $0x5b8] sm:$0xff]
        %v503 = vld [vmem:[#allocation5 + $0x5c0] sm:$0xff]
        %v504 = vld [vmem:[#allocation5 + $0x5c8] sm:$0xff]
        %v505 = vld [vmem:[#allocation5 + $0x5d0] sm:$0xff]
        %v506 = vld [vmem:[#allocation5 + $0x5d8] sm:$0xff]
        %v507 = vld [vmem:[#allocation5 + $0x5e0] sm:$0xff]
        %v508 = vld [vmem:[#allocation5 + $0x5e8] sm:$0xff]
        %v509 = vld [vmem:[#allocation5 + $0x5f0] sm:$0xff]
        %v510 = vld [vmem:[#allocation5 + $0x5f8] sm:$0xff]
        %v511 = vld [vmem:[#allocation5 + $0x600] sm:$0xff]
        %v512 = vld [vmem:[#allocation5 + $0x608] sm:$0xff]
        %v513 = vld [vmem:[#allocation5 + $0x610] sm:$0xff]
        %v514 = vld [vmem:[#allocation5 + $0x618] sm:$0xff]
        %v515 = vld [vmem:[#allocation5 + $0x620] sm:$0xff]
        %v516 = vld [vmem:[#allocation5 + $0x628] sm:$0xff]
        %v517 = vld [vmem:[#allocation5 + $0x630] sm:$0xff]
        %v518 = vld [vmem:[#allocation5 + $0x638] sm:$0xff]
        %v519 = vld [vmem:[#allocation5 + $0x640] sm:$0xff]
        %v520 = vld [vmem:[#allocation5 + $0x648] sm:$0xff]
        %v521 = vld [vmem:[#allocation5 + $0x650] sm:$0xff]
        %v522 = vld [vmem:[#allocation5 + $0x658] sm:$0xff]
        %v523 = vld [vmem:[#allocation5 + $0x660] sm:$0xff]
        %v524 = vld [vmem:[#allocation5 + $0x668] sm:$0xff]
        %v525 = vld [vmem:[#allocation5 + $0x670] sm:$0xff]
        %v526 = vld [vmem:[#allocation5 + $0x678] sm:$0xff]
        %v527 = vld [vmem:[#allocation5 + $0x680] sm:$0xff]
        %v528 = vld [vmem:[#allocation5 + $0x688] sm:$0xff]
        %v529 = vld [vmem:[#allocation5 + $0x690] sm:$0xff]
        %v530 = vld [vmem:[#allocation5 + $0x698] sm:$0xff]
        %v531 = vld [vmem:[#allocation5 + $0x6a0] sm:$0xff]
        %v532 = vld [vmem:[#allocation5 + $0x6a8] sm:$0xff]
        %v533 = vld [vmem:[#allocation5 + $0x6b0] sm:$0xff]
        %v534 = vld [vmem:[#allocation5 + $0x6b8] sm:$0xff]
        %v535 = vld [vmem:[#allocation5 + $0x6c0] sm:$0xff]
        %v536 = vld [vmem:[#allocation5 + $0x6c8] sm:$0xff]
        %v537 = vld [vmem:[#allocation5 + $0x6d0] sm:$0xff]
        %v538 = vld [vmem:[#allocation5 + $0x6d8] sm:$0xff]
        %v539 = vld [vmem:[#allocation5 + $0x6e0] sm:$0xff]
        %v540 = vld [vmem:[#allocation5 + $0x6e8] sm:$0xff]
        %v541 = vld [vmem:[#allocation5 + $0x6f0] sm:$0xff]
        %v542 = vld [vmem:[#allocation5 + $0x6f8] sm:$0xff]
        %v543 = vld [vmem:[#allocation5 + $0x700] sm:$0xff]
        %v544 = vld [vmem:[#allocation5 + $0x708] sm:$0xff]
        %v545 = vld [vmem:[#allocation5 + $0x710] sm:$0xff]
        %v546 = vld [vmem:[#allocation5 + $0x718] sm:$0xff]
        %v547 = vld [vmem:[#allocation5 + $0x720] sm:$0xff]
        %v548 = vld [vmem:[#allocation5 + $0x728] sm:$0xff]
        %v549 = vld [vmem:[#allocation5 + $0x730] sm:$0xff]
        %v550 = vld [vmem:[#allocation5 + $0x738] sm:$0xff]
        %v551 = vld [vmem:[#allocation5 + $0x740] sm:$0xff]
        %v552 = vld [vmem:[#allocation5 + $0x748] sm:$0xff]
        %v553 = vld [vmem:[#allocation5 + $0x750] sm:$0xff]
        %v554 = vld [vmem:[#allocation5 + $0x758] sm:$0xff]
        %v555 = vld [vmem:[#allocation5 + $0x760] sm:$0xff]
        %v556 = vld [vmem:[#allocation5 + $0x768] sm:$0xff]
        %v557 = vld [vmem:[#allocation5 + $0x770] sm:$0xff]
        %v558 = vld [vmem:[#allocation5 + $0x778] sm:$0xff]
        %v559 = vld [vmem:[#allocation5 + $0x780] sm:$0xff]
        %v560 = vld [vmem:[#allocation5 + $0x788] sm:$0xff]
        %v561 = vld [vmem:[#allocation5 + $0x790] sm:$0xff]
        %v562 = vld [vmem:[#allocation5 + $0x798] sm:$0xff]
        %v563 = vld [vmem:[#allocation5 + $0x7a0] sm:$0xff]
        %v564 = vld [vmem:[#allocation5 + $0x7a8] sm:$0xff]
        %v565 = vld [vmem:[#allocation5 + $0x7b0] sm:$0xff]
        %v566 = vld [vmem:[#allocation5 + $0x7b8] sm:$0xff]
        %v567 = vld [vmem:[#allocation5 + $0x7c0] sm:$0xff]
        %v568 = vld [vmem:[#allocation5 + $0x7c8] sm:$0xff]
        %v569 = vld [vmem:[#allocation5 + $0x7d0] sm:$0xff]
        %v570 = vld [vmem:[#allocation5 + $0x7d8] sm:$0xff]
        %v571 = vld [vmem:[#allocation5 + $0x7e0] sm:$0xff]
        %v572 = vld [vmem:[#allocation5 + $0x7e8] sm:$0xff]
        %v573 = vld [vmem:[#allocation5 + $0x7f0] sm:$0xff]
        %v574 = vld [vmem:[#allocation5 + $0x7f8] sm:$0xff]
        %v575 = vld [vmem:[#allocation5 + $0x800] sm:$0xff]
        %v576 = vld [vmem:[#allocation5 + $0x808] sm:$0xff]
        %v577 = vld [vmem:[#allocation5 + $0x810] sm:$0xff]
        %v578 = vld [vmem:[#allocation5 + $0x818] sm:$0xff]
        %v579 = vld [vmem:[#allocation5 + $0x820] sm:$0xff]
        %v580 = vld [vmem:[#allocation5 + $0x828] sm:$0xff]
        %v581 = vld [vmem:[#allocation5 + $0x830] sm:$0xff]
        %v582 = vld [vmem:[#allocation5 + $0x838] sm:$0xff]
        %v583 = vld [vmem:[#allocation5 + $0x840] sm:$0xff]
        %v584 = vld [vmem:[#allocation5 + $0x848] sm:$0xff]
        %v585 = vld [vmem:[#allocation5 + $0x850] sm:$0xff]
        %v586 = vld [vmem:[#allocation5 + $0x858] sm:$0xff]
        %v587 = vld [vmem:[#allocation5 + $0x860] sm:$0xff]
        %v588 = vld [vmem:[#allocation5 + $0x868] sm:$0xff]
        %v589 = vld [vmem:[#allocation5 + $0x870] sm:$0xff]
        %v590 = vld [vmem:[#allocation5 + $0x878] sm:$0xff]
        %v591 = vld [vmem:[#allocation5 + $0x880] sm:$0xff]
        %v592 = vld [vmem:[#allocation5 + $0x888] sm:$0xff]
        %v593 = vld [vmem:[#allocation5 + $0x890] sm:$0xff]
        %v594 = vld [vmem:[#allocation5 + $0x898] sm:$0xff]
        %v595 = vld [vmem:[#allocation5 + $0x8a0] sm:$0xff]
        %v596 = vld [vmem:[#allocation5 + $0x8a8] sm:$0xff]
        %v597 = vld [vmem:[#allocation5 + $0x8b0] sm:$0xff]
        %v598 = vld [vmem:[#allocation5 + $0x8b8] sm:$0xff]
        %v599 = vld [vmem:[#allocation5 + $0x8c0] sm:$0xff]
        %v600 = vld [vmem:[#allocation5 + $0x8c8] sm:$0xff]
        %v601 = vld [vmem:[#allocation5 + $0x8d0] sm:$0xff]
        %v602 = vld [vmem:[#allocation5 + $0x8d8] sm:$0xff]
        %v603 = vld [vmem:[#allocation5 + $0x8e0] sm:$0xff]
        %v604 = vld [vmem:[#allocation5 + $0x8e8] sm:$0xff]
        %v605 = vld [vmem:[#allocation5 + $0x8f0] sm:$0xff]
        %v606 = vld [vmem:[#allocation5 + $0x8f8] sm:$0xff]
        %v607 = vld [vmem:[#allocation5 + $0x900] sm:$0xff]
        %v608 = vld [vmem:[#allocation5 + $0x908] sm:$0xff]
        %v609 = vld [vmem:[#allocation5 + $0x910] sm:$0xff]
        %v610 = vld [vmem:[#allocation5 + $0x918] sm:$0xff]
        %v611 = vld [vmem:[#allocation5 + $0x920] sm:$0xff]
        %v612 = vld [vmem:[#allocation5 + $0x928] sm:$0xff]
        %v613 = vld [vmem:[#allocation5 + $0x930] sm:$0xff]
        %v614 = vld [vmem:[#allocation5 + $0x938] sm:$0xff]
        %v615 = vld [vmem:[#allocation5 + $0x940] sm:$0xff]
        %v616 = vld [vmem:[#allocation5 + $0x948] sm:$0xff]
        %v617 = vld [vmem:[#allocation5 + $0x950] sm:$0xff]
        %v618 = vld [vmem:[#allocation5 + $0x958] sm:$0xff]
        %v619 = vld [vmem:[#allocation5 + $0x960] sm:$0xff]
        %v620 = vld [vmem:[#allocation5 + $0x968] sm:$0xff]
        %v621 = vld [vmem:[#allocation5 + $0x970] sm:$0xff]
        %v622 = vld [vmem:[#allocation5 + $0x978] sm:$0xff]
        %v623 = vld [vmem:[#allocation5 + $0x980] sm:$0xff]
        %v624 = vld [vmem:[#allocation5 + $0x988] sm:$0xff]
        %v625 = vld [vmem:[#allocation5 + $0x990] sm:$0xff]
        %v626 = vld [vmem:[#allocation5 + $0x998] sm:$0xff]
        %v627 = vld [vmem:[#allocation5 + $0x9a0] sm:$0xff]
        %v628 = vld [vmem:[#allocation5 + $0x9a8] sm:$0xff]
        %v629 = vld [vmem:[#allocation5 + $0x9b0] sm:$0xff]
        %v630 = vld [vmem:[#allocation5 + $0x9b8] sm:$0xff]
        %v631 = vld [vmem:[#allocation5 + $0x9c0] sm:$0xff]
        %v632 = vld [vmem:[#allocation5 + $0x9c8] sm:$0xff]
        %v633 = vld [vmem:[#allocation5 + $0x9d0] sm:$0xff]
        %v634 = vld [vmem:[#allocation5 + $0x9d8] sm:$0xff]
        %v635 = vld [vmem:[#allocation5 + $0x9e0] sm:$0xff]
        %v636 = vld [vmem:[#allocation5 + $0x9e8] sm:$0xff]
        %v637 = vld [vmem:[#allocation5 + $0x9f0] sm:$0xff]
        %v638 = vld [vmem:[#allocation5 + $0x9f8] sm:$0xff]
        %v639 = vld [vmem:[#allocation5 + $0xa00] sm:$0xff]
        %v640 = vld [vmem:[#allocation5 + $0xa08] sm:$0xff]
        %v641 = vld [vmem:[#allocation5 + $0xa10] sm:$0xff]
        %v642 = vld [vmem:[#allocation5 + $0xa18] sm:$0xff]
        %v643 = vld [vmem:[#allocation5 + $0xa20] sm:$0xff]
        %v644 = vld [vmem:[#allocation5 + $0xa28] sm:$0xff]
        %v645 = vld [vmem:[#allocation5 + $0xa30] sm:$0xff]
        %v646 = vld [vmem:[#allocation5 + $0xa38] sm:$0xff]
        %v647 = vld [vmem:[#allocation5 + $0xa40] sm:$0xff]
        %v648 = vld [vmem:[#allocation5 + $0xa48] sm:$0xff]
        %v649 = vld [vmem:[#allocation5 + $0xa50] sm:$0xff]
        %v650 = vld [vmem:[#allocation5 + $0xa58] sm:$0xff]
        %v651 = vld [vmem:[#allocation5 + $0xa60] sm:$0xff]
        %v652 = vld [vmem:[#allocation5 + $0xa68] sm:$0xff]
        %v653 = vld [vmem:[#allocation5 + $0xa70] sm:$0xff]
        %v654 = vld [vmem:[#allocation5 + $0xa78] sm:$0xff]
        %v655 = vld [vmem:[#allocation5 + $0xa80] sm:$0xff]
        %v656 = vld [vmem:[#allocation5 + $0xa88] sm:$0xff]
        %v657 = vld [vmem:[#allocation5 + $0xa90] sm:$0xff]
        %v658 = vld [vmem:[#allocation5 + $0xa98] sm:$0xff]
        %v659 = vld [vmem:[#allocation5 + $0xaa0] sm:$0xff]
        %v660 = vld [vmem:[#allocation5 + $0xaa8] sm:$0xff]
        %v661 = vld [vmem:[#allocation5 + $0xab0] sm:$0xff]
        %v662 = vld [vmem:[#allocation5 + $0xab8] sm:$0xff]
        %v663 = vld [vmem:[#allocation5 + $0xac0] sm:$0xff]
        %v664 = vld [vmem:[#allocation5 + $0xac8] sm:$0xff]
        %v665 = vld [vmem:[#allocation5 + $0xad0] sm:$0xff]
        %v666 = vld [vmem:[#allocation5 + $0xad8] sm:$0xff]
        %v667 = vld [vmem:[#allocation5 + $0xae0] sm:$0xff]
        %v668 = vld [vmem:[#allocation5 + $0xae8] sm:$0xff]
        %v669 = vld [vmem:[#allocation5 + $0xaf0] sm:$0xff]
        %v670 = vld [vmem:[#allocation5 + $0xaf8] sm:$0xff]
        %v671 = vld [vmem:[#allocation5 + $0xb00] sm:$0xff]
        %v672 = vld [vmem:[#allocation5 + $0xb08] sm:$0xff]
        %v673 = vld [vmem:[#allocation5 + $0xb10] sm:$0xff]
        %v674 = vld [vmem:[#allocation5 + $0xb18] sm:$0xff]
        %v675 = vld [vmem:[#allocation5 + $0xb20] sm:$0xff]
        %v676 = vld [vmem:[#allocation5 + $0xb28] sm:$0xff]
        %v677 = vld [vmem:[#allocation5 + $0xb30] sm:$0xff]
        %v678 = vld [vmem:[#allocation5 + $0xb38] sm:$0xff]
        %v679 = vld [vmem:[#allocation5 + $0xb40] sm:$0xff]
        %v680 = vld [vmem:[#allocation5 + $0xb48] sm:$0xff]
        %v681 = vld [vmem:[#allocation5 + $0xb50] sm:$0xff]
        %v682 = vld [vmem:[#allocation5 + $0xb58] sm:$0xff]
        %v683 = vld [vmem:[#allocation5 + $0xb60] sm:$0xff]
        %v684 = vld [vmem:[#allocation5 + $0xb68] sm:$0xff]
        %v685 = vld [vmem:[#allocation5 + $0xb70] sm:$0xff]
        %v686 = vld [vmem:[#allocation5 + $0xb78] sm:$0xff]
        %v687 = vld [vmem:[#allocation5 + $0xb80] sm:$0xff]
        %v688 = vld [vmem:[#allocation5 + $0xb88] sm:$0xff]
        %v689 = vld [vmem:[#allocation5 + $0xb90] sm:$0xff]
        %v690 = vld [vmem:[#allocation5 + $0xb98] sm:$0xff]
        %v691 = vld [vmem:[#allocation5 + $0xba0] sm:$0xff]
        %v692 = vld [vmem:[#allocation5 + $0xba8] sm:$0xff]
        %v693 = vld [vmem:[#allocation5 + $0xbb0] sm:$0xff]
        %v694 = vld [vmem:[#allocation5 + $0xbb8] sm:$0xff]
        %v695 = vld [vmem:[#allocation5 + $0xbc0] sm:$0xff]
        %v696 = vld [vmem:[#allocation5 + $0xbc8] sm:$0xff]
        %v697 = vld [vmem:[#allocation5 + $0xbd0] sm:$0xff]
        %v698 = vld [vmem:[#allocation5 + $0xbd8] sm:$0xff]
        %v699 = vld [vmem:[#allocation5 + $0xbe0] sm:$0xff]
        %v700 = vld [vmem:[#allocation5 + $0xbe8] sm:$0xff]
        %v701 = vld [vmem:[#allocation5 + $0xbf0] sm:$0xff]
        %v702 = vld [vmem:[#allocation5 + $0xbf8] sm:$0xff]
        %v703 = vld [vmem:[#allocation7] sm:$0xff]
        %v704 = vld [vmem:[#allocation7 + $0x8] sm:$0xf]
        %v707 = vlaneseq
        %v708 = vshrl.u32 %v707, 7
        %v709 = vsub.s32 0, %v708
        %v710 = vrot.slane %v703, %v709
        %v711 = vlaneseq
        %v712 = vshrl.u32 %v711, 7
        %v713 = vsub.s32 1, %v712
        %v714 = vrot.slane %v703, %v713
        %v715 = vlaneseq
        %v716 = vshrl.u32 %v715, 7
        %v717 = vsub.s32 2, %v716
        %v718 = vrot.slane %v703, %v717
        %v719 = vlaneseq
        %v720 = vshrl.u32 %v719, 7
        %v721 = vsub.s32 3, %v720
        %v722 = vrot.slane %v703, %v721
        %v723 = vlaneseq
        %v724 = vshrl.u32 %v723, 7
        %v725 = vsub.s32 4, %v724
        %v726 = vrot.slane %v703, %v725
        %v727 = vlaneseq
        %v728 = vshrl.u32 %v727, 7
        %v729 = vsub.s32 5, %v728
        %v730 = vrot.slane %v703, %v729
        %v731 = vlaneseq
        %v732 = vshrl.u32 %v731, 7
        %v733 = vsub.s32 6, %v732
        %v734 = vrot.slane %v703, %v733
        %v735 = vlaneseq
        %v736 = vshrl.u32 %v735, 7
        %v737 = vsub.s32 7, %v736
        %v738 = vrot.slane %v703, %v737
        %v739 = vlaneseq
        %v740 = vshrl.u32 %v739, 7
        %v741 = vsub.s32 0, %v740
        %v742 = vrot.slane %v704, %v741
        %v743 = vlaneseq
        %v744 = vshrl.u32 %v743, 7
        %v745 = vsub.s32 1, %v744
        %v746 = vrot.slane %v704, %v745
        %v747 = vlaneseq
        %v748 = vshrl.u32 %v747, 7
        %v749 = vsub.s32 2, %v748
        %v750 = vrot.slane %v704, %v749
        %v751 = vlaneseq
        %v752 = vshrl.u32 %v751, 7
        %v753 = vsub.s32 3, %v752
        %v754 = vrot.slane %v704, %v753
        %v769 = vunpack.c.l.b16 %v317
        %v770 = vunpack.c.h.b16 %v317
        %v771 = vunpack.c.l.b16 %v318
        %v772 = vunpack.c.h.b16 %v318
        %v773 = vpack.c.b16 %v769, %v769
        %v774 = vpack.c.b16 %v770, %v770
        %v775 = vpack.c.b16 %v771, %v771
        %v776 = vpack.c.b16 %v772, %v772
        %v1165 = vunpack.c.l.b16 %v319
        %v1166 = vunpack.c.h.b16 %v319
        %v1167 = vunpack.c.l.b16 %v320
        %v1168 = vunpack.c.h.b16 %v320
        %v1169 = vunpack.c.l.b16 %v321
        %v1170 = vunpack.c.h.b16 %v321
        %v1171 = vunpack.c.l.b16 %v322
        %v1172 = vunpack.c.h.b16 %v322
        %v1173 = vunpack.c.l.b16 %v323
        %v1174 = vunpack.c.h.b16 %v323
        %v1175 = vunpack.c.l.b16 %v324
        %v1176 = vunpack.c.h.b16 %v324
        %v1177 = vunpack.c.l.b16 %v325
        %v1178 = vunpack.c.h.b16 %v325
        %v1179 = vunpack.c.l.b16 %v326
        %v1180 = vunpack.c.h.b16 %v326
        %v1181 = vunpack.c.l.b16 %v327
        %v1182 = vunpack.c.h.b16 %v327
        %v1183 = vunpack.c.l.b16 %v328
        %v1184 = vunpack.c.h.b16 %v328
        %v1185 = vunpack.c.l.b16 %v329
        %v1186 = vunpack.c.h.b16 %v329
        %v1187 = vunpack.c.l.b16 %v330
        %v1188 = vunpack.c.h.b16 %v330
        %v1189 = vunpack.c.l.b16 %v331
        %v1190 = vunpack.c.h.b16 %v331
        %v1191 = vunpack.c.l.b16 %v332
        %v1192 = vunpack.c.h.b16 %v332
        %v1193 = vunpack.c.l.b16 %v333
        %v1194 = vunpack.c.h.b16 %v333
        %v1195 = vunpack.c.l.b16 %v334
        %v1196 = vunpack.c.h.b16 %v334
        %v1197 = vunpack.c.l.b16 %v335
        %v1198 = vunpack.c.h.b16 %v335
        %v1199 = vunpack.c.l.b16 %v336
        %v1200 = vunpack.c.h.b16 %v336
        %v1201 = vunpack.c.l.b16 %v337
        %v1202 = vunpack.c.h.b16 %v337
        %v1203 = vunpack.c.l.b16 %v338
        %v1204 = vunpack.c.h.b16 %v338
        %v1205 = vunpack.c.l.b16 %v339
        %v1206 = vunpack.c.h.b16 %v339
        %v1207 = vunpack.c.l.b16 %v340
        %v1208 = vunpack.c.h.b16 %v340
        %v1209 = vunpack.c.l.b16 %v341
        %v1210 = vunpack.c.h.b16 %v341
        %v1211 = vunpack.c.l.b16 %v342
        %v1212 = vunpack.c.h.b16 %v342
        %v1213 = vunpack.c.l.b16 %v343
        %v1214 = vunpack.c.h.b16 %v343
        %v1215 = vunpack.c.l.b16 %v344
        %v1216 = vunpack.c.h.b16 %v344
        %v1217 = vunpack.c.l.b16 %v345
        %v1218 = vunpack.c.h.b16 %v345
        %v1219 = vunpack.c.l.b16 %v346
        %v1220 = vunpack.c.h.b16 %v346
        %v1221 = vunpack.c.l.b16 %v347
        %v1222 = vunpack.c.h.b16 %v347
        %v1223 = vunpack.c.l.b16 %v348
        %v1224 = vunpack.c.h.b16 %v348
        %v1225 = vunpack.c.l.b16 %v349
        %v1226 = vunpack.c.h.b16 %v349
        %v1227 = vunpack.c.l.b16 %v350
        %v1228 = vunpack.c.h.b16 %v350
        %v1229 = vunpack.c.l.b16 %v351
        %v1230 = vunpack.c.h.b16 %v351
        %v1231 = vunpack.c.l.b16 %v352
        %v1232 = vunpack.c.h.b16 %v352
        %v1233 = vunpack.c.l.b16 %v353
        %v1234 = vunpack.c.h.b16 %v353
        %v1235 = vunpack.c.l.b16 %v354
        %v1236 = vunpack.c.h.b16 %v354
        %v1237 = vunpack.c.l.b16 %v355
        %v1238 = vunpack.c.h.b16 %v355
        %v1239 = vunpack.c.l.b16 %v356
        %v1240 = vunpack.c.h.b16 %v356
        %v1241 = vunpack.c.l.b16 %v357
        %v1242 = vunpack.c.h.b16 %v357
        %v1243 = vunpack.c.l.b16 %v358
        %v1244 = vunpack.c.h.b16 %v358
        %v1245 = vunpack.c.l.b16 %v359
        %v1246 = vunpack.c.h.b16 %v359
        %v1247 = vunpack.c.l.b16 %v360
        %v1248 = vunpack.c.h.b16 %v360
        %v1249 = vunpack.c.l.b16 %v361
        %v1250 = vunpack.c.h.b16 %v361
        %v1251 = vunpack.c.l.b16 %v362
        %v1252 = vunpack.c.h.b16 %v362
        %v1253 = vunpack.c.l.b16 %v363
        %v1254 = vunpack.c.h.b16 %v363
        %v1255 = vunpack.c.l.b16 %v364
        %v1256 = vunpack.c.h.b16 %v364
        %v1257 = vunpack.c.l.b16 %v365
        %v1258 = vunpack.c.h.b16 %v365
        %v1259 = vunpack.c.l.b16 %v366
        %v1260 = vunpack.c.h.b16 %v366
        %v1261 = vunpack.c.l.b16 %v367
        %v1262 = vunpack.c.h.b16 %v367
        %v1263 = vunpack.c.l.b16 %v368
        %v1264 = vunpack.c.h.b16 %v368
        %v1265 = vunpack.c.l.b16 %v369
        %v1266 = vunpack.c.h.b16 %v369
        %v1267 = vunpack.c.l.b16 %v370
        %v1268 = vunpack.c.h.b16 %v370
        %v1269 = vunpack.c.l.b16 %v371
        %v1270 = vunpack.c.h.b16 %v371
        %v1271 = vunpack.c.l.b16 %v372
        %v1272 = vunpack.c.h.b16 %v372
        %v1273 = vunpack.c.l.b16 %v373
        %v1274 = vunpack.c.h.b16 %v373
        %v1275 = vunpack.c.l.b16 %v374
        %v1276 = vunpack.c.h.b16 %v374
        %v1277 = vunpack.c.l.b16 %v375
        %v1278 = vunpack.c.h.b16 %v375
        %v1279 = vunpack.c.l.b16 %v376
        %v1280 = vunpack.c.h.b16 %v376
        %v1281 = vunpack.c.l.b16 %v377
        %v1282 = vunpack.c.h.b16 %v377
        %v1283 = vunpack.c.l.b16 %v378
        %v1284 = vunpack.c.h.b16 %v378
        %v1285 = vunpack.c.l.b16 %v379
        %v1286 = vunpack.c.h.b16 %v379
        %v1287 = vunpack.c.l.b16 %v380
        %v1288 = vunpack.c.h.b16 %v380
        %v1289 = vunpack.c.l.b16 %v381
        %v1290 = vunpack.c.h.b16 %v381
        %v1291 = vunpack.c.l.b16 %v382
        %v1292 = vunpack.c.h.b16 %v382
        %v1293 = vunpack.c.l.b16 %v383
        %v1294 = vunpack.c.h.b16 %v383
        %v1295 = vunpack.c.l.b16 %v384
        %v1296 = vunpack.c.h.b16 %v384
        %v1297 = vunpack.c.l.b16 %v385
        %v1298 = vunpack.c.h.b16 %v385
        %v1299 = vunpack.c.l.b16 %v386
        %v1300 = vunpack.c.h.b16 %v386
        %v1301 = vunpack.c.l.b16 %v387
        %v1302 = vunpack.c.h.b16 %v387
        %v1303 = vunpack.c.l.b16 %v388
        %v1304 = vunpack.c.h.b16 %v388
        %v1305 = vunpack.c.l.b16 %v389
        %v1306 = vunpack.c.h.b16 %v389
        %v1307 = vunpack.c.l.b16 %v390
        %v1308 = vunpack.c.h.b16 %v390
        %v1309 = vunpack.c.l.b16 %v391
        %v1310 = vunpack.c.h.b16 %v391
        %v1311 = vunpack.c.l.b16 %v392
        %v1312 = vunpack.c.h.b16 %v392
        %v1313 = vunpack.c.l.b16 %v393
        %v1314 = vunpack.c.h.b16 %v393
        %v1315 = vunpack.c.l.b16 %v394
        %v1316 = vunpack.c.h.b16 %v394
        %v1317 = vunpack.c.l.b16 %v395
        %v1318 = vunpack.c.h.b16 %v395
        %v1319 = vunpack.c.l.b16 %v396
        %v1320 = vunpack.c.h.b16 %v396
        %v1321 = vunpack.c.l.b16 %v397
        %v1322 = vunpack.c.h.b16 %v397
        %v1323 = vunpack.c.l.b16 %v398
        %v1324 = vunpack.c.h.b16 %v398
        %v1325 = vunpack.c.l.b16 %v399
        %v1326 = vunpack.c.h.b16 %v399
        %v1327 = vunpack.c.l.b16 %v400
        %v1328 = vunpack.c.h.b16 %v400
        %v1329 = vunpack.c.l.b16 %v401
        %v1330 = vunpack.c.h.b16 %v401
        %v1331 = vunpack.c.l.b16 %v402
        %v1332 = vunpack.c.h.b16 %v402
        %v1333 = vunpack.c.l.b16 %v403
        %v1334 = vunpack.c.h.b16 %v403
        %v1335 = vunpack.c.l.b16 %v404
        %v1336 = vunpack.c.h.b16 %v404
        %v1337 = vunpack.c.l.b16 %v405
        %v1338 = vunpack.c.h.b16 %v405
        %v1339 = vunpack.c.l.b16 %v406
        %v1340 = vunpack.c.h.b16 %v406
        %v1341 = vunpack.c.l.b16 %v407
        %v1342 = vunpack.c.h.b16 %v407
        %v1343 = vunpack.c.l.b16 %v408
        %v1344 = vunpack.c.h.b16 %v408
        %v1345 = vunpack.c.l.b16 %v409
        %v1346 = vunpack.c.h.b16 %v409
        %v1347 = vunpack.c.l.b16 %v410
        %v1348 = vunpack.c.h.b16 %v410
        %v1349 = vunpack.c.l.b16 %v411
        %v1350 = vunpack.c.h.b16 %v411
        %v1351 = vunpack.c.l.b16 %v412
        %v1352 = vunpack.c.h.b16 %v412
        %v1353 = vunpack.c.l.b16 %v413
        %v1354 = vunpack.c.h.b16 %v413
        %v1355 = vunpack.c.l.b16 %v414
        %v1356 = vunpack.c.h.b16 %v414
        %v1357 = vunpack.c.l.b16 %v415
        %v1358 = vunpack.c.h.b16 %v415
        %v1359 = vunpack.c.l.b16 %v416
        %v1360 = vunpack.c.h.b16 %v416
        %v1361 = vunpack.c.l.b16 %v417
        %v1362 = vunpack.c.h.b16 %v417
        %v1363 = vunpack.c.l.b16 %v418
        %v1364 = vunpack.c.h.b16 %v418
        %v1365 = vunpack.c.l.b16 %v419
        %v1366 = vunpack.c.h.b16 %v419
        %v1367 = vunpack.c.l.b16 %v420
        %v1368 = vunpack.c.h.b16 %v420
        %v1369 = vunpack.c.l.b16 %v421
        %v1370 = vunpack.c.h.b16 %v421
        %v1371 = vunpack.c.l.b16 %v422
        %v1372 = vunpack.c.h.b16 %v422
        %v1373 = vunpack.c.l.b16 %v423
        %v1374 = vunpack.c.h.b16 %v423
        %v1375 = vunpack.c.l.b16 %v424
        %v1376 = vunpack.c.h.b16 %v424
        %v1377 = vunpack.c.l.b16 %v425
        %v1378 = vunpack.c.h.b16 %v425
        %v1379 = vunpack.c.l.b16 %v426
        %v1380 = vunpack.c.h.b16 %v426
        %v1381 = vunpack.c.l.b16 %v427
        %v1382 = vunpack.c.h.b16 %v427
        %v1383 = vunpack.c.l.b16 %v428
        %v1384 = vunpack.c.h.b16 %v428
        %v1385 = vunpack.c.l.b16 %v429
        %v1386 = vunpack.c.h.b16 %v429
        %v1387 = vunpack.c.l.b16 %v430
        %v1388 = vunpack.c.h.b16 %v430
        %v1389 = vunpack.c.l.b16 %v431
        %v1390 = vunpack.c.h.b16 %v431
        %v1391 = vunpack.c.l.b16 %v432
        %v1392 = vunpack.c.h.b16 %v432
        %v1393 = vunpack.c.l.b16 %v433
        %v1394 = vunpack.c.h.b16 %v433
        %v1395 = vunpack.c.l.b16 %v434
        %v1396 = vunpack.c.h.b16 %v434
        %v1397 = vunpack.c.l.b16 %v435
        %v1398 = vunpack.c.h.b16 %v435
        %v1399 = vunpack.c.l.b16 %v436
        %v1400 = vunpack.c.h.b16 %v436
        %v1401 = vunpack.c.l.b16 %v437
        %v1402 = vunpack.c.h.b16 %v437
        %v1403 = vunpack.c.l.b16 %v438
        %v1404 = vunpack.c.h.b16 %v438
        %v1405 = vunpack.c.l.b16 %v439
        %v1406 = vunpack.c.h.b16 %v439
        %v1407 = vunpack.c.l.b16 %v440
        %v1408 = vunpack.c.h.b16 %v440
        %v1409 = vunpack.c.l.b16 %v441
        %v1410 = vunpack.c.h.b16 %v441
        %v1411 = vunpack.c.l.b16 %v442
        %v1412 = vunpack.c.h.b16 %v442
        %v1413 = vunpack.c.l.b16 %v443
        %v1414 = vunpack.c.h.b16 %v443
        %v1415 = vunpack.c.l.b16 %v444
        %v1416 = vunpack.c.h.b16 %v444
        %v1417 = vunpack.c.l.b16 %v445
        %v1418 = vunpack.c.h.b16 %v445
        %v1419 = vunpack.c.l.b16 %v446
        %v1420 = vunpack.c.h.b16 %v446
        %v1421 = vunpack.c.l.b16 %v447
        %v1422 = vunpack.c.h.b16 %v447
        %v1423 = vunpack.c.l.b16 %v448
        %v1424 = vunpack.c.h.b16 %v448
        %v1425 = vunpack.c.l.b16 %v449
        %v1426 = vunpack.c.h.b16 %v449
        %v1427 = vunpack.c.l.b16 %v450
        %v1428 = vunpack.c.h.b16 %v450
        %v1429 = vunpack.c.l.b16 %v451
        %v1430 = vunpack.c.h.b16 %v451
        %v1431 = vunpack.c.l.b16 %v452
        %v1432 = vunpack.c.h.b16 %v452
        %v1433 = vunpack.c.l.b16 %v453
        %v1434 = vunpack.c.h.b16 %v453
        %v1435 = vunpack.c.l.b16 %v454
        %v1436 = vunpack.c.h.b16 %v454
        %v1437 = vunpack.c.l.b16 %v455
        %v1438 = vunpack.c.h.b16 %v455
        %v1439 = vunpack.c.l.b16 %v456
        %v1440 = vunpack.c.h.b16 %v456
        %v1441 = vunpack.c.l.b16 %v457
        %v1442 = vunpack.c.h.b16 %v457
        %v1443 = vunpack.c.l.b16 %v458
        %v1444 = vunpack.c.h.b16 %v458
        %v1445 = vunpack.c.l.b16 %v459
        %v1446 = vunpack.c.h.b16 %v459
        %v1447 = vunpack.c.l.b16 %v460
        %v1448 = vunpack.c.h.b16 %v460
        %v1449 = vunpack.c.l.b16 %v461
        %v1450 = vunpack.c.h.b16 %v461
        %v1451 = vunpack.c.l.b16 %v462
        %v1452 = vunpack.c.h.b16 %v462
        %v1453 = vunpack.c.l.b16 %v463
        %v1454 = vunpack.c.h.b16 %v463
        %v1455 = vunpack.c.l.b16 %v464
        %v1456 = vunpack.c.h.b16 %v464
        %v1457 = vunpack.c.l.b16 %v465
        %v1458 = vunpack.c.h.b16 %v465
        %v1459 = vunpack.c.l.b16 %v466
        %v1460 = vunpack.c.h.b16 %v466
        %v1461 = vunpack.c.l.b16 %v467
        %v1462 = vunpack.c.h.b16 %v467
        %v1463 = vunpack.c.l.b16 %v468
        %v1464 = vunpack.c.h.b16 %v468
        %v1465 = vunpack.c.l.b16 %v469
        %v1466 = vunpack.c.h.b16 %v469
        %v1467 = vunpack.c.l.b16 %v470
        %v1468 = vunpack.c.h.b16 %v470
        %v1469 = vunpack.c.l.b16 %v471
        %v1470 = vunpack.c.h.b16 %v471
        %v1471 = vunpack.c.l.b16 %v472
        %v1472 = vunpack.c.h.b16 %v472
        %v1473 = vunpack.c.l.b16 %v473
        %v1474 = vunpack.c.h.b16 %v473
        %v1475 = vunpack.c.l.b16 %v474
        %v1476 = vunpack.c.h.b16 %v474
        %v1477 = vunpack.c.l.b16 %v475
        %v1478 = vunpack.c.h.b16 %v475
        %v1479 = vunpack.c.l.b16 %v476
        %v1480 = vunpack.c.h.b16 %v476
        %v1481 = vunpack.c.l.b16 %v477
        %v1482 = vunpack.c.h.b16 %v477
        %v1483 = vunpack.c.l.b16 %v478
        %v1484 = vunpack.c.h.b16 %v478
        %v1485 = vunpack.c.l.b16 %v479
        %v1486 = vunpack.c.h.b16 %v479
        %v1487 = vunpack.c.l.b16 %v480
        %v1488 = vunpack.c.h.b16 %v480
        %v1489 = vunpack.c.l.b16 %v481
        %v1490 = vunpack.c.h.b16 %v481
        %v1491 = vunpack.c.l.b16 %v482
        %v1492 = vunpack.c.h.b16 %v482
        %v1493 = vunpack.c.l.b16 %v483
        %v1494 = vunpack.c.h.b16 %v483
        %v1495 = vunpack.c.l.b16 %v484
        %v1496 = vunpack.c.h.b16 %v484
        %v1497 = vunpack.c.l.b16 %v485
        %v1498 = vunpack.c.h.b16 %v485
        %v1499 = vunpack.c.l.b16 %v486
        %v1500 = vunpack.c.h.b16 %v486
        %v1501 = vunpack.c.l.b16 %v487
        %v1502 = vunpack.c.h.b16 %v487
        %v1503 = vunpack.c.l.b16 %v488
        %v1504 = vunpack.c.h.b16 %v488
        %v1505 = vunpack.c.l.b16 %v489
        %v1506 = vunpack.c.h.b16 %v489
        %v1507 = vunpack.c.l.b16 %v490
        %v1508 = vunpack.c.h.b16 %v490
        %v1509 = vunpack.c.l.b16 %v491
        %v1510 = vunpack.c.h.b16 %v491
        %v1511 = vunpack.c.l.b16 %v492
        %v1512 = vunpack.c.h.b16 %v492
        %v1513 = vunpack.c.l.b16 %v493
        %v1514 = vunpack.c.h.b16 %v493
        %v1515 = vunpack.c.l.b16 %v494
        %v1516 = vunpack.c.h.b16 %v494
        %v1517 = vunpack.c.l.b16 %v495
        %v1518 = vunpack.c.h.b16 %v495
        %v1519 = vunpack.c.l.b16 %v496
        %v1520 = vunpack.c.h.b16 %v496
        %v1521 = vunpack.c.l.b16 %v497
        %v1522 = vunpack.c.h.b16 %v497
        %v1523 = vunpack.c.l.b16 %v498
        %v1524 = vunpack.c.h.b16 %v498
        %v1525 = vunpack.c.l.b16 %v499
        %v1526 = vunpack.c.h.b16 %v499
        %v1527 = vunpack.c.l.b16 %v500
        %v1528 = vunpack.c.h.b16 %v500
        %v1529 = vunpack.c.l.b16 %v501
        %v1530 = vunpack.c.h.b16 %v501
        %v1531 = vunpack.c.l.b16 %v502
        %v1532 = vunpack.c.h.b16 %v502
        %v1533 = vunpack.c.l.b16 %v503
        %v1534 = vunpack.c.h.b16 %v503
        %v1535 = vunpack.c.l.b16 %v504
        %v1536 = vunpack.c.h.b16 %v504
        %v1537 = vunpack.c.l.b16 %v505
        %v1538 = vunpack.c.h.b16 %v505
        %v1539 = vunpack.c.l.b16 %v506
        %v1540 = vunpack.c.h.b16 %v506
        %v1541 = vunpack.c.l.b16 %v507
        %v1542 = vunpack.c.h.b16 %v507
        %v1543 = vunpack.c.l.b16 %v508
        %v1544 = vunpack.c.h.b16 %v508
        %v1545 = vunpack.c.l.b16 %v509
        %v1546 = vunpack.c.h.b16 %v509
        %v1547 = vunpack.c.l.b16 %v510
        %v1548 = vunpack.c.h.b16 %v510
        %v1549 = vunpack.c.l.b16 %v511
        %v1550 = vunpack.c.h.b16 %v511
        %v1551 = vunpack.c.l.b16 %v512
        %v1552 = vunpack.c.h.b16 %v512
        %v1553 = vunpack.c.l.b16 %v513
        %v1554 = vunpack.c.h.b16 %v513
        %v1555 = vunpack.c.l.b16 %v514
        %v1556 = vunpack.c.h.b16 %v514
        %v1557 = vunpack.c.l.b16 %v515
        %v1558 = vunpack.c.h.b16 %v515
        %v1559 = vunpack.c.l.b16 %v516
        %v1560 = vunpack.c.h.b16 %v516
        %v1561 = vunpack.c.l.b16 %v517
        %v1562 = vunpack.c.h.b16 %v517
        %v1563 = vunpack.c.l.b16 %v518
        %v1564 = vunpack.c.h.b16 %v518
        %v1565 = vunpack.c.l.b16 %v519
        %v1566 = vunpack.c.h.b16 %v519
        %v1567 = vunpack.c.l.b16 %v520
        %v1568 = vunpack.c.h.b16 %v520
        %v1569 = vunpack.c.l.b16 %v521
        %v1570 = vunpack.c.h.b16 %v521
        %v1571 = vunpack.c.l.b16 %v522
        %v1572 = vunpack.c.h.b16 %v522
        %v1573 = vunpack.c.l.b16 %v523
        %v1574 = vunpack.c.h.b16 %v523
        %v1575 = vunpack.c.l.b16 %v524
        %v1576 = vunpack.c.h.b16 %v524
        %v1577 = vunpack.c.l.b16 %v525
        %v1578 = vunpack.c.h.b16 %v525
        %v1579 = vunpack.c.l.b16 %v526
        %v1580 = vunpack.c.h.b16 %v526
        %v1581 = vunpack.c.l.b16 %v527
        %v1582 = vunpack.c.h.b16 %v527
        %v1583 = vunpack.c.l.b16 %v528
        %v1584 = vunpack.c.h.b16 %v528
        %v1585 = vunpack.c.l.b16 %v529
        %v1586 = vunpack.c.h.b16 %v529
        %v1587 = vunpack.c.l.b16 %v530
        %v1588 = vunpack.c.h.b16 %v530
        %v1589 = vunpack.c.l.b16 %v531
        %v1590 = vunpack.c.h.b16 %v531
        %v1591 = vunpack.c.l.b16 %v532
        %v1592 = vunpack.c.h.b16 %v532
        %v1593 = vunpack.c.l.b16 %v533
        %v1594 = vunpack.c.h.b16 %v533
        %v1595 = vunpack.c.l.b16 %v534
        %v1596 = vunpack.c.h.b16 %v534
        %v1597 = vunpack.c.l.b16 %v535
        %v1598 = vunpack.c.h.b16 %v535
        %v1599 = vunpack.c.l.b16 %v536
        %v1600 = vunpack.c.h.b16 %v536
        %v1601 = vunpack.c.l.b16 %v537
        %v1602 = vunpack.c.h.b16 %v537
        %v1603 = vunpack.c.l.b16 %v538
        %v1604 = vunpack.c.h.b16 %v538
        %v1605 = vunpack.c.l.b16 %v539
        %v1606 = vunpack.c.h.b16 %v539
        %v1607 = vunpack.c.l.b16 %v540
        %v1608 = vunpack.c.h.b16 %v540
        %v1609 = vunpack.c.l.b16 %v541
        %v1610 = vunpack.c.h.b16 %v541
        %v1611 = vunpack.c.l.b16 %v542
        %v1612 = vunpack.c.h.b16 %v542
        %v1613 = vunpack.c.l.b16 %v543
        %v1614 = vunpack.c.h.b16 %v543
        %v1615 = vunpack.c.l.b16 %v544
        %v1616 = vunpack.c.h.b16 %v544
        %v1617 = vunpack.c.l.b16 %v545
        %v1618 = vunpack.c.h.b16 %v545
        %v1619 = vunpack.c.l.b16 %v546
        %v1620 = vunpack.c.h.b16 %v546
        %v1621 = vunpack.c.l.b16 %v547
        %v1622 = vunpack.c.h.b16 %v547
        %v1623 = vunpack.c.l.b16 %v548
        %v1624 = vunpack.c.h.b16 %v548
        %v1625 = vunpack.c.l.b16 %v549
        %v1626 = vunpack.c.h.b16 %v549
        %v1627 = vunpack.c.l.b16 %v550
        %v1628 = vunpack.c.h.b16 %v550
        %v1629 = vunpack.c.l.b16 %v551
        %v1630 = vunpack.c.h.b16 %v551
        %v1631 = vunpack.c.l.b16 %v552
        %v1632 = vunpack.c.h.b16 %v552
        %v1633 = vunpack.c.l.b16 %v553
        %v1634 = vunpack.c.h.b16 %v553
        %v1635 = vunpack.c.l.b16 %v554
        %v1636 = vunpack.c.h.b16 %v554
        %v1637 = vunpack.c.l.b16 %v555
        %v1638 = vunpack.c.h.b16 %v555
        %v1639 = vunpack.c.l.b16 %v556
        %v1640 = vunpack.c.h.b16 %v556
        %v1641 = vunpack.c.l.b16 %v557
        %v1642 = vunpack.c.h.b16 %v557
        %v1643 = vunpack.c.l.b16 %v558
        %v1644 = vunpack.c.h.b16 %v558
        %v1645 = vunpack.c.l.b16 %v559
        %v1646 = vunpack.c.h.b16 %v559
        %v1647 = vunpack.c.l.b16 %v560
        %v1648 = vunpack.c.h.b16 %v560
        %v1649 = vunpack.c.l.b16 %v561
        %v1650 = vunpack.c.h.b16 %v561
        %v1651 = vunpack.c.l.b16 %v562
        %v1652 = vunpack.c.h.b16 %v562
        %v1653 = vunpack.c.l.b16 %v563
        %v1654 = vunpack.c.h.b16 %v563
        %v1655 = vunpack.c.l.b16 %v564
        %v1656 = vunpack.c.h.b16 %v564
        %v1657 = vunpack.c.l.b16 %v565
        %v1658 = vunpack.c.h.b16 %v565
        %v1659 = vunpack.c.l.b16 %v566
        %v1660 = vunpack.c.h.b16 %v566
        %v1661 = vunpack.c.l.b16 %v567
        %v1662 = vunpack.c.h.b16 %v567
        %v1663 = vunpack.c.l.b16 %v568
        %v1664 = vunpack.c.h.b16 %v568
        %v1665 = vunpack.c.l.b16 %v569
        %v1666 = vunpack.c.h.b16 %v569
        %v1667 = vunpack.c.l.b16 %v570
        %v1668 = vunpack.c.h.b16 %v570
        %v1669 = vunpack.c.l.b16 %v571
        %v1670 = vunpack.c.h.b16 %v571
        %v1671 = vunpack.c.l.b16 %v572
        %v1672 = vunpack.c.h.b16 %v572
        %v1673 = vunpack.c.l.b16 %v573
        %v1674 = vunpack.c.h.b16 %v573
        %v1675 = vunpack.c.l.b16 %v574
        %v1676 = vunpack.c.h.b16 %v574
        %v1677 = vunpack.c.l.b16 %v575
        %v1678 = vunpack.c.h.b16 %v575
        %v1679 = vunpack.c.l.b16 %v576
        %v1680 = vunpack.c.h.b16 %v576
        %v1681 = vunpack.c.l.b16 %v577
        %v1682 = vunpack.c.h.b16 %v577
        %v1683 = vunpack.c.l.b16 %v578
        %v1684 = vunpack.c.h.b16 %v578
        %v1685 = vunpack.c.l.b16 %v579
        %v1686 = vunpack.c.h.b16 %v579
        %v1687 = vunpack.c.l.b16 %v580
        %v1688 = vunpack.c.h.b16 %v580
        %v1689 = vunpack.c.l.b16 %v581
        %v1690 = vunpack.c.h.b16 %v581
        %v1691 = vunpack.c.l.b16 %v582
        %v1692 = vunpack.c.h.b16 %v582
        %v1693 = vunpack.c.l.b16 %v583
        %v1694 = vunpack.c.h.b16 %v583
        %v1695 = vunpack.c.l.b16 %v584
        %v1696 = vunpack.c.h.b16 %v584
        %v1697 = vunpack.c.l.b16 %v585
        %v1698 = vunpack.c.h.b16 %v585
        %v1699 = vunpack.c.l.b16 %v586
        %v1700 = vunpack.c.h.b16 %v586
        %v1701 = vunpack.c.l.b16 %v587
        %v1702 = vunpack.c.h.b16 %v587
        %v1703 = vunpack.c.l.b16 %v588
        %v1704 = vunpack.c.h.b16 %v588
        %v1705 = vunpack.c.l.b16 %v589
        %v1706 = vunpack.c.h.b16 %v589
        %v1707 = vunpack.c.l.b16 %v590
        %v1708 = vunpack.c.h.b16 %v590
        %v1709 = vunpack.c.l.b16 %v591
        %v1710 = vunpack.c.h.b16 %v591
        %v1711 = vunpack.c.l.b16 %v592
        %v1712 = vunpack.c.h.b16 %v592
        %v1713 = vunpack.c.l.b16 %v593
        %v1714 = vunpack.c.h.b16 %v593
        %v1715 = vunpack.c.l.b16 %v594
        %v1716 = vunpack.c.h.b16 %v594
        %v1717 = vunpack.c.l.b16 %v595
        %v1718 = vunpack.c.h.b16 %v595
        %v1719 = vunpack.c.l.b16 %v596
        %v1720 = vunpack.c.h.b16 %v596
        %v1721 = vunpack.c.l.b16 %v597
        %v1722 = vunpack.c.h.b16 %v597
        %v1723 = vunpack.c.l.b16 %v598
        %v1724 = vunpack.c.h.b16 %v598
        %v1725 = vunpack.c.l.b16 %v599
        %v1726 = vunpack.c.h.b16 %v599
        %v1727 = vunpack.c.l.b16 %v600
        %v1728 = vunpack.c.h.b16 %v600
        %v1729 = vunpack.c.l.b16 %v601
        %v1730 = vunpack.c.h.b16 %v601
        %v1731 = vunpack.c.l.b16 %v602
        %v1732 = vunpack.c.h.b16 %v602
        %v1733 = vunpack.c.l.b16 %v603
        %v1734 = vunpack.c.h.b16 %v603
        %v1735 = vunpack.c.l.b16 %v604
        %v1736 = vunpack.c.h.b16 %v604
        %v1737 = vunpack.c.l.b16 %v605
        %v1738 = vunpack.c.h.b16 %v605
        %v1739 = vunpack.c.l.b16 %v606
        %v1740 = vunpack.c.h.b16 %v606
        %v1741 = vunpack.c.l.b16 %v607
        %v1742 = vunpack.c.h.b16 %v607
        %v1743 = vunpack.c.l.b16 %v608
        %v1744 = vunpack.c.h.b16 %v608
        %v1745 = vunpack.c.l.b16 %v609
        %v1746 = vunpack.c.h.b16 %v609
        %v1747 = vunpack.c.l.b16 %v610
        %v1748 = vunpack.c.h.b16 %v610
        %v1749 = vunpack.c.l.b16 %v611
        %v1750 = vunpack.c.h.b16 %v611
        %v1751 = vunpack.c.l.b16 %v612
        %v1752 = vunpack.c.h.b16 %v612
        %v1753 = vunpack.c.l.b16 %v613
        %v1754 = vunpack.c.h.b16 %v613
        %v1755 = vunpack.c.l.b16 %v614
        %v1756 = vunpack.c.h.b16 %v614
        %v1757 = vunpack.c.l.b16 %v615
        %v1758 = vunpack.c.h.b16 %v615
        %v1759 = vunpack.c.l.b16 %v616
        %v1760 = vunpack.c.h.b16 %v616
        %v1761 = vunpack.c.l.b16 %v617
        %v1762 = vunpack.c.h.b16 %v617
        %v1763 = vunpack.c.l.b16 %v618
        %v1764 = vunpack.c.h.b16 %v618
        %v1765 = vunpack.c.l.b16 %v619
        %v1766 = vunpack.c.h.b16 %v619
        %v1767 = vunpack.c.l.b16 %v620
        %v1768 = vunpack.c.h.b16 %v620
        %v1769 = vunpack.c.l.b16 %v621
        %v1770 = vunpack.c.h.b16 %v621
        %v1771 = vunpack.c.l.b16 %v622
        %v1772 = vunpack.c.h.b16 %v622
        %v1773 = vunpack.c.l.b16 %v623
        %v1774 = vunpack.c.h.b16 %v623
        %v1775 = vunpack.c.l.b16 %v624
        %v1776 = vunpack.c.h.b16 %v624
        %v1777 = vunpack.c.l.b16 %v625
        %v1778 = vunpack.c.h.b16 %v625
        %v1779 = vunpack.c.l.b16 %v626
        %v1780 = vunpack.c.h.b16 %v626
        %v1781 = vunpack.c.l.b16 %v627
        %v1782 = vunpack.c.h.b16 %v627
        %v1783 = vunpack.c.l.b16 %v628
        %v1784 = vunpack.c.h.b16 %v628
        %v1785 = vunpack.c.l.b16 %v629
        %v1786 = vunpack.c.h.b16 %v629
        %v1787 = vunpack.c.l.b16 %v630
        %v1788 = vunpack.c.h.b16 %v630
        %v1789 = vunpack.c.l.b16 %v631
        %v1790 = vunpack.c.h.b16 %v631
        %v1791 = vunpack.c.l.b16 %v632
        %v1792 = vunpack.c.h.b16 %v632
        %v1793 = vunpack.c.l.b16 %v633
        %v1794 = vunpack.c.h.b16 %v633
        %v1795 = vunpack.c.l.b16 %v634
        %v1796 = vunpack.c.h.b16 %v634
        %v1797 = vunpack.c.l.b16 %v635
        %v1798 = vunpack.c.h.b16 %v635
        %v1799 = vunpack.c.l.b16 %v636
        %v1800 = vunpack.c.h.b16 %v636
        %v1801 = vunpack.c.l.b16 %v637
        %v1802 = vunpack.c.h.b16 %v637
        %v1803 = vunpack.c.l.b16 %v638
        %v1804 = vunpack.c.h.b16 %v638
        %v1805 = vunpack.c.l.b16 %v639
        %v1806 = vunpack.c.h.b16 %v639
        %v1807 = vunpack.c.l.b16 %v640
        %v1808 = vunpack.c.h.b16 %v640
        %v1809 = vunpack.c.l.b16 %v641
        %v1810 = vunpack.c.h.b16 %v641
        %v1811 = vunpack.c.l.b16 %v642
        %v1812 = vunpack.c.h.b16 %v642
        %v1813 = vunpack.c.l.b16 %v643
        %v1814 = vunpack.c.h.b16 %v643
        %v1815 = vunpack.c.l.b16 %v644
        %v1816 = vunpack.c.h.b16 %v644
        %v1817 = vunpack.c.l.b16 %v645
        %v1818 = vunpack.c.h.b16 %v645
        %v1819 = vunpack.c.l.b16 %v646
        %v1820 = vunpack.c.h.b16 %v646
        %v1821 = vunpack.c.l.b16 %v647
        %v1822 = vunpack.c.h.b16 %v647
        %v1823 = vunpack.c.l.b16 %v648
        %v1824 = vunpack.c.h.b16 %v648
        %v1825 = vunpack.c.l.b16 %v649
        %v1826 = vunpack.c.h.b16 %v649
        %v1827 = vunpack.c.l.b16 %v650
        %v1828 = vunpack.c.h.b16 %v650
        %v1829 = vunpack.c.l.b16 %v651
        %v1830 = vunpack.c.h.b16 %v651
        %v1831 = vunpack.c.l.b16 %v652
        %v1832 = vunpack.c.h.b16 %v652
        %v1833 = vunpack.c.l.b16 %v653
        %v1834 = vunpack.c.h.b16 %v653
        %v1835 = vunpack.c.l.b16 %v654
        %v1836 = vunpack.c.h.b16 %v654
        %v1837 = vunpack.c.l.b16 %v655
        %v1838 = vunpack.c.h.b16 %v655
        %v1839 = vunpack.c.l.b16 %v656
        %v1840 = vunpack.c.h.b16 %v656
        %v1841 = vunpack.c.l.b16 %v657
        %v1842 = vunpack.c.h.b16 %v657
        %v1843 = vunpack.c.l.b16 %v658
        %v1844 = vunpack.c.h.b16 %v658
        %v1845 = vunpack.c.l.b16 %v659
        %v1846 = vunpack.c.h.b16 %v659
        %v1847 = vunpack.c.l.b16 %v660
        %v1848 = vunpack.c.h.b16 %v660
        %v1849 = vunpack.c.l.b16 %v661
        %v1850 = vunpack.c.h.b16 %v661
        %v1851 = vunpack.c.l.b16 %v662
        %v1852 = vunpack.c.h.b16 %v662
        %v1853 = vunpack.c.l.b16 %v663
        %v1854 = vunpack.c.h.b16 %v663
        %v1855 = vunpack.c.l.b16 %v664
        %v1856 = vunpack.c.h.b16 %v664
        %v1857 = vunpack.c.l.b16 %v665
        %v1858 = vunpack.c.h.b16 %v665
        %v1859 = vunpack.c.l.b16 %v666
        %v1860 = vunpack.c.h.b16 %v666
        %v1861 = vunpack.c.l.b16 %v667
        %v1862 = vunpack.c.h.b16 %v667
        %v1863 = vunpack.c.l.b16 %v668
        %v1864 = vunpack.c.h.b16 %v668
        %v1865 = vunpack.c.l.b16 %v669
        %v1866 = vunpack.c.h.b16 %v669
        %v1867 = vunpack.c.l.b16 %v670
        %v1868 = vunpack.c.h.b16 %v670
        %v1869 = vunpack.c.l.b16 %v671
        %v1870 = vunpack.c.h.b16 %v671
        %v1871 = vunpack.c.l.b16 %v672
        %v1872 = vunpack.c.h.b16 %v672
        %v1873 = vunpack.c.l.b16 %v673
        %v1874 = vunpack.c.h.b16 %v673
        %v1875 = vunpack.c.l.b16 %v674
        %v1876 = vunpack.c.h.b16 %v674
        %v1877 = vunpack.c.l.b16 %v675
        %v1878 = vunpack.c.h.b16 %v675
        %v1879 = vunpack.c.l.b16 %v676
        %v1880 = vunpack.c.h.b16 %v676
        %v1881 = vunpack.c.l.b16 %v677
        %v1882 = vunpack.c.h.b16 %v677
        %v1883 = vunpack.c.l.b16 %v678
        %v1884 = vunpack.c.h.b16 %v678
        %v1885 = vunpack.c.l.b16 %v679
        %v1886 = vunpack.c.h.b16 %v679
        %v1887 = vunpack.c.l.b16 %v680
        %v1888 = vunpack.c.h.b16 %v680
        %v1889 = vunpack.c.l.b16 %v681
        %v1890 = vunpack.c.h.b16 %v681
        %v1891 = vunpack.c.l.b16 %v682
        %v1892 = vunpack.c.h.b16 %v682
        %v1893 = vunpack.c.l.b16 %v683
        %v1894 = vunpack.c.h.b16 %v683
        %v1895 = vunpack.c.l.b16 %v684
        %v1896 = vunpack.c.h.b16 %v684
        %v1897 = vunpack.c.l.b16 %v685
        %v1898 = vunpack.c.h.b16 %v685
        %v1899 = vunpack.c.l.b16 %v686
        %v1900 = vunpack.c.h.b16 %v686
        %v1901 = vunpack.c.l.b16 %v687
        %v1902 = vunpack.c.h.b16 %v687
        %v1903 = vunpack.c.l.b16 %v688
        %v1904 = vunpack.c.h.b16 %v688
        %v1905 = vunpack.c.l.b16 %v689
        %v1906 = vunpack.c.h.b16 %v689
        %v1907 = vunpack.c.l.b16 %v690
        %v1908 = vunpack.c.h.b16 %v690
        %v1909 = vunpack.c.l.b16 %v691
        %v1910 = vunpack.c.h.b16 %v691
        %v1911 = vunpack.c.l.b16 %v692
        %v1912 = vunpack.c.h.b16 %v692
        %v1913 = vunpack.c.l.b16 %v693
        %v1914 = vunpack.c.h.b16 %v693
        %v1915 = vunpack.c.l.b16 %v694
        %v1916 = vunpack.c.h.b16 %v694
        %v1917 = vunpack.c.l.b16 %v695
        %v1918 = vunpack.c.h.b16 %v695
        %v1919 = vunpack.c.l.b16 %v696
        %v1920 = vunpack.c.h.b16 %v696
        %v1921 = vunpack.c.l.b16 %v697
        %v1922 = vunpack.c.h.b16 %v697
        %v1923 = vunpack.c.l.b16 %v698
        %v1924 = vunpack.c.h.b16 %v698
        %v1925 = vunpack.c.l.b16 %v699
        %v1926 = vunpack.c.h.b16 %v699
        %v1927 = vunpack.c.l.b16 %v700
        %v1928 = vunpack.c.h.b16 %v700
        %v1929 = vunpack.c.l.b16 %v701
        %v1930 = vunpack.c.h.b16 %v701
        %v1931 = vunpack.c.l.b16 %v702
        %v1932 = vunpack.c.h.b16 %v702
        %v1933 = vpack.c.b16 %v1177, %v1165
        %v1934 = vpack.c.b16 %v1178, %v1166
        %v1935 = vpack.c.b16 %v1179, %v1167
        %v1936 = vpack.c.b16 %v1180, %v1168
        %v1937 = vpack.c.b16 %v1181, %v1169
        %v1938 = vpack.c.b16 %v1182, %v1170
        %v1939 = vpack.c.b16 %v1183, %v1171
        %v1940 = vpack.c.b16 %v1184, %v1172
        %v1941 = vpack.c.b16 %v1185, %v1173
        %v1942 = vpack.c.b16 %v1186, %v1174
        %v1943 = vpack.c.b16 %v1187, %v1175
        %v1944 = vpack.c.b16 %v1188, %v1176
        %v1945 = vpack.c.b16 %v1201, %v1189
        %v1946 = vpack.c.b16 %v1202, %v1190
        %v1947 = vpack.c.b16 %v1203, %v1191
        %v1948 = vpack.c.b16 %v1204, %v1192
        %v1949 = vpack.c.b16 %v1205, %v1193
        %v1950 = vpack.c.b16 %v1206, %v1194
        %v1951 = vpack.c.b16 %v1207, %v1195
        %v1952 = vpack.c.b16 %v1208, %v1196
        %v1953 = vpack.c.b16 %v1209, %v1197
        %v1954 = vpack.c.b16 %v1210, %v1198
        %v1955 = vpack.c.b16 %v1211, %v1199
        %v1956 = vpack.c.b16 %v1212, %v1200
        %v1957 = vpack.c.b16 %v1225, %v1213
        %v1958 = vpack.c.b16 %v1226, %v1214
        %v1959 = vpack.c.b16 %v1227, %v1215
        %v1960 = vpack.c.b16 %v1228, %v1216
        %v1961 = vpack.c.b16 %v1229, %v1217
        %v1962 = vpack.c.b16 %v1230, %v1218
        %v1963 = vpack.c.b16 %v1231, %v1219
        %v1964 = vpack.c.b16 %v1232, %v1220
        %v1965 = vpack.c.b16 %v1233, %v1221
        %v1966 = vpack.c.b16 %v1234, %v1222
        %v1967 = vpack.c.b16 %v1235, %v1223
        %v1968 = vpack.c.b16 %v1236, %v1224
        %v1969 = vpack.c.b16 %v1249, %v1237
        %v1970 = vpack.c.b16 %v1250, %v1238
        %v1971 = vpack.c.b16 %v1251, %v1239
        %v1972 = vpack.c.b16 %v1252, %v1240
        %v1973 = vpack.c.b16 %v1253, %v1241
        %v1974 = vpack.c.b16 %v1254, %v1242
        %v1975 = vpack.c.b16 %v1255, %v1243
        %v1976 = vpack.c.b16 %v1256, %v1244
        %v1977 = vpack.c.b16 %v1257, %v1245
        %v1978 = vpack.c.b16 %v1258, %v1246
        %v1979 = vpack.c.b16 %v1259, %v1247
        %v1980 = vpack.c.b16 %v1260, %v1248
        %v1981 = vpack.c.b16 %v1273, %v1261
        %v1982 = vpack.c.b16 %v1274, %v1262
        %v1983 = vpack.c.b16 %v1275, %v1263
        %v1984 = vpack.c.b16 %v1276, %v1264
        %v1985 = vpack.c.b16 %v1277, %v1265
        %v1986 = vpack.c.b16 %v1278, %v1266
        %v1987 = vpack.c.b16 %v1279, %v1267
        %v1988 = vpack.c.b16 %v1280, %v1268
        %v1989 = vpack.c.b16 %v1281, %v1269
        %v1990 = vpack.c.b16 %v1282, %v1270
        %v1991 = vpack.c.b16 %v1283, %v1271
        %v1992 = vpack.c.b16 %v1284, %v1272
        %v1993 = vpack.c.b16 %v1297, %v1285
        %v1994 = vpack.c.b16 %v1298, %v1286
        %v1995 = vpack.c.b16 %v1299, %v1287
        %v1996 = vpack.c.b16 %v1300, %v1288
        %v1997 = vpack.c.b16 %v1301, %v1289
        %v1998 = vpack.c.b16 %v1302, %v1290
        %v1999 = vpack.c.b16 %v1303, %v1291
        %v2000 = vpack.c.b16 %v1304, %v1292
        %v2001 = vpack.c.b16 %v1305, %v1293
        %v2002 = vpack.c.b16 %v1306, %v1294
        %v2003 = vpack.c.b16 %v1307, %v1295
        %v2004 = vpack.c.b16 %v1308, %v1296
        %v2005 = vpack.c.b16 %v1321, %v1309
        %v2006 = vpack.c.b16 %v1322, %v1310
        %v2007 = vpack.c.b16 %v1323, %v1311
        %v2008 = vpack.c.b16 %v1324, %v1312
        %v2009 = vpack.c.b16 %v1325, %v1313
        %v2010 = vpack.c.b16 %v1326, %v1314
        %v2011 = vpack.c.b16 %v1327, %v1315
        %v2012 = vpack.c.b16 %v1328, %v1316
        %v2013 = vpack.c.b16 %v1329, %v1317
        %v2014 = vpack.c.b16 %v1330, %v1318
        %v2015 = vpack.c.b16 %v1331, %v1319
        %v2016 = vpack.c.b16 %v1332, %v1320
        %v2017 = vpack.c.b16 %v1345, %v1333
        %v2018 = vpack.c.b16 %v1346, %v1334
        %v2019 = vpack.c.b16 %v1347, %v1335
        %v2020 = vpack.c.b16 %v1348, %v1336
        %v2021 = vpack.c.b16 %v1349, %v1337
        %v2022 = vpack.c.b16 %v1350, %v1338
        %v2023 = vpack.c.b16 %v1351, %v1339
        %v2024 = vpack.c.b16 %v1352, %v1340
        %v2025 = vpack.c.b16 %v1353, %v1341
        %v2026 = vpack.c.b16 %v1354, %v1342
        %v2027 = vpack.c.b16 %v1355, %v1343
        %v2028 = vpack.c.b16 %v1356, %v1344
        %v2029 = vpack.c.b16 %v1369, %v1357
        %v2030 = vpack.c.b16 %v1370, %v1358
        %v2031 = vpack.c.b16 %v1371, %v1359
        %v2032 = vpack.c.b16 %v1372, %v1360
        %v2033 = vpack.c.b16 %v1373, %v1361
        %v2034 = vpack.c.b16 %v1374, %v1362
        %v2035 = vpack.c.b16 %v1375, %v1363
        %v2036 = vpack.c.b16 %v1376, %v1364
        %v2037 = vpack.c.b16 %v1377, %v1365
        %v2038 = vpack.c.b16 %v1378, %v1366
        %v2039 = vpack.c.b16 %v1379, %v1367
        %v2040 = vpack.c.b16 %v1380, %v1368
        %v2041 = vpack.c.b16 %v1393, %v1381
        %v2042 = vpack.c.b16 %v1394, %v1382
        %v2043 = vpack.c.b16 %v1395, %v1383
        %v2044 = vpack.c.b16 %v1396, %v1384
        %v2045 = vpack.c.b16 %v1397, %v1385
        %v2046 = vpack.c.b16 %v1398, %v1386
        %v2047 = vpack.c.b16 %v1399, %v1387
        %v2048 = vpack.c.b16 %v1400, %v1388
        %v2049 = vpack.c.b16 %v1401, %v1389
        %v2050 = vpack.c.b16 %v1402, %v1390
        %v2051 = vpack.c.b16 %v1403, %v1391
        %v2052 = vpack.c.b16 %v1404, %v1392
        %v2053 = vpack.c.b16 %v1417, %v1405
        %v2054 = vpack.c.b16 %v1418, %v1406
        %v2055 = vpack.c.b16 %v1419, %v1407
        %v2056 = vpack.c.b16 %v1420, %v1408
        %v2057 = vpack.c.b16 %v1421, %v1409
        %v2058 = vpack.c.b16 %v1422, %v1410
        %v2059 = vpack.c.b16 %v1423, %v1411
        %v2060 = vpack.c.b16 %v1424, %v1412
        %v2061 = vpack.c.b16 %v1425, %v1413
        %v2062 = vpack.c.b16 %v1426, %v1414
        %v2063 = vpack.c.b16 %v1427, %v1415
        %v2064 = vpack.c.b16 %v1428, %v1416
        %v2065 = vpack.c.b16 %v1441, %v1429
        %v2066 = vpack.c.b16 %v1442, %v1430
        %v2067 = vpack.c.b16 %v1443, %v1431
        %v2068 = vpack.c.b16 %v1444, %v1432
        %v2069 = vpack.c.b16 %v1445, %v1433
        %v2070 = vpack.c.b16 %v1446, %v1434
        %v2071 = vpack.c.b16 %v1447, %v1435
        %v2072 = vpack.c.b16 %v1448, %v1436
        %v2073 = vpack.c.b16 %v1449, %v1437
        %v2074 = vpack.c.b16 %v1450, %v1438
        %v2075 = vpack.c.b16 %v1451, %v1439
        %v2076 = vpack.c.b16 %v1452, %v1440
        %v2077 = vpack.c.b16 %v1465, %v1453
        %v2078 = vpack.c.b16 %v1466, %v1454
        %v2079 = vpack.c.b16 %v1467, %v1455
        %v2080 = vpack.c.b16 %v1468, %v1456
        %v2081 = vpack.c.b16 %v1469, %v1457
        %v2082 = vpack.c.b16 %v1470, %v1458
        %v2083 = vpack.c.b16 %v1471, %v1459
        %v2084 = vpack.c.b16 %v1472, %v1460
        %v2085 = vpack.c.b16 %v1473, %v1461
        %v2086 = vpack.c.b16 %v1474, %v1462
        %v2087 = vpack.c.b16 %v1475, %v1463
        %v2088 = vpack.c.b16 %v1476, %v1464
        %v2089 = vpack.c.b16 %v1489, %v1477
        %v2090 = vpack.c.b16 %v1490, %v1478
        %v2091 = vpack.c.b16 %v1491, %v1479
        %v2092 = vpack.c.b16 %v1492, %v1480
        %v2093 = vpack.c.b16 %v1493, %v1481
        %v2094 = vpack.c.b16 %v1494, %v1482
        %v2095 = vpack.c.b16 %v1495, %v1483
        %v2096 = vpack.c.b16 %v1496, %v1484
        %v2097 = vpack.c.b16 %v1497, %v1485
        %v2098 = vpack.c.b16 %v1498, %v1486
        %v2099 = vpack.c.b16 %v1499, %v1487
        %v2100 = vpack.c.b16 %v1500, %v1488
        %v2101 = vpack.c.b16 %v1513, %v1501
        %v2102 = vpack.c.b16 %v1514, %v1502
        %v2103 = vpack.c.b16 %v1515, %v1503
        %v2104 = vpack.c.b16 %v1516, %v1504
        %v2105 = vpack.c.b16 %v1517, %v1505
        %v2106 = vpack.c.b16 %v1518, %v1506
        %v2107 = vpack.c.b16 %v1519, %v1507
        %v2108 = vpack.c.b16 %v1520, %v1508
        %v2109 = vpack.c.b16 %v1521, %v1509
        %v2110 = vpack.c.b16 %v1522, %v1510
        %v2111 = vpack.c.b16 %v1523, %v1511
        %v2112 = vpack.c.b16 %v1524, %v1512
        %v2113 = vpack.c.b16 %v1537, %v1525
        %v2114 = vpack.c.b16 %v1538, %v1526
        %v2115 = vpack.c.b16 %v1539, %v1527
        %v2116 = vpack.c.b16 %v1540, %v1528
        %v2117 = vpack.c.b16 %v1541, %v1529
        %v2118 = vpack.c.b16 %v1542, %v1530
        %v2119 = vpack.c.b16 %v1543, %v1531
        %v2120 = vpack.c.b16 %v1544, %v1532
        %v2121 = vpack.c.b16 %v1545, %v1533
        %v2122 = vpack.c.b16 %v1546, %v1534
        %v2123 = vpack.c.b16 %v1547, %v1535
        %v2124 = vpack.c.b16 %v1548, %v1536
        %v2125 = vpack.c.b16 %v1561, %v1549
        %v2126 = vpack.c.b16 %v1562, %v1550
        %v2127 = vpack.c.b16 %v1563, %v1551
        %v2128 = vpack.c.b16 %v1564, %v1552
        %v2129 = vpack.c.b16 %v1565, %v1553
        %v2130 = vpack.c.b16 %v1566, %v1554
        %v2131 = vpack.c.b16 %v1567, %v1555
        %v2132 = vpack.c.b16 %v1568, %v1556
        %v2133 = vpack.c.b16 %v1569, %v1557
        %v2134 = vpack.c.b16 %v1570, %v1558
        %v2135 = vpack.c.b16 %v1571, %v1559
        %v2136 = vpack.c.b16 %v1572, %v1560
        %v2137 = vpack.c.b16 %v1585, %v1573
        %v2138 = vpack.c.b16 %v1586, %v1574
        %v2139 = vpack.c.b16 %v1587, %v1575
        %v2140 = vpack.c.b16 %v1588, %v1576
        %v2141 = vpack.c.b16 %v1589, %v1577
        %v2142 = vpack.c.b16 %v1590, %v1578
        %v2143 = vpack.c.b16 %v1591, %v1579
        %v2144 = vpack.c.b16 %v1592, %v1580
        %v2145 = vpack.c.b16 %v1593, %v1581
        %v2146 = vpack.c.b16 %v1594, %v1582
        %v2147 = vpack.c.b16 %v1595, %v1583
        %v2148 = vpack.c.b16 %v1596, %v1584
        %v2149 = vpack.c.b16 %v1609, %v1597
        %v2150 = vpack.c.b16 %v1610, %v1598
        %v2151 = vpack.c.b16 %v1611, %v1599
        %v2152 = vpack.c.b16 %v1612, %v1600
        %v2153 = vpack.c.b16 %v1613, %v1601
        %v2154 = vpack.c.b16 %v1614, %v1602
        %v2155 = vpack.c.b16 %v1615, %v1603
        %v2156 = vpack.c.b16 %v1616, %v1604
        %v2157 = vpack.c.b16 %v1617, %v1605
        %v2158 = vpack.c.b16 %v1618, %v1606
        %v2159 = vpack.c.b16 %v1619, %v1607
        %v2160 = vpack.c.b16 %v1620, %v1608
        %v2161 = vpack.c.b16 %v1633, %v1621
        %v2162 = vpack.c.b16 %v1634, %v1622
        %v2163 = vpack.c.b16 %v1635, %v1623
        %v2164 = vpack.c.b16 %v1636, %v1624
        %v2165 = vpack.c.b16 %v1637, %v1625
        %v2166 = vpack.c.b16 %v1638, %v1626
        %v2167 = vpack.c.b16 %v1639, %v1627
        %v2168 = vpack.c.b16 %v1640, %v1628
        %v2169 = vpack.c.b16 %v1641, %v1629
        %v2170 = vpack.c.b16 %v1642, %v1630
        %v2171 = vpack.c.b16 %v1643, %v1631
        %v2172 = vpack.c.b16 %v1644, %v1632
        %v2173 = vpack.c.b16 %v1657, %v1645
        %v2174 = vpack.c.b16 %v1658, %v1646
        %v2175 = vpack.c.b16 %v1659, %v1647
        %v2176 = vpack.c.b16 %v1660, %v1648
        %v2177 = vpack.c.b16 %v1661, %v1649
        %v2178 = vpack.c.b16 %v1662, %v1650
        %v2179 = vpack.c.b16 %v1663, %v1651
        %v2180 = vpack.c.b16 %v1664, %v1652
        %v2181 = vpack.c.b16 %v1665, %v1653
        %v2182 = vpack.c.b16 %v1666, %v1654
        %v2183 = vpack.c.b16 %v1667, %v1655
        %v2184 = vpack.c.b16 %v1668, %v1656
        %v2185 = vpack.c.b16 %v1681, %v1669
        %v2186 = vpack.c.b16 %v1682, %v1670
        %v2187 = vpack.c.b16 %v1683, %v1671
        %v2188 = vpack.c.b16 %v1684, %v1672
        %v2189 = vpack.c.b16 %v1685, %v1673
        %v2190 = vpack.c.b16 %v1686, %v1674
        %v2191 = vpack.c.b16 %v1687, %v1675
        %v2192 = vpack.c.b16 %v1688, %v1676
        %v2193 = vpack.c.b16 %v1689, %v1677
        %v2194 = vpack.c.b16 %v1690, %v1678
        %v2195 = vpack.c.b16 %v1691, %v1679
        %v2196 = vpack.c.b16 %v1692, %v1680
        %v2197 = vpack.c.b16 %v1705, %v1693
        %v2198 = vpack.c.b16 %v1706, %v1694
        %v2199 = vpack.c.b16 %v1707, %v1695
        %v2200 = vpack.c.b16 %v1708, %v1696
        %v2201 = vpack.c.b16 %v1709, %v1697
        %v2202 = vpack.c.b16 %v1710, %v1698
        %v2203 = vpack.c.b16 %v1711, %v1699
        %v2204 = vpack.c.b16 %v1712, %v1700
        %v2205 = vpack.c.b16 %v1713, %v1701
        %v2206 = vpack.c.b16 %v1714, %v1702
        %v2207 = vpack.c.b16 %v1715, %v1703
        %v2208 = vpack.c.b16 %v1716, %v1704
        %v2209 = vpack.c.b16 %v1729, %v1717
        %v2210 = vpack.c.b16 %v1730, %v1718
        %v2211 = vpack.c.b16 %v1731, %v1719
        %v2212 = vpack.c.b16 %v1732, %v1720
        %v2213 = vpack.c.b16 %v1733, %v1721
        %v2214 = vpack.c.b16 %v1734, %v1722
        %v2215 = vpack.c.b16 %v1735, %v1723
        %v2216 = vpack.c.b16 %v1736, %v1724
        %v2217 = vpack.c.b16 %v1737, %v1725
        %v2218 = vpack.c.b16 %v1738, %v1726
        %v2219 = vpack.c.b16 %v1739, %v1727
        %v2220 = vpack.c.b16 %v1740, %v1728
        %v2221 = vpack.c.b16 %v1753, %v1741
        %v2222 = vpack.c.b16 %v1754, %v1742
        %v2223 = vpack.c.b16 %v1755, %v1743
        %v2224 = vpack.c.b16 %v1756, %v1744
        %v2225 = vpack.c.b16 %v1757, %v1745
        %v2226 = vpack.c.b16 %v1758, %v1746
        %v2227 = vpack.c.b16 %v1759, %v1747
        %v2228 = vpack.c.b16 %v1760, %v1748
        %v2229 = vpack.c.b16 %v1761, %v1749
        %v2230 = vpack.c.b16 %v1762, %v1750
        %v2231 = vpack.c.b16 %v1763, %v1751
        %v2232 = vpack.c.b16 %v1764, %v1752
        %v2233 = vpack.c.b16 %v1777, %v1765
        %v2234 = vpack.c.b16 %v1778, %v1766
        %v2235 = vpack.c.b16 %v1779, %v1767
        %v2236 = vpack.c.b16 %v1780, %v1768
        %v2237 = vpack.c.b16 %v1781, %v1769
        %v2238 = vpack.c.b16 %v1782, %v1770
        %v2239 = vpack.c.b16 %v1783, %v1771
        %v2240 = vpack.c.b16 %v1784, %v1772
        %v2241 = vpack.c.b16 %v1785, %v1773
        %v2242 = vpack.c.b16 %v1786, %v1774
        %v2243 = vpack.c.b16 %v1787, %v1775
        %v2244 = vpack.c.b16 %v1788, %v1776
        %v2245 = vpack.c.b16 %v1801, %v1789
        %v2246 = vpack.c.b16 %v1802, %v1790
        %v2247 = vpack.c.b16 %v1803, %v1791
        %v2248 = vpack.c.b16 %v1804, %v1792
        %v2249 = vpack.c.b16 %v1805, %v1793
        %v2250 = vpack.c.b16 %v1806, %v1794
        %v2251 = vpack.c.b16 %v1807, %v1795
        %v2252 = vpack.c.b16 %v1808, %v1796
        %v2253 = vpack.c.b16 %v1809, %v1797
        %v2254 = vpack.c.b16 %v1810, %v1798
        %v2255 = vpack.c.b16 %v1811, %v1799
        %v2256 = vpack.c.b16 %v1812, %v1800
        %v2257 = vpack.c.b16 %v1825, %v1813
        %v2258 = vpack.c.b16 %v1826, %v1814
        %v2259 = vpack.c.b16 %v1827, %v1815
        %v2260 = vpack.c.b16 %v1828, %v1816
        %v2261 = vpack.c.b16 %v1829, %v1817
        %v2262 = vpack.c.b16 %v1830, %v1818
        %v2263 = vpack.c.b16 %v1831, %v1819
        %v2264 = vpack.c.b16 %v1832, %v1820
        %v2265 = vpack.c.b16 %v1833, %v1821
        %v2266 = vpack.c.b16 %v1834, %v1822
        %v2267 = vpack.c.b16 %v1835, %v1823
        %v2268 = vpack.c.b16 %v1836, %v1824
        %v2269 = vpack.c.b16 %v1849, %v1837
        %v2270 = vpack.c.b16 %v1850, %v1838
        %v2271 = vpack.c.b16 %v1851, %v1839
        %v2272 = vpack.c.b16 %v1852, %v1840
        %v2273 = vpack.c.b16 %v1853, %v1841
        %v2274 = vpack.c.b16 %v1854, %v1842
        %v2275 = vpack.c.b16 %v1855, %v1843
        %v2276 = vpack.c.b16 %v1856, %v1844
        %v2277 = vpack.c.b16 %v1857, %v1845
        %v2278 = vpack.c.b16 %v1858, %v1846
        %v2279 = vpack.c.b16 %v1859, %v1847
        %v2280 = vpack.c.b16 %v1860, %v1848
        %v2281 = vpack.c.b16 %v1873, %v1861
        %v2282 = vpack.c.b16 %v1874, %v1862
        %v2283 = vpack.c.b16 %v1875, %v1863
        %v2284 = vpack.c.b16 %v1876, %v1864
        %v2285 = vpack.c.b16 %v1877, %v1865
        %v2286 = vpack.c.b16 %v1878, %v1866
        %v2287 = vpack.c.b16 %v1879, %v1867
        %v2288 = vpack.c.b16 %v1880, %v1868
        %v2289 = vpack.c.b16 %v1881, %v1869
        %v2290 = vpack.c.b16 %v1882, %v1870
        %v2291 = vpack.c.b16 %v1883, %v1871
        %v2292 = vpack.c.b16 %v1884, %v1872
        %v2293 = vpack.c.b16 %v1897, %v1885
        %v2294 = vpack.c.b16 %v1898, %v1886
        %v2295 = vpack.c.b16 %v1899, %v1887
        %v2296 = vpack.c.b16 %v1900, %v1888
        %v2297 = vpack.c.b16 %v1901, %v1889
        %v2298 = vpack.c.b16 %v1902, %v1890
        %v2299 = vpack.c.b16 %v1903, %v1891
        %v2300 = vpack.c.b16 %v1904, %v1892
        %v2301 = vpack.c.b16 %v1905, %v1893
        %v2302 = vpack.c.b16 %v1906, %v1894
        %v2303 = vpack.c.b16 %v1907, %v1895
        %v2304 = vpack.c.b16 %v1908, %v1896
        %v2305 = vpack.c.b16 %v1921, %v1909
        %v2306 = vpack.c.b16 %v1922, %v1910
        %v2307 = vpack.c.b16 %v1923, %v1911
        %v2308 = vpack.c.b16 %v1924, %v1912
        %v2309 = vpack.c.b16 %v1925, %v1913
        %v2310 = vpack.c.b16 %v1926, %v1914
        %v2311 = vpack.c.b16 %v1927, %v1915
        %v2312 = vpack.c.b16 %v1928, %v1916
        %v2313 = vpack.c.b16 %v1929, %v1917
        %v2314 = vpack.c.b16 %v1930, %v1918
        %v2315 = vpack.c.b16 %v1931, %v1919
        %v2316 = vpack.c.b16 %v1932, %v1920
        %2701 = vmatprep.subr.bf16.mxu0 %v2018
        %2702 = vmatpush1.bf16.msra.mxu0 %v2017
        %2703 = vmatprep.subr.bf16.mxu0 %v2006
        %2704 = vmatpush1.bf16.msra.mxu0 %v2005
        %2705 = vmatprep.subr.bf16.mxu0 %v1994
        %2706 = vmatpush1.bf16.msra.mxu0 %v1993
        %2707 = vmatprep.subr.bf16.mxu0 %v1982
        %2708 = vmatpush1.bf16.msra.mxu0 %v1981
        %2709 = vmatprep.subr.bf16.mxu0 %v1970
        %2710 = vmatpush1.bf16.msra.mxu0 %v1969
        %2711 = vmatprep.subr.bf16.mxu0 %v1958
        %2712 = vmatpush1.bf16.msra.mxu0 %v1957
        %2713 = vmatprep.subr.bf16.mxu0 %v1946
        %2714 = vmatpush1.bf16.msra.mxu0 %v1945
        %2715 = vmatprep.subr.bf16.mxu0 %v1934
        %2716 = vmatpush1.bf16.msra.mxu0 %v1933
        %2717 = vmatprep.subr.bf16.mxu0 %v2114
        %2718 = vmatpush2.bf16.msra.mxu0 %v2113
        %2719 = vmatprep.subr.bf16.mxu0 %v2102
        %2720 = vmatpush2.bf16.msra.mxu0 %v2101
        %2721 = vmatprep.subr.bf16.mxu0 %v2090
        %2722 = vmatpush2.bf16.msra.mxu0 %v2089
        %2723 = vmatprep.subr.bf16.mxu0 %v2078
        %2724 = vmatpush2.bf16.msra.mxu0 %v2077
        %2725 = vmatprep.subr.bf16.mxu0 %v2066
        %2726 = vmatpush2.bf16.msra.mxu0 %v2065
        %2727 = vmatprep.subr.bf16.mxu0 %v2054
        %2728 = vmatpush2.bf16.msra.mxu0 %v2053
        %2729 = vmatprep.subr.bf16.mxu0 %v2042
        %2730 = vmatpush2.bf16.msra.mxu0 %v2041
        %2731 = vmatprep.subr.bf16.mxu0 %v2030
        %2732 = vmatpush2.bf16.msra.mxu0 %v2029
        %2733 = vmatprep.mubr.bf16.mxu0 %v774
        %2734 = vmatmul.mubr.bf16.gmra.mxu0 %v773
        %v2735 = vpop.f32.mrf.mxu0
        %v2736 = vadd.f32 %v710, %v2735
        %v2737 = vpop.f32.mrf.mxu0
        %v2738 = vadd.f32 %v714, %v2737
        %v2739 = vpop.f32.mrf.mxu0
        %v2740 = vpop.f32.mrf.mxu0
        %2741 = vdwg.mxu0
        %2742 = vmatprep.subr.bf16.mxu0 %v2210
        %2743 = vmatpush1.bf16.msra.mxu0 %v2209
        %2744 = vmatprep.subr.bf16.mxu0 %v2198
        %2745 = vmatpush1.bf16.msra.mxu0 %v2197
        %2746 = vmatprep.subr.bf16.mxu0 %v2186
        %2747 = vmatpush1.bf16.msra.mxu0 %v2185
        %2748 = vmatprep.subr.bf16.mxu0 %v2174
        %2749 = vmatpush1.bf16.msra.mxu0 %v2173
        %2750 = vmatprep.subr.bf16.mxu0 %v2162
        %2751 = vmatpush1.bf16.msra.mxu0 %v2161
        %2752 = vmatprep.subr.bf16.mxu0 %v2150
        %2753 = vmatpush1.bf16.msra.mxu0 %v2149
        %2754 = vmatprep.subr.bf16.mxu0 %v2138
        %2755 = vmatpush1.bf16.msra.mxu0 %v2137
        %2756 = vmatprep.subr.bf16.mxu0 %v2126
        %2757 = vmatpush1.bf16.msra.mxu0 %v2125
        %2758 = vmatprep.subr.bf16.mxu0 %v2306
        %2759 = vmatpush2.bf16.msra.mxu0 %v2305
        %2760 = vmatprep.subr.bf16.mxu0 %v2294
        %2761 = vmatpush2.bf16.msra.mxu0 %v2293
        %2762 = vmatprep.subr.bf16.mxu0 %v2282
        %2763 = vmatpush2.bf16.msra.mxu0 %v2281
        %2764 = vmatprep.subr.bf16.mxu0 %v2270
        %2765 = vmatpush2.bf16.msra.mxu0 %v2269
        %2766 = vmatprep.subr.bf16.mxu0 %v2258
        %2767 = vmatpush2.bf16.msra.mxu0 %v2257
        %2768 = vmatprep.subr.bf16.mxu0 %v2246
        %2769 = vmatpush2.bf16.msra.mxu0 %v2245
        %2770 = vmatprep.subr.bf16.mxu0 %v2234
        %2771 = vmatpush2.bf16.msra.mxu0 %v2233
        %2772 = vmatprep.subr.bf16.mxu0 %v2222
        %2773 = vmatpush2.bf16.msra.mxu0 %v2221
        %2774 = vmatprep.mubr.bf16.mxu0 %v776
        %2775 = vmatmul.mubr.bf16.gmra.mxu0 %v775
        %v2776 = vpop.f32.mrf.mxu0
        %v2777 = vadd.f32 %v2736, %v2776
        %v2778 = vpop.f32.mrf.mxu0
        %v2779 = vadd.f32 %v2738, %v2778
        %v2780 = vpop.f32.mrf.mxu0
        %v2781 = vpop.f32.mrf.mxu0
        %2782 = vdwg.mxu0
        %2783 = vmatprep.subr.bf16.mxu0 %v2020
        %2784 = vmatpush1.bf16.msra.mxu0 %v2019
        %2785 = vmatprep.subr.bf16.mxu0 %v2008
        %2786 = vmatpush1.bf16.msra.mxu0 %v2007
        %2787 = vmatprep.subr.bf16.mxu0 %v1996
        %2788 = vmatpush1.bf16.msra.mxu0 %v1995
        %2789 = vmatprep.subr.bf16.mxu0 %v1984
        %2790 = vmatpush1.bf16.msra.mxu0 %v1983
        %2791 = vmatprep.subr.bf16.mxu0 %v1972
        %2792 = vmatpush1.bf16.msra.mxu0 %v1971
        %2793 = vmatprep.subr.bf16.mxu0 %v1960
        %2794 = vmatpush1.bf16.msra.mxu0 %v1959
        %2795 = vmatprep.subr.bf16.mxu0 %v1948
        %2796 = vmatpush1.bf16.msra.mxu0 %v1947
        %2797 = vmatprep.subr.bf16.mxu0 %v1936
        %2798 = vmatpush1.bf16.msra.mxu0 %v1935
        %2799 = vmatprep.subr.bf16.mxu0 %v2116
        %2800 = vmatpush2.bf16.msra.mxu0 %v2115
        %2801 = vmatprep.subr.bf16.mxu0 %v2104
        %2802 = vmatpush2.bf16.msra.mxu0 %v2103
        %2803 = vmatprep.subr.bf16.mxu0 %v2092
        %2804 = vmatpush2.bf16.msra.mxu0 %v2091
        %2805 = vmatprep.subr.bf16.mxu0 %v2080
        %2806 = vmatpush2.bf16.msra.mxu0 %v2079
        %2807 = vmatprep.subr.bf16.mxu0 %v2068
        %2808 = vmatpush2.bf16.msra.mxu0 %v2067
        %2809 = vmatprep.subr.bf16.mxu0 %v2056
        %2810 = vmatpush2.bf16.msra.mxu0 %v2055
        %2811 = vmatprep.subr.bf16.mxu0 %v2044
        %2812 = vmatpush2.bf16.msra.mxu0 %v2043
        %2813 = vmatprep.subr.bf16.mxu0 %v2032
        %2814 = vmatpush2.bf16.msra.mxu0 %v2031
        %2815 = vmatprep.mubr.bf16.mxu0 %v774
        %2816 = vmatmul.mubr.bf16.gmra.mxu0 %v773
        %v2817 = vpop.f32.mrf.mxu0
        %v2818 = vadd.f32 %v718, %v2817
        %v2819 = vpop.f32.mrf.mxu0
        %v2820 = vadd.f32 %v722, %v2819
        %v2821 = vpop.f32.mrf.mxu0
        %v2822 = vpop.f32.mrf.mxu0
        %2823 = vdwg.mxu0
        %2824 = vmatprep.subr.bf16.mxu0 %v2212
        %2825 = vmatpush1.bf16.msra.mxu0 %v2211
        %2826 = vmatprep.subr.bf16.mxu0 %v2200
        %2827 = vmatpush1.bf16.msra.mxu0 %v2199
        %2828 = vmatprep.subr.bf16.mxu0 %v2188
        %2829 = vmatpush1.bf16.msra.mxu0 %v2187
        %2830 = vmatprep.subr.bf16.mxu0 %v2176
        %2831 = vmatpush1.bf16.msra.mxu0 %v2175
        %2832 = vmatprep.subr.bf16.mxu0 %v2164
        %2833 = vmatpush1.bf16.msra.mxu0 %v2163
        %2834 = vmatprep.subr.bf16.mxu0 %v2152
        %2835 = vmatpush1.bf16.msra.mxu0 %v2151
        %2836 = vmatprep.subr.bf16.mxu0 %v2140
        %2837 = vmatpush1.bf16.msra.mxu0 %v2139
        %2838 = vmatprep.subr.bf16.mxu0 %v2128
        %2839 = vmatpush1.bf16.msra.mxu0 %v2127
        %2840 = vmatprep.subr.bf16.mxu0 %v2308
        %2841 = vmatpush2.bf16.msra.mxu0 %v2307
        %2842 = vmatprep.subr.bf16.mxu0 %v2296
        %2843 = vmatpush2.bf16.msra.mxu0 %v2295
        %2844 = vmatprep.subr.bf16.mxu0 %v2284
        %2845 = vmatpush2.bf16.msra.mxu0 %v2283
        %2846 = vmatprep.subr.bf16.mxu0 %v2272
        %2847 = vmatpush2.bf16.msra.mxu0 %v2271
        %2848 = vmatprep.subr.bf16.mxu0 %v2260
        %2849 = vmatpush2.bf16.msra.mxu0 %v2259
        %2850 = vmatprep.subr.bf16.mxu0 %v2248
        %2851 = vmatpush2.bf16.msra.mxu0 %v2247
        %2852 = vmatprep.subr.bf16.mxu0 %v2236
        %2853 = vmatpush2.bf16.msra.mxu0 %v2235
        %2854 = vmatprep.subr.bf16.mxu0 %v2224
        %2855 = vmatpush2.bf16.msra.mxu0 %v2223
        %2856 = vmatprep.mubr.bf16.mxu0 %v776
        %2857 = vmatmul.mubr.bf16.gmra.mxu0 %v775
        %v2858 = vpop.f32.mrf.mxu0
        %v2859 = vadd.f32 %v2818, %v2858
        %v2860 = vpop.f32.mrf.mxu0
        %v2861 = vadd.f32 %v2820, %v2860
        %v2862 = vpop.f32.mrf.mxu0
        %v2863 = vpop.f32.mrf.mxu0
        %2864 = vdwg.mxu0
        %2865 = vmatprep.subr.bf16.mxu0 %v2022
        %2866 = vmatpush1.bf16.msra.mxu0 %v2021
        %2867 = vmatprep.subr.bf16.mxu0 %v2010
        %2868 = vmatpush1.bf16.msra.mxu0 %v2009
        %2869 = vmatprep.subr.bf16.mxu0 %v1998
        %2870 = vmatpush1.bf16.msra.mxu0 %v1997
        %2871 = vmatprep.subr.bf16.mxu0 %v1986
        %2872 = vmatpush1.bf16.msra.mxu0 %v1985
        %2873 = vmatprep.subr.bf16.mxu0 %v1974
        %2874 = vmatpush1.bf16.msra.mxu0 %v1973
        %2875 = vmatprep.subr.bf16.mxu0 %v1962
        %2876 = vmatpush1.bf16.msra.mxu0 %v1961
        %2877 = vmatprep.subr.bf16.mxu0 %v1950
        %2878 = vmatpush1.bf16.msra.mxu0 %v1949
        %2879 = vmatprep.subr.bf16.mxu0 %v1938
        %2880 = vmatpush1.bf16.msra.mxu0 %v1937
        %2881 = vmatprep.subr.bf16.mxu0 %v2118
        %2882 = vmatpush2.bf16.msra.mxu0 %v2117
        %2883 = vmatprep.subr.bf16.mxu0 %v2106
        %2884 = vmatpush2.bf16.msra.mxu0 %v2105
        %2885 = vmatprep.subr.bf16.mxu0 %v2094
        %2886 = vmatpush2.bf16.msra.mxu0 %v2093
        %2887 = vmatprep.subr.bf16.mxu0 %v2082
        %2888 = vmatpush2.bf16.msra.mxu0 %v2081
        %2889 = vmatprep.subr.bf16.mxu0 %v2070
        %2890 = vmatpush2.bf16.msra.mxu0 %v2069
        %2891 = vmatprep.subr.bf16.mxu0 %v2058
        %2892 = vmatpush2.bf16.msra.mxu0 %v2057
        %2893 = vmatprep.subr.bf16.mxu0 %v2046
        %2894 = vmatpush2.bf16.msra.mxu0 %v2045
        %2895 = vmatprep.subr.bf16.mxu0 %v2034
        %2896 = vmatpush2.bf16.msra.mxu0 %v2033
        %2897 = vmatprep.mubr.bf16.mxu0 %v774
        %2898 = vmatmul.mubr.bf16.gmra.mxu0 %v773
        %v2899 = vpop.f32.mrf.mxu0
        %v2900 = vadd.f32 %v726, %v2899
        %v2901 = vpop.f32.mrf.mxu0
        %v2902 = vadd.f32 %v730, %v2901
        %v2903 = vpop.f32.mrf.mxu0
        %v2904 = vpop.f32.mrf.mxu0
        %2905 = vdwg.mxu0
        %2906 = vmatprep.subr.bf16.mxu0 %v2214
        %2907 = vmatpush1.bf16.msra.mxu0 %v2213
        %2908 = vmatprep.subr.bf16.mxu0 %v2202
        %2909 = vmatpush1.bf16.msra.mxu0 %v2201
        %2910 = vmatprep.subr.bf16.mxu0 %v2190
        %2911 = vmatpush1.bf16.msra.mxu0 %v2189
        %2912 = vmatprep.subr.bf16.mxu0 %v2178
        %2913 = vmatpush1.bf16.msra.mxu0 %v2177
        %2914 = vmatprep.subr.bf16.mxu0 %v2166
        %2915 = vmatpush1.bf16.msra.mxu0 %v2165
        %2916 = vmatprep.subr.bf16.mxu0 %v2154
        %2917 = vmatpush1.bf16.msra.mxu0 %v2153
        %2918 = vmatprep.subr.bf16.mxu0 %v2142
        %2919 = vmatpush1.bf16.msra.mxu0 %v2141
        %2920 = vmatprep.subr.bf16.mxu0 %v2130
        %2921 = vmatpush1.bf16.msra.mxu0 %v2129
        %2922 = vmatprep.subr.bf16.mxu0 %v2310
        %2923 = vmatpush2.bf16.msra.mxu0 %v2309
        %2924 = vmatprep.subr.bf16.mxu0 %v2298
        %2925 = vmatpush2.bf16.msra.mxu0 %v2297
        %2926 = vmatprep.subr.bf16.mxu0 %v2286
        %2927 = vmatpush2.bf16.msra.mxu0 %v2285
        %2928 = vmatprep.subr.bf16.mxu0 %v2274
        %2929 = vmatpush2.bf16.msra.mxu0 %v2273
        %2930 = vmatprep.subr.bf16.mxu0 %v2262
        %2931 = vmatpush2.bf16.msra.mxu0 %v2261
        %2932 = vmatprep.subr.bf16.mxu0 %v2250
        %2933 = vmatpush2.bf16.msra.mxu0 %v2249
        %2934 = vmatprep.subr.bf16.mxu0 %v2238
        %2935 = vmatpush2.bf16.msra.mxu0 %v2237
        %2936 = vmatprep.subr.bf16.mxu0 %v2226
        %2937 = vmatpush2.bf16.msra.mxu0 %v2225
        %2938 = vmatprep.mubr.bf16.mxu0 %v776
        %2939 = vmatmul.mubr.bf16.gmra.mxu0 %v775
        %v2940 = vpop.f32.mrf.mxu0
        %v2941 = vadd.f32 %v2900, %v2940
        %v2942 = vpop.f32.mrf.mxu0
        %v2943 = vadd.f32 %v2902, %v2942
        %v2944 = vpop.f32.mrf.mxu0
        %v2945 = vpop.f32.mrf.mxu0
        %2946 = vdwg.mxu0
        %2947 = vmatprep.subr.bf16.mxu0 %v2024
        %2948 = vmatpush1.bf16.msra.mxu0 %v2023
        %2949 = vmatprep.subr.bf16.mxu0 %v2012
        %2950 = vmatpush1.bf16.msra.mxu0 %v2011
        %2951 = vmatprep.subr.bf16.mxu0 %v2000
        %2952 = vmatpush1.bf16.msra.mxu0 %v1999
        %2953 = vmatprep.subr.bf16.mxu0 %v1988
        %2954 = vmatpush1.bf16.msra.mxu0 %v1987
        %2955 = vmatprep.subr.bf16.mxu0 %v1976
        %2956 = vmatpush1.bf16.msra.mxu0 %v1975
        %2957 = vmatprep.subr.bf16.mxu0 %v1964
        %2958 = vmatpush1.bf16.msra.mxu0 %v1963
        %2959 = vmatprep.subr.bf16.mxu0 %v1952
        %2960 = vmatpush1.bf16.msra.mxu0 %v1951
        %2961 = vmatprep.subr.bf16.mxu0 %v1940
        %2962 = vmatpush1.bf16.msra.mxu0 %v1939
        %2963 = vmatprep.subr.bf16.mxu0 %v2120
        %2964 = vmatpush2.bf16.msra.mxu0 %v2119
        %2965 = vmatprep.subr.bf16.mxu0 %v2108
        %2966 = vmatpush2.bf16.msra.mxu0 %v2107
        %2967 = vmatprep.subr.bf16.mxu0 %v2096
        %2968 = vmatpush2.bf16.msra.mxu0 %v2095
        %2969 = vmatprep.subr.bf16.mxu0 %v2084
        %2970 = vmatpush2.bf16.msra.mxu0 %v2083
        %2971 = vmatprep.subr.bf16.mxu0 %v2072
        %2972 = vmatpush2.bf16.msra.mxu0 %v2071
        %2973 = vmatprep.subr.bf16.mxu0 %v2060
        %2974 = vmatpush2.bf16.msra.mxu0 %v2059
        %2975 = vmatprep.subr.bf16.mxu0 %v2048
        %2976 = vmatpush2.bf16.msra.mxu0 %v2047
        %2977 = vmatprep.subr.bf16.mxu0 %v2036
        %2978 = vmatpush2.bf16.msra.mxu0 %v2035
        %2979 = vmatprep.mubr.bf16.mxu0 %v774
        %2980 = vmatmul.mubr.bf16.gmra.mxu0 %v773
        %v2981 = vpop.f32.mrf.mxu0
        %v2982 = vadd.f32 %v734, %v2981
        %v2983 = vpop.f32.mrf.mxu0
        %v2984 = vadd.f32 %v738, %v2983
        %v2985 = vpop.f32.mrf.mxu0
        %v2986 = vpop.f32.mrf.mxu0
        %2987 = vdwg.mxu0
        %2988 = vmatprep.subr.bf16.mxu0 %v2216
        %2989 = vmatpush1.bf16.msra.mxu0 %v2215
        %2990 = vmatprep.subr.bf16.mxu0 %v2204
        %2991 = vmatpush1.bf16.msra.mxu0 %v2203
        %2992 = vmatprep.subr.bf16.mxu0 %v2192
        %2993 = vmatpush1.bf16.msra.mxu0 %v2191
        %2994 = vmatprep.subr.bf16.mxu0 %v2180
        %2995 = vmatpush1.bf16.msra.mxu0 %v2179
        %2996 = vmatprep.subr.bf16.mxu0 %v2168
        %2997 = vmatpush1.bf16.msra.mxu0 %v2167
        %2998 = vmatprep.subr.bf16.mxu0 %v2156
        %2999 = vmatpush1.bf16.msra.mxu0 %v2155
        %3000 = vmatprep.subr.bf16.mxu0 %v2144
        %3001 = vmatpush1.bf16.msra.mxu0 %v2143
        %3002 = vmatprep.subr.bf16.mxu0 %v2132
        %3003 = vmatpush1.bf16.msra.mxu0 %v2131
        %3004 = vmatprep.subr.bf16.mxu0 %v2312
        %3005 = vmatpush2.bf16.msra.mxu0 %v2311
        %3006 = vmatprep.subr.bf16.mxu0 %v2300
        %3007 = vmatpush2.bf16.msra.mxu0 %v2299
        %3008 = vmatprep.subr.bf16.mxu0 %v2288
        %3009 = vmatpush2.bf16.msra.mxu0 %v2287
        %3010 = vmatprep.subr.bf16.mxu0 %v2276
        %3011 = vmatpush2.bf16.msra.mxu0 %v2275
        %3012 = vmatprep.subr.bf16.mxu0 %v2264
        %3013 = vmatpush2.bf16.msra.mxu0 %v2263
        %3014 = vmatprep.subr.bf16.mxu0 %v2252
        %3015 = vmatpush2.bf16.msra.mxu0 %v2251
        %3016 = vmatprep.subr.bf16.mxu0 %v2240
        %3017 = vmatpush2.bf16.msra.mxu0 %v2239
        %3018 = vmatprep.subr.bf16.mxu0 %v2228
        %3019 = vmatpush2.bf16.msra.mxu0 %v2227
        %3020 = vmatprep.mubr.bf16.mxu0 %v776
        %3021 = vmatmul.mubr.bf16.gmra.mxu0 %v775
        %v3022 = vpop.f32.mrf.mxu0
        %v3023 = vadd.f32 %v2982, %v3022
        %v3024 = vpop.f32.mrf.mxu0
        %v3025 = vadd.f32 %v2984, %v3024
        %v3026 = vpop.f32.mrf.mxu0
        %v3027 = vpop.f32.mrf.mxu0
        %3028 = vdwg.mxu0
        %3029 = vmatprep.subr.bf16.mxu0 %v2026
        %3030 = vmatpush1.bf16.msra.mxu0 %v2025
        %3031 = vmatprep.subr.bf16.mxu0 %v2014
        %3032 = vmatpush1.bf16.msra.mxu0 %v2013
        %3033 = vmatprep.subr.bf16.mxu0 %v2002
        %3034 = vmatpush1.bf16.msra.mxu0 %v2001
        %3035 = vmatprep.subr.bf16.mxu0 %v1990
        %3036 = vmatpush1.bf16.msra.mxu0 %v1989
        %3037 = vmatprep.subr.bf16.mxu0 %v1978
        %3038 = vmatpush1.bf16.msra.mxu0 %v1977
        %3039 = vmatprep.subr.bf16.mxu0 %v1966
        %3040 = vmatpush1.bf16.msra.mxu0 %v1965
        %3041 = vmatprep.subr.bf16.mxu0 %v1954
        %3042 = vmatpush1.bf16.msra.mxu0 %v1953
        %3043 = vmatprep.subr.bf16.mxu0 %v1942
        %3044 = vmatpush1.bf16.msra.mxu0 %v1941
        %3045 = vmatprep.subr.bf16.mxu0 %v2122
        %3046 = vmatpush2.bf16.msra.mxu0 %v2121
        %3047 = vmatprep.subr.bf16.mxu0 %v2110
        %3048 = vmatpush2.bf16.msra.mxu0 %v2109
        %3049 = vmatprep.subr.bf16.mxu0 %v2098
        %3050 = vmatpush2.bf16.msra.mxu0 %v2097
        %3051 = vmatprep.subr.bf16.mxu0 %v2086
        %3052 = vmatpush2.bf16.msra.mxu0 %v2085
        %3053 = vmatprep.subr.bf16.mxu0 %v2074
        %3054 = vmatpush2.bf16.msra.mxu0 %v2073
        %3055 = vmatprep.subr.bf16.mxu0 %v2062
        %3056 = vmatpush2.bf16.msra.mxu0 %v2061
        %3057 = vmatprep.subr.bf16.mxu0 %v2050
        %3058 = vmatpush2.bf16.msra.mxu0 %v2049
        %3059 = vmatprep.subr.bf16.mxu0 %v2038
        %3060 = vmatpush2.bf16.msra.mxu0 %v2037
        %3061 = vmatprep.mubr.bf16.mxu0 %v774
        %3062 = vmatmul.mubr.bf16.gmra.mxu0 %v773
        %v3063 = vpop.f32.mrf.mxu0
        %v3064 = vadd.f32 %v742, %v3063
        %v3065 = vpop.f32.mrf.mxu0
        %v3066 = vadd.f32 %v746, %v3065
        %v3067 = vpop.f32.mrf.mxu0
        %v3068 = vpop.f32.mrf.mxu0
        %3069 = vdwg.mxu0
        %3070 = vmatprep.subr.bf16.mxu0 %v2218
        %3071 = vmatpush1.bf16.msra.mxu0 %v2217
        %3072 = vmatprep.subr.bf16.mxu0 %v2206
        %3073 = vmatpush1.bf16.msra.mxu0 %v2205
        %3074 = vmatprep.subr.bf16.mxu0 %v2194
        %3075 = vmatpush1.bf16.msra.mxu0 %v2193
        %3076 = vmatprep.subr.bf16.mxu0 %v2182
        %3077 = vmatpush1.bf16.msra.mxu0 %v2181
        %3078 = vmatprep.subr.bf16.mxu0 %v2170
        %3079 = vmatpush1.bf16.msra.mxu0 %v2169
        %3080 = vmatprep.subr.bf16.mxu0 %v2158
        %3081 = vmatpush1.bf16.msra.mxu0 %v2157
        %3082 = vmatprep.subr.bf16.mxu0 %v2146
        %3083 = vmatpush1.bf16.msra.mxu0 %v2145
        %3084 = vmatprep.subr.bf16.mxu0 %v2134
        %3085 = vmatpush1.bf16.msra.mxu0 %v2133
        %3086 = vmatprep.subr.bf16.mxu0 %v2314
        %3087 = vmatpush2.bf16.msra.mxu0 %v2313
        %3088 = vmatprep.subr.bf16.mxu0 %v2302
        %3089 = vmatpush2.bf16.msra.mxu0 %v2301
        %3090 = vmatprep.subr.bf16.mxu0 %v2290
        %3091 = vmatpush2.bf16.msra.mxu0 %v2289
        %3092 = vmatprep.subr.bf16.mxu0 %v2278
        %3093 = vmatpush2.bf16.msra.mxu0 %v2277
        %3094 = vmatprep.subr.bf16.mxu0 %v2266
        %3095 = vmatpush2.bf16.msra.mxu0 %v2265
        %3096 = vmatprep.subr.bf16.mxu0 %v2254
        %3097 = vmatpush2.bf16.msra.mxu0 %v2253
        %3098 = vmatprep.subr.bf16.mxu0 %v2242
        %3099 = vmatpush2.bf16.msra.mxu0 %v2241
        %3100 = vmatprep.subr.bf16.mxu0 %v2230
        %3101 = vmatpush2.bf16.msra.mxu0 %v2229
        %3102 = vmatprep.mubr.bf16.mxu0 %v776
        %3103 = vmatmul.mubr.bf16.gmra.mxu0 %v775
        %v3104 = vpop.f32.mrf.mxu0
        %v3105 = vadd.f32 %v3064, %v3104
        %v3106 = vpop.f32.mrf.mxu0
        %v3107 = vadd.f32 %v3066, %v3106
        %v3108 = vpop.f32.mrf.mxu0
        %v3109 = vpop.f32.mrf.mxu0
        %3110 = vdwg.mxu0
        %3111 = vmatprep.subr.bf16.mxu0 %v2028
        %3112 = vmatpush1.bf16.msra.mxu0 %v2027
        %3113 = vmatprep.subr.bf16.mxu0 %v2016
        %3114 = vmatpush1.bf16.msra.mxu0 %v2015
        %3115 = vmatprep.subr.bf16.mxu0 %v2004
        %3116 = vmatpush1.bf16.msra.mxu0 %v2003
        %3117 = vmatprep.subr.bf16.mxu0 %v1992
        %3118 = vmatpush1.bf16.msra.mxu0 %v1991
        %3119 = vmatprep.subr.bf16.mxu0 %v1980
        %3120 = vmatpush1.bf16.msra.mxu0 %v1979
        %3121 = vmatprep.subr.bf16.mxu0 %v1968
        %3122 = vmatpush1.bf16.msra.mxu0 %v1967
        %3123 = vmatprep.subr.bf16.mxu0 %v1956
        %3124 = vmatpush1.bf16.msra.mxu0 %v1955
        %3125 = vmatprep.subr.bf16.mxu0 %v1944
        %3126 = vmatpush1.bf16.msra.mxu0 %v1943
        %3127 = vmatprep.subr.bf16.mxu0 %v2124
        %3128 = vmatpush2.bf16.msra.mxu0 %v2123
        %3129 = vmatprep.subr.bf16.mxu0 %v2112
        %3130 = vmatpush2.bf16.msra.mxu0 %v2111
        %3131 = vmatprep.subr.bf16.mxu0 %v2100
        %3132 = vmatpush2.bf16.msra.mxu0 %v2099
        %3133 = vmatprep.subr.bf16.mxu0 %v2088
        %3134 = vmatpush2.bf16.msra.mxu0 %v2087
        %3135 = vmatprep.subr.bf16.mxu0 %v2076
        %3136 = vmatpush2.bf16.msra.mxu0 %v2075
        %3137 = vmatprep.subr.bf16.mxu0 %v2064
        %3138 = vmatpush2.bf16.msra.mxu0 %v2063
        %3139 = vmatprep.subr.bf16.mxu0 %v2052
        %3140 = vmatpush2.bf16.msra.mxu0 %v2051
        %3141 = vmatprep.subr.bf16.mxu0 %v2040
        %3142 = vmatpush2.bf16.msra.mxu0 %v2039
        %3143 = vmatprep.mubr.bf16.mxu0 %v774
        %3144 = vmatmul.mubr.bf16.gmra.mxu0 %v773
        %v3145 = vpop.f32.mrf.mxu0
        %v3146 = vadd.f32 %v750, %v3145
        %v3147 = vpop.f32.mrf.mxu0
        %v3148 = vadd.f32 %v754, %v3147
        %v3149 = vpop.f32.mrf.mxu0
        %v3150 = vpop.f32.mrf.mxu0
        %3151 = vdwg.mxu0
        %3152 = vmatprep.subr.bf16.mxu0 %v2220
        %3153 = vmatpush1.bf16.msra.mxu0 %v2219
        %3154 = vmatprep.subr.bf16.mxu0 %v2208
        %3155 = vmatpush1.bf16.msra.mxu0 %v2207
        %3156 = vmatprep.subr.bf16.mxu0 %v2196
        %3157 = vmatpush1.bf16.msra.mxu0 %v2195
        %3158 = vmatprep.subr.bf16.mxu0 %v2184
        %3159 = vmatpush1.bf16.msra.mxu0 %v2183
        %3160 = vmatprep.subr.bf16.mxu0 %v2172
        %3161 = vmatpush1.bf16.msra.mxu0 %v2171
        %3162 = vmatprep.subr.bf16.mxu0 %v2160
        %3163 = vmatpush1.bf16.msra.mxu0 %v2159
        %3164 = vmatprep.subr.bf16.mxu0 %v2148
        %3165 = vmatpush1.bf16.msra.mxu0 %v2147
        %3166 = vmatprep.subr.bf16.mxu0 %v2136
        %3167 = vmatpush1.bf16.msra.mxu0 %v2135
        %3168 = vmatprep.subr.bf16.mxu0 %v2316
        %3169 = vmatpush2.bf16.msra.mxu0 %v2315
        %3170 = vmatprep.subr.bf16.mxu0 %v2304
        %3171 = vmatpush2.bf16.msra.mxu0 %v2303
        %3172 = vmatprep.subr.bf16.mxu0 %v2292
        %3173 = vmatpush2.bf16.msra.mxu0 %v2291
        %3174 = vmatprep.subr.bf16.mxu0 %v2280
        %3175 = vmatpush2.bf16.msra.mxu0 %v2279
        %3176 = vmatprep.subr.bf16.mxu0 %v2268
        %3177 = vmatpush2.bf16.msra.mxu0 %v2267
        %3178 = vmatprep.subr.bf16.mxu0 %v2256
        %3179 = vmatpush2.bf16.msra.mxu0 %v2255
        %3180 = vmatprep.subr.bf16.mxu0 %v2244
        %3181 = vmatpush2.bf16.msra.mxu0 %v2243
        %3182 = vmatprep.subr.bf16.mxu0 %v2232
        %3183 = vmatpush2.bf16.msra.mxu0 %v2231
        %3184 = vmatprep.mubr.bf16.mxu0 %v776
        %3185 = vmatmul.mubr.bf16.gmra.mxu0 %v775
        %v3186 = vpop.f32.mrf.mxu0
        %v3187 = vadd.f32 %v3146, %v3186
        %v3188 = vpop.f32.mrf.mxu0
        %v3189 = vadd.f32 %v3148, %v3188
        %v3190 = vpop.f32.mrf.mxu0
        %v3191 = vpop.f32.mrf.mxu0
        %3192 = vdwg.mxu0
        %v3193 = vpack.c.bf16 %v2777, %v2777
        %v3194 = vpack.c.bf16 %v2779, %v2779
        %v3195 = vpack.c.bf16 %v2859, %v2859
        %v3196 = vpack.c.bf16 %v2861, %v2861
        %v3197 = vpack.c.bf16 %v2941, %v2941
        %v3198 = vpack.c.bf16 %v2943, %v2943
        %v3199 = vpack.c.bf16 %v3023, %v3023
        %v3200 = vpack.c.bf16 %v3025, %v3025
        %v3201 = vpack.c.bf16 %v3105, %v3105
        %v3202 = vpack.c.bf16 %v3107, %v3107
        %v3203 = vpack.c.bf16 %v3187, %v3187
        %v3204 = vpack.c.bf16 %v3189, %v3189
        %v3205 = vld [vmem:[%s279] sm:$0xff]
        %vm3206 = vcmask 523264
        %v3208 = vsel %vm3206, %v3193, 0
        %v3211 = vsel %vm3206, %v3197, 0
        %3213 = vmatprep.subr.bf16.mxu0 0
        %3214 = vmatpush1.bf16.xpose.msra.mxu0 0
        %3215 = vmatprep.subr.bf16.mxu0 0
        %3216 = vmatpush1.bf16.xpose.msra.mxu0 0
        %3217 = vmatprep.subr.bf16.mxu0 0
        %3218 = vmatpush1.bf16.xpose.msra.mxu0 0
        %3219 = vmatprep.subr.bf16.mxu0 0
        %3220 = vmatpush1.bf16.xpose.msra.mxu0 0
        %3221 = vmatprep.subr.bf16.mxu0 0
        %3222 = vmatpush1.bf16.xpose.msra.mxu0 0
        %3223 = vmatprep.subr.bf16.mxu0 0
        %3224 = vmatpush1.bf16.xpose.msra.mxu0 0
        %3225 = vmatprep.subr.bf16.mxu0 0
        %3226 = vmatpush1.bf16.xpose.msra.mxu0 0
        %3227 = vmatprep.subr.bf16.mxu0 0
        %3228 = vmatpush1.bf16.xpose.msra.mxu0 %v3211
        %3229 = vmatprep.subr.bf16.mxu0 0
        %3230 = vmatpush2.bf16.xpose.msra.mxu0 0
        %3231 = vmatprep.subr.bf16.mxu0 0
        %3232 = vmatpush2.bf16.xpose.msra.mxu0 0
        %3233 = vmatprep.subr.bf16.mxu0 0
        %3234 = vmatpush2.bf16.xpose.msra.mxu0 0
        %3235 = vmatprep.subr.bf16.mxu0 0
        %3236 = vmatpush2.bf16.xpose.msra.mxu0 0
        %3237 = vmatprep.subr.bf16.mxu0 0
        %3238 = vmatpush2.bf16.xpose.msra.mxu0 0
        %3239 = vmatprep.subr.bf16.mxu0 0
        %3240 = vmatpush2.bf16.xpose.msra.mxu0 0
        %3241 = vmatprep.subr.bf16.mxu0 0
        %3242 = vmatpush2.bf16.xpose.msra.mxu0 0
        %3243 = vmatprep.subr.bf16.mxu0 0
        %3244 = vmatpush2.bf16.xpose.msra.mxu0 0
        %3245 = vmatprep.mubr.bf16.mxu0 0
        %3246 = vmatmul.mubr.bf16.gmra.mxu0 %v3208
        %v3247 = vpop.f32.mrf.mxu0
        %v3248 = vadd.f32 %v3205, %v3247
        %v3249 = vpop.f32.mrf.mxu0
        %v3250 = vpop.f32.mrf.mxu0
        %v3251 = vpop.f32.mrf.mxu0
        %3252 = vdwg.mxu0
        %vm3253 = vcmask 64512
        %v3254 = vsel %vm3253, %v3248, -inf
        %3255 = vmax.xlane.f32.xlu0 %v3254
        %v3256 = vpop.xlane.xlu0 %3255
        %v3257 = vsub.f32 %v3248, %v3256
        %v3258 = vmul.f32 %v3257, 1.442695
        %v3259 = vpow.pop %v3258
        %v3260 = vsel %vm3253, %v3259, 0.0
        %3261 = vadd.xlane.f32.xlu0 %v3260
        %v3262 = vpop.xlane.xlu0 %3261
        %v3263 = vrcp.pop %v3262
        %v3264 = vmul.f32 %v3259, %v3263
        %3265 = vst.msk [vmem:[%s315] sm:$0xff] %vm3253, %v3264
        %v3266 = vpack.c.bf16 %v3264, %v3264
        %v3268 = vsel %vm3253, %v3266, 0
        %vm3270 = vcmask 1043456
        %v3272 = vsel %vm3270, %v3201, 0
        %3274 = vmatprep.subr.bf16.mxu0 0
        %3275 = vmatpush1.bf16.msra.mxu0 0
        %3276 = vmatprep.subr.bf16.mxu0 0
        %3277 = vmatpush1.bf16.msra.mxu0 0
        %3278 = vmatprep.subr.bf16.mxu0 0
        %3279 = vmatpush1.bf16.msra.mxu0 0
        %3280 = vmatprep.subr.bf16.mxu0 0
        %3281 = vmatpush1.bf16.msra.mxu0 0
        %3282 = vmatprep.subr.bf16.mxu0 0
        %3283 = vmatpush1.bf16.msra.mxu0 0
        %3284 = vmatprep.subr.bf16.mxu0 0
        %3285 = vmatpush1.bf16.msra.mxu0 0
        %3286 = vmatprep.subr.bf16.mxu0 0
        %3287 = vmatpush1.bf16.msra.mxu0 0
        %3288 = vmatprep.subr.bf16.mxu0 0
        %3289 = vmatpush1.bf16.msra.mxu0 %v3272
        %3290 = vmatprep.subr.bf16.mxu0 0
        %3291 = vmatpush2.bf16.msra.mxu0 0
        %3292 = vmatprep.subr.bf16.mxu0 0
        %3293 = vmatpush2.bf16.msra.mxu0 0
        %3294 = vmatprep.subr.bf16.mxu0 0
        %3295 = vmatpush2.bf16.msra.mxu0 0
        %3296 = vmatprep.subr.bf16.mxu0 0
        %3297 = vmatpush2.bf16.msra.mxu0 0
        %3298 = vmatprep.subr.bf16.mxu0 0
        %3299 = vmatpush2.bf16.msra.mxu0 0
        %3300 = vmatprep.subr.bf16.mxu0 0
        %3301 = vmatpush2.bf16.msra.mxu0 0
        %3302 = vmatprep.subr.bf16.mxu0 0
        %3303 = vmatpush2.bf16.msra.mxu0 0
        %3304 = vmatprep.subr.bf16.mxu0 0
        %3305 = vmatpush2.bf16.msra.mxu0 0
        %3306 = vmatprep.mubr.bf16.mxu0 0
        %3307 = vmatmul.mubr.bf16.gmra.mxu0 %v3268
        %v3308 = vpop.f32.mrf.mxu0
        %v3309 = vadd.f32 0.0, %v3308
        %v3310 = vpop.f32.mrf.mxu0
        %v3311 = vpop.f32.mrf.mxu0
        %v3312 = vpop.f32.mrf.mxu0
        %3313 = vdwg.mxu0
        %3314 = vst.msk [vmem:[%s308] sm:$0xff] %vm3206, %v3309
        %3316 = vrot.lane.b32.xlu0 %v3193, 64
        %v3317 = vpop.permute.xlu0 %3316
        %3319 = vrot.lane.b32.xlu0 %v3197, 64
        %v3320 = vpop.permute.xlu0 %3319
        %v3322 = vsel %vm3206, %v3317, 0
        %v3325 = vsel %vm3206, %v3320, 0
        %3327 = vmatprep.subr.bf16.mxu0 0
        %3328 = vmatpush1.bf16.xpose.msra.mxu0 0
        %3329 = vmatprep.subr.bf16.mxu0 0
        %3330 = vmatpush1.bf16.xpose.msra.mxu0 0
        %3331 = vmatprep.subr.bf16.mxu0 0
        %3332 = vmatpush1.bf16.xpose.msra.mxu0 0
        %3333 = vmatprep.subr.bf16.mxu0 0
        %3334 = vmatpush1.bf16.xpose.msra.mxu0 0
        %3335 = vmatprep.subr.bf16.mxu0 0
        %3336 = vmatpush1.bf16.xpose.msra.mxu0 0
        %3337 = vmatprep.subr.bf16.mxu0 0
        %3338 = vmatpush1.bf16.xpose.msra.mxu0 0
        %3339 = vmatprep.subr.bf16.mxu0 0
        %3340 = vmatpush1.bf16.xpose.msra.mxu0 0
        %3341 = vmatprep.subr.bf16.mxu0 0
        %3342 = vmatpush1.bf16.xpose.msra.mxu0 %v3325
        %3343 = vmatprep.subr.bf16.mxu0 0
        %3344 = vmatpush2.bf16.xpose.msra.mxu0 0
        %3345 = vmatprep.subr.bf16.mxu0 0
        %3346 = vmatpush2.bf16.xpose.msra.mxu0 0
        %3347 = vmatprep.subr.bf16.mxu0 0
        %3348 = vmatpush2.bf16.xpose.msra.mxu0 0
        %3349 = vmatprep.subr.bf16.mxu0 0
        %3350 = vmatpush2.bf16.xpose.msra.mxu0 0
        %3351 = vmatprep.subr.bf16.mxu0 0
        %3352 = vmatpush2.bf16.xpose.msra.mxu0 0
        %3353 = vmatprep.subr.bf16.mxu0 0
        %3354 = vmatpush2.bf16.xpose.msra.mxu0 0
        %3355 = vmatprep.subr.bf16.mxu0 0
        %3356 = vmatpush2.bf16.xpose.msra.mxu0 0
        %3357 = vmatprep.subr.bf16.mxu0 0
        %3358 = vmatpush2.bf16.xpose.msra.mxu0 0
        %3359 = vmatprep.mubr.bf16.mxu0 0
        %3360 = vmatmul.mubr.bf16.gmra.mxu0 %v3322
        %v3361 = vpop.f32.mrf.mxu0
        %v3362 = vadd.f32 %v3205, %v3361
        %v3363 = vpop.f32.mrf.mxu0
        %v3364 = vpop.f32.mrf.mxu0
        %v3365 = vpop.f32.mrf.mxu0
        %3366 = vdwg.mxu0
        %v3367 = vsel %vm3253, %v3362, -inf
        %3368 = vmax.xlane.f32.xlu0 %v3367
        %v3369 = vpop.xlane.xlu0 %3368
        %v3370 = vsub.f32 %v3362, %v3369
        %v3371 = vmul.f32 %v3370, 1.442695
        %v3372 = vpow.pop %v3371
        %v3373 = vsel %vm3253, %v3372, 0.0
        %3374 = vadd.xlane.f32.xlu0 %v3373
        %v3375 = vpop.xlane.xlu0 %3374
        %v3376 = vrcp.pop %v3375
        %v3377 = vmul.f32 %v3372, %v3376
        %s3378 = scalar_lea.vmem %s315, 8 [#allocation11]
        %3379 = vst.msk [vmem:[%s3378] sm:$0xff] %vm3253, %v3377
        %v3380 = vpack.c.bf16 %v3377, %v3377
        %3382 = vrot.lane.b32.xlu0 %v3201, 64
        %v3383 = vpop.permute.xlu0 %3382
        %v3385 = vsel %vm3253, %v3380, 0
        %v3388 = vsel %vm3270, %v3383, 0
        %3390 = vmatprep.subr.bf16.mxu0 0
        %3391 = vmatpush1.bf16.msra.mxu0 0
        %3392 = vmatprep.subr.bf16.mxu0 0
        %3393 = vmatpush1.bf16.msra.mxu0 0
        %3394 = vmatprep.subr.bf16.mxu0 0
        %3395 = vmatpush1.bf16.msra.mxu0 0
        %3396 = vmatprep.subr.bf16.mxu0 0
        %3397 = vmatpush1.bf16.msra.mxu0 0
        %3398 = vmatprep.subr.bf16.mxu0 0
        %3399 = vmatpush1.bf16.msra.mxu0 0
        %3400 = vmatprep.subr.bf16.mxu0 0
        %3401 = vmatpush1.bf16.msra.mxu0 0
        %3402 = vmatprep.subr.bf16.mxu0 0
        %3403 = vmatpush1.bf16.msra.mxu0 0
        %3404 = vmatprep.subr.bf16.mxu0 0
        %3405 = vmatpush1.bf16.msra.mxu0 %v3388
        %3406 = vmatprep.subr.bf16.mxu0 0
        %3407 = vmatpush2.bf16.msra.mxu0 0
        %3408 = vmatprep.subr.bf16.mxu0 0
        %3409 = vmatpush2.bf16.msra.mxu0 0
        %3410 = vmatprep.subr.bf16.mxu0 0
        %3411 = vmatpush2.bf16.msra.mxu0 0
        %3412 = vmatprep.subr.bf16.mxu0 0
        %3413 = vmatpush2.bf16.msra.mxu0 0
        %3414 = vmatprep.subr.bf16.mxu0 0
        %3415 = vmatpush2.bf16.msra.mxu0 0
        %3416 = vmatprep.subr.bf16.mxu0 0
        %3417 = vmatpush2.bf16.msra.mxu0 0
        %3418 = vmatprep.subr.bf16.mxu0 0
        %3419 = vmatpush2.bf16.msra.mxu0 0
        %3420 = vmatprep.subr.bf16.mxu0 0
        %3421 = vmatpush2.bf16.msra.mxu0 0
        %3422 = vmatprep.mubr.bf16.mxu0 0
        %3423 = vmatmul.mubr.bf16.gmra.mxu0 %v3385
        %v3424 = vpop.f32.mrf.mxu0
        %v3425 = vadd.f32 0.0, %v3424
        %v3426 = vpop.f32.mrf.mxu0
        %v3427 = vpop.f32.mrf.mxu0
        %v3428 = vpop.f32.mrf.mxu0
        %3429 = vdwg.mxu0
        %s3430 = scalar_lea.vmem %s308, 8 [#allocation10]
        %3431 = vst.msk [vmem:[%s3430] sm:$0xff] %vm3206, %v3425
        %v3433 = vsel %vm3206, %v3194, 0
        %v3436 = vsel %vm3206, %v3198, 0
        %3438 = vmatprep.subr.bf16.mxu0 0
        %3439 = vmatpush1.bf16.xpose.msra.mxu0 0
        %3440 = vmatprep.subr.bf16.mxu0 0
        %3441 = vmatpush1.bf16.xpose.msra.mxu0 0
        %3442 = vmatprep.subr.bf16.mxu0 0
        %3443 = vmatpush1.bf16.xpose.msra.mxu0 0
        %3444 = vmatprep.subr.bf16.mxu0 0
        %3445 = vmatpush1.bf16.xpose.msra.mxu0 0
        %3446 = vmatprep.subr.bf16.mxu0 0
        %3447 = vmatpush1.bf16.xpose.msra.mxu0 0
        %3448 = vmatprep.subr.bf16.mxu0 0
        %3449 = vmatpush1.bf16.xpose.msra.mxu0 0
        %3450 = vmatprep.subr.bf16.mxu0 0
        %3451 = vmatpush1.bf16.xpose.msra.mxu0 0
        %3452 = vmatprep.subr.bf16.mxu0 0
        %3453 = vmatpush1.bf16.xpose.msra.mxu0 %v3436
        %3454 = vmatprep.subr.bf16.mxu0 0
        %3455 = vmatpush2.bf16.xpose.msra.mxu0 0
        %3456 = vmatprep.subr.bf16.mxu0 0
        %3457 = vmatpush2.bf16.xpose.msra.mxu0 0
        %3458 = vmatprep.subr.bf16.mxu0 0
        %3459 = vmatpush2.bf16.xpose.msra.mxu0 0
        %3460 = vmatprep.subr.bf16.mxu0 0
        %3461 = vmatpush2.bf16.xpose.msra.mxu0 0
        %3462 = vmatprep.subr.bf16.mxu0 0
        %3463 = vmatpush2.bf16.xpose.msra.mxu0 0
        %3464 = vmatprep.subr.bf16.mxu0 0
        %3465 = vmatpush2.bf16.xpose.msra.mxu0 0
        %3466 = vmatprep.subr.bf16.mxu0 0
        %3467 = vmatpush2.bf16.xpose.msra.mxu0 0
        %3468 = vmatprep.subr.bf16.mxu0 0
        %3469 = vmatpush2.bf16.xpose.msra.mxu0 0
        %3470 = vmatprep.mubr.bf16.mxu0 0
        %3471 = vmatmul.mubr.bf16.gmra.mxu0 %v3433
        %v3472 = vpop.f32.mrf.mxu0
        %v3473 = vadd.f32 %v3205, %v3472
        %v3474 = vpop.f32.mrf.mxu0
        %v3475 = vpop.f32.mrf.mxu0
        %v3476 = vpop.f32.mrf.mxu0
        %3477 = vdwg.mxu0
        %v3478 = vsel %vm3253, %v3473, -inf
        %3479 = vmax.xlane.f32.xlu0 %v3478
        %v3480 = vpop.xlane.xlu0 %3479
        %v3481 = vsub.f32 %v3473, %v3480
        %v3482 = vmul.f32 %v3481, 1.442695
        %v3483 = vpow.pop %v3482
        %v3484 = vsel %vm3253, %v3483, 0.0
        %3485 = vadd.xlane.f32.xlu0 %v3484
        %v3486 = vpop.xlane.xlu0 %3485
        %v3487 = vrcp.pop %v3486
        %v3488 = vmul.f32 %v3483, %v3487
        %s3489 = scalar_lea.vmem %s315, 16 [#allocation11]
        %3490 = vst.msk [vmem:[%s3489] sm:$0xff] %vm3253, %v3488
        %v3491 = vpack.c.bf16 %v3488, %v3488
        %v3493 = vsel %vm3253, %v3491, 0
        %v3496 = vsel %vm3270, %v3202, 0
        %3498 = vmatprep.subr.bf16.mxu0 0
        %3499 = vmatpush1.bf16.msra.mxu0 0
        %3500 = vmatprep.subr.bf16.mxu0 0
        %3501 = vmatpush1.bf16.msra.mxu0 0
        %3502 = vmatprep.subr.bf16.mxu0 0
        %3503 = vmatpush1.bf16.msra.mxu0 0
        %3504 = vmatprep.subr.bf16.mxu0 0
        %3505 = vmatpush1.bf16.msra.mxu0 0
        %3506 = vmatprep.subr.bf16.mxu0 0
        %3507 = vmatpush1.bf16.msra.mxu0 0
        %3508 = vmatprep.subr.bf16.mxu0 0
        %3509 = vmatpush1.bf16.msra.mxu0 0
        %3510 = vmatprep.subr.bf16.mxu0 0
        %3511 = vmatpush1.bf16.msra.mxu0 0
        %3512 = vmatprep.subr.bf16.mxu0 0
        %3513 = vmatpush1.bf16.msra.mxu0 %v3496
        %3514 = vmatprep.subr.bf16.mxu0 0
        %3515 = vmatpush2.bf16.msra.mxu0 0
        %3516 = vmatprep.subr.bf16.mxu0 0
        %3517 = vmatpush2.bf16.msra.mxu0 0
        %3518 = vmatprep.subr.bf16.mxu0 0
        %3519 = vmatpush2.bf16.msra.mxu0 0
        %3520 = vmatprep.subr.bf16.mxu0 0
        %3521 = vmatpush2.bf16.msra.mxu0 0
        %3522 = vmatprep.subr.bf16.mxu0 0
        %3523 = vmatpush2.bf16.msra.mxu0 0
        %3524 = vmatprep.subr.bf16.mxu0 0
        %3525 = vmatpush2.bf16.msra.mxu0 0
        %3526 = vmatprep.subr.bf16.mxu0 0
        %3527 = vmatpush2.bf16.msra.mxu0 0
        %3528 = vmatprep.subr.bf16.mxu0 0
        %3529 = vmatpush2.bf16.msra.mxu0 0
        %3530 = vmatprep.mubr.bf16.mxu0 0
        %3531 = vmatmul.mubr.bf16.gmra.mxu0 %v3493
        %v3532 = vpop.f32.mrf.mxu0
        %v3533 = vadd.f32 0.0, %v3532
        %v3534 = vpop.f32.mrf.mxu0
        %v3535 = vpop.f32.mrf.mxu0
        %v3536 = vpop.f32.mrf.mxu0
        %3537 = vdwg.mxu0
        %s3538 = scalar_lea.vmem %s308, 16 [#allocation10]
        %3539 = vst.msk [vmem:[%s3538] sm:$0xff] %vm3206, %v3533
        %3541 = vrot.lane.b32.xlu0 %v3194, 64
        %v3542 = vpop.permute.xlu0 %3541
        %3544 = vrot.lane.b32.xlu0 %v3198, 64
        %v3545 = vpop.permute.xlu0 %3544
        %v3547 = vsel %vm3206, %v3542, 0
        %v3550 = vsel %vm3206, %v3545, 0
        %3552 = vmatprep.subr.bf16.mxu0 0
        %3553 = vmatpush1.bf16.xpose.msra.mxu0 0
        %3554 = vmatprep.subr.bf16.mxu0 0
        %3555 = vmatpush1.bf16.xpose.msra.mxu0 0
        %3556 = vmatprep.subr.bf16.mxu0 0
        %3557 = vmatpush1.bf16.xpose.msra.mxu0 0
        %3558 = vmatprep.subr.bf16.mxu0 0
        %3559 = vmatpush1.bf16.xpose.msra.mxu0 0
        %3560 = vmatprep.subr.bf16.mxu0 0
        %3561 = vmatpush1.bf16.xpose.msra.mxu0 0
        %3562 = vmatprep.subr.bf16.mxu0 0
        %3563 = vmatpush1.bf16.xpose.msra.mxu0 0
        %3564 = vmatprep.subr.bf16.mxu0 0
        %3565 = vmatpush1.bf16.xpose.msra.mxu0 0
        %3566 = vmatprep.subr.bf16.mxu0 0
        %3567 = vmatpush1.bf16.xpose.msra.mxu0 %v3550
        %3568 = vmatprep.subr.bf16.mxu0 0
        %3569 = vmatpush2.bf16.xpose.msra.mxu0 0
        %3570 = vmatprep.subr.bf16.mxu0 0
        %3571 = vmatpush2.bf16.xpose.msra.mxu0 0
        %3572 = vmatprep.subr.bf16.mxu0 0
        %3573 = vmatpush2.bf16.xpose.msra.mxu0 0
        %3574 = vmatprep.subr.bf16.mxu0 0
        %3575 = vmatpush2.bf16.xpose.msra.mxu0 0
        %3576 = vmatprep.subr.bf16.mxu0 0
        %3577 = vmatpush2.bf16.xpose.msra.mxu0 0
        %3578 = vmatprep.subr.bf16.mxu0 0
        %3579 = vmatpush2.bf16.xpose.msra.mxu0 0
        %3580 = vmatprep.subr.bf16.mxu0 0
        %3581 = vmatpush2.bf16.xpose.msra.mxu0 0
        %3582 = vmatprep.subr.bf16.mxu0 0
        %3583 = vmatpush2.bf16.xpose.msra.mxu0 0
        %3584 = vmatprep.mubr.bf16.mxu0 0
        %3585 = vmatmul.mubr.bf16.gmra.mxu0 %v3547
        %v3586 = vpop.f32.mrf.mxu0
        %v3587 = vadd.f32 %v3205, %v3586
        %v3588 = vpop.f32.mrf.mxu0
        %v3589 = vpop.f32.mrf.mxu0
        %v3590 = vpop.f32.mrf.mxu0
        %3591 = vdwg.mxu0
        %v3592 = vsel %vm3253, %v3587, -inf
        %3593 = vmax.xlane.f32.xlu0 %v3592
        %v3594 = vpop.xlane.xlu0 %3593
        %v3595 = vsub.f32 %v3587, %v3594
        %v3596 = vmul.f32 %v3595, 1.442695
        %v3597 = vpow.pop %v3596
        %v3598 = vsel %vm3253, %v3597, 0.0
        %3599 = vadd.xlane.f32.xlu0 %v3598
        %v3600 = vpop.xlane.xlu0 %3599
        %v3601 = vrcp.pop %v3600
        %v3602 = vmul.f32 %v3597, %v3601
        %s3603 = scalar_lea.vmem %s315, 24 [#allocation11]
        %3604 = vst.msk [vmem:[%s3603] sm:$0xff] %vm3253, %v3602
        %v3605 = vpack.c.bf16 %v3602, %v3602
        %3607 = vrot.lane.b32.xlu0 %v3202, 64
        %v3608 = vpop.permute.xlu0 %3607
        %v3610 = vsel %vm3253, %v3605, 0
        %v3613 = vsel %vm3270, %v3608, 0
        %3615 = vmatprep.subr.bf16.mxu0 0
        %3616 = vmatpush1.bf16.msra.mxu0 0
        %3617 = vmatprep.subr.bf16.mxu0 0
        %3618 = vmatpush1.bf16.msra.mxu0 0
        %3619 = vmatprep.subr.bf16.mxu0 0
        %3620 = vmatpush1.bf16.msra.mxu0 0
        %3621 = vmatprep.subr.bf16.mxu0 0
        %3622 = vmatpush1.bf16.msra.mxu0 0
        %3623 = vmatprep.subr.bf16.mxu0 0
        %3624 = vmatpush1.bf16.msra.mxu0 0
        %3625 = vmatprep.subr.bf16.mxu0 0
        %3626 = vmatpush1.bf16.msra.mxu0 0
        %3627 = vmatprep.subr.bf16.mxu0 0
        %3628 = vmatpush1.bf16.msra.mxu0 0
        %3629 = vmatprep.subr.bf16.mxu0 0
        %3630 = vmatpush1.bf16.msra.mxu0 %v3613
        %3631 = vmatprep.subr.bf16.mxu0 0
        %3632 = vmatpush2.bf16.msra.mxu0 0
        %3633 = vmatprep.subr.bf16.mxu0 0
        %3634 = vmatpush2.bf16.msra.mxu0 0
        %3635 = vmatprep.subr.bf16.mxu0 0
        %3636 = vmatpush2.bf16.msra.mxu0 0
        %3637 = vmatprep.subr.bf16.mxu0 0
        %3638 = vmatpush2.bf16.msra.mxu0 0
        %3639 = vmatprep.subr.bf16.mxu0 0
        %3640 = vmatpush2.bf16.msra.mxu0 0
        %3641 = vmatprep.subr.bf16.mxu0 0
        %3642 = vmatpush2.bf16.msra.mxu0 0
        %3643 = vmatprep.subr.bf16.mxu0 0
        %3644 = vmatpush2.bf16.msra.mxu0 0
        %3645 = vmatprep.subr.bf16.mxu0 0
        %3646 = vmatpush2.bf16.msra.mxu0 0
        %3647 = vmatprep.mubr.bf16.mxu0 0
        %3648 = vmatmul.mubr.bf16.gmra.mxu0 %v3610
        %v3649 = vpop.f32.mrf.mxu0
        %v3650 = vadd.f32 0.0, %v3649
        %v3651 = vpop.f32.mrf.mxu0
        %v3652 = vpop.f32.mrf.mxu0
        %v3653 = vpop.f32.mrf.mxu0
        %3654 = vdwg.mxu0
        %s3655 = scalar_lea.vmem %s308, 24 [#allocation10]
        %3656 = vst.msk [vmem:[%s3655] sm:$0xff] %vm3206, %v3650
        %v3658 = vsel %vm3206, %v3195, 0
        %v3661 = vsel %vm3206, %v3199, 0
        %3663 = vmatprep.subr.bf16.mxu0 0
        %3664 = vmatpush1.bf16.xpose.msra.mxu0 0
        %3665 = vmatprep.subr.bf16.mxu0 0
        %3666 = vmatpush1.bf16.xpose.msra.mxu0 0
        %3667 = vmatprep.subr.bf16.mxu0 0
        %3668 = vmatpush1.bf16.xpose.msra.mxu0 0
        %3669 = vmatprep.subr.bf16.mxu0 0
        %3670 = vmatpush1.bf16.xpose.msra.mxu0 0
        %3671 = vmatprep.subr.bf16.mxu0 0
        %3672 = vmatpush1.bf16.xpose.msra.mxu0 0
        %3673 = vmatprep.subr.bf16.mxu0 0
        %3674 = vmatpush1.bf16.xpose.msra.mxu0 0
        %3675 = vmatprep.subr.bf16.mxu0 0
        %3676 = vmatpush1.bf16.xpose.msra.mxu0 0
        %3677 = vmatprep.subr.bf16.mxu0 0
        %3678 = vmatpush1.bf16.xpose.msra.mxu0 %v3661
        %3679 = vmatprep.subr.bf16.mxu0 0
        %3680 = vmatpush2.bf16.xpose.msra.mxu0 0
        %3681 = vmatprep.subr.bf16.mxu0 0
        %3682 = vmatpush2.bf16.xpose.msra.mxu0 0
        %3683 = vmatprep.subr.bf16.mxu0 0
        %3684 = vmatpush2.bf16.xpose.msra.mxu0 0
        %3685 = vmatprep.subr.bf16.mxu0 0
        %3686 = vmatpush2.bf16.xpose.msra.mxu0 0
        %3687 = vmatprep.subr.bf16.mxu0 0
        %3688 = vmatpush2.bf16.xpose.msra.mxu0 0
        %3689 = vmatprep.subr.bf16.mxu0 0
        %3690 = vmatpush2.bf16.xpose.msra.mxu0 0
        %3691 = vmatprep.subr.bf16.mxu0 0
        %3692 = vmatpush2.bf16.xpose.msra.mxu0 0
        %3693 = vmatprep.subr.bf16.mxu0 0
        %3694 = vmatpush2.bf16.xpose.msra.mxu0 0
        %3695 = vmatprep.mubr.bf16.mxu0 0
        %3696 = vmatmul.mubr.bf16.gmra.mxu0 %v3658
        %v3697 = vpop.f32.mrf.mxu0
        %v3698 = vadd.f32 %v3205, %v3697
        %v3699 = vpop.f32.mrf.mxu0
        %v3700 = vpop.f32.mrf.mxu0
        %v3701 = vpop.f32.mrf.mxu0
        %3702 = vdwg.mxu0
        %v3703 = vsel %vm3253, %v3698, -inf
        %3704 = vmax.xlane.f32.xlu0 %v3703
        %v3705 = vpop.xlane.xlu0 %3704
        %v3706 = vsub.f32 %v3698, %v3705
        %v3707 = vmul.f32 %v3706, 1.442695
        %v3708 = vpow.pop %v3707
        %v3709 = vsel %vm3253, %v3708, 0.0
        %3710 = vadd.xlane.f32.xlu0 %v3709
        %v3711 = vpop.xlane.xlu0 %3710
        %v3712 = vrcp.pop %v3711
        %v3713 = vmul.f32 %v3708, %v3712
        %s3714 = scalar_lea.vmem %s315, 32 [#allocation11]
        %3715 = vst.msk [vmem:[%s3714] sm:$0xff] %vm3253, %v3713
        %v3716 = vpack.c.bf16 %v3713, %v3713
        %v3718 = vsel %vm3253, %v3716, 0
        %v3721 = vsel %vm3270, %v3203, 0
        %3723 = vmatprep.subr.bf16.mxu0 0
        %3724 = vmatpush1.bf16.msra.mxu0 0
        %3725 = vmatprep.subr.bf16.mxu0 0
        %3726 = vmatpush1.bf16.msra.mxu0 0
        %3727 = vmatprep.subr.bf16.mxu0 0
        %3728 = vmatpush1.bf16.msra.mxu0 0
        %3729 = vmatprep.subr.bf16.mxu0 0
        %3730 = vmatpush1.bf16.msra.mxu0 0
        %3731 = vmatprep.subr.bf16.mxu0 0
        %3732 = vmatpush1.bf16.msra.mxu0 0
        %3733 = vmatprep.subr.bf16.mxu0 0
        %3734 = vmatpush1.bf16.msra.mxu0 0
        %3735 = vmatprep.subr.bf16.mxu0 0
        %3736 = vmatpush1.bf16.msra.mxu0 0
        %3737 = vmatprep.subr.bf16.mxu0 0
        %3738 = vmatpush1.bf16.msra.mxu0 %v3721
        %3739 = vmatprep.subr.bf16.mxu0 0
        %3740 = vmatpush2.bf16.msra.mxu0 0
        %3741 = vmatprep.subr.bf16.mxu0 0
        %3742 = vmatpush2.bf16.msra.mxu0 0
        %3743 = vmatprep.subr.bf16.mxu0 0
        %3744 = vmatpush2.bf16.msra.mxu0 0
        %3745 = vmatprep.subr.bf16.mxu0 0
        %3746 = vmatpush2.bf16.msra.mxu0 0
        %3747 = vmatprep.subr.bf16.mxu0 0
        %3748 = vmatpush2.bf16.msra.mxu0 0
        %3749 = vmatprep.subr.bf16.mxu0 0
        %3750 = vmatpush2.bf16.msra.mxu0 0
        %3751 = vmatprep.subr.bf16.mxu0 0
        %3752 = vmatpush2.bf16.msra.mxu0 0
        %3753 = vmatprep.subr.bf16.mxu0 0
        %3754 = vmatpush2.bf16.msra.mxu0 0
        %3755 = vmatprep.mubr.bf16.mxu0 0
        %3756 = vmatmul.mubr.bf16.gmra.mxu0 %v3718
        %v3757 = vpop.f32.mrf.mxu0
        %v3758 = vadd.f32 0.0, %v3757
        %v3759 = vpop.f32.mrf.mxu0
        %v3760 = vpop.f32.mrf.mxu0
        %v3761 = vpop.f32.mrf.mxu0
        %3762 = vdwg.mxu0
        %s3763 = scalar_lea.vmem %s308, 32 [#allocation10]
        %3764 = vst.msk [vmem:[%s3763] sm:$0xff] %vm3206, %v3758
        %3766 = vrot.lane.b32.xlu0 %v3195, 64
        %v3767 = vpop.permute.xlu0 %3766
        %3769 = vrot.lane.b32.xlu0 %v3199, 64
        %v3770 = vpop.permute.xlu0 %3769
        %v3772 = vsel %vm3206, %v3767, 0
        %v3775 = vsel %vm3206, %v3770, 0
        %3777 = vmatprep.subr.bf16.mxu0 0
        %3778 = vmatpush1.bf16.xpose.msra.mxu0 0
        %3779 = vmatprep.subr.bf16.mxu0 0
        %3780 = vmatpush1.bf16.xpose.msra.mxu0 0
        %3781 = vmatprep.subr.bf16.mxu0 0
        %3782 = vmatpush1.bf16.xpose.msra.mxu0 0
        %3783 = vmatprep.subr.bf16.mxu0 0
        %3784 = vmatpush1.bf16.xpose.msra.mxu0 0
        %3785 = vmatprep.subr.bf16.mxu0 0
        %3786 = vmatpush1.bf16.xpose.msra.mxu0 0
        %3787 = vmatprep.subr.bf16.mxu0 0
        %3788 = vmatpush1.bf16.xpose.msra.mxu0 0
        %3789 = vmatprep.subr.bf16.mxu0 0
        %3790 = vmatpush1.bf16.xpose.msra.mxu0 0
        %3791 = vmatprep.subr.bf16.mxu0 0
        %3792 = vmatpush1.bf16.xpose.msra.mxu0 %v3775
        %3793 = vmatprep.subr.bf16.mxu0 0
        %3794 = vmatpush2.bf16.xpose.msra.mxu0 0
        %3795 = vmatprep.subr.bf16.mxu0 0
        %3796 = vmatpush2.bf16.xpose.msra.mxu0 0
        %3797 = vmatprep.subr.bf16.mxu0 0
        %3798 = vmatpush2.bf16.xpose.msra.mxu0 0
        %3799 = vmatprep.subr.bf16.mxu0 0
        %3800 = vmatpush2.bf16.xpose.msra.mxu0 0
        %3801 = vmatprep.subr.bf16.mxu0 0
        %3802 = vmatpush2.bf16.xpose.msra.mxu0 0
        %3803 = vmatprep.subr.bf16.mxu0 0
        %3804 = vmatpush2.bf16.xpose.msra.mxu0 0
        %3805 = vmatprep.subr.bf16.mxu0 0
        %3806 = vmatpush2.bf16.xpose.msra.mxu0 0
        %3807 = vmatprep.subr.bf16.mxu0 0
        %3808 = vmatpush2.bf16.xpose.msra.mxu0 0
        %3809 = vmatprep.mubr.bf16.mxu0 0
        %3810 = vmatmul.mubr.bf16.gmra.mxu0 %v3772
        %v3811 = vpop.f32.mrf.mxu0
        %v3812 = vadd.f32 %v3205, %v3811
        %v3813 = vpop.f32.mrf.mxu0
        %v3814 = vpop.f32.mrf.mxu0
        %v3815 = vpop.f32.mrf.mxu0
        %3816 = vdwg.mxu0
        %v3817 = vsel %vm3253, %v3812, -inf
        %3818 = vmax.xlane.f32.xlu0 %v3817
        %v3819 = vpop.xlane.xlu0 %3818
        %v3820 = vsub.f32 %v3812, %v3819
        %v3821 = vmul.f32 %v3820, 1.442695
        %v3822 = vpow.pop %v3821
        %v3823 = vsel %vm3253, %v3822, 0.0
        %3824 = vadd.xlane.f32.xlu0 %v3823
        %v3825 = vpop.xlane.xlu0 %3824
        %v3826 = vrcp.pop %v3825
        %v3827 = vmul.f32 %v3822, %v3826
        %s3828 = scalar_lea.vmem %s315, 40 [#allocation11]
        %3829 = vst.msk [vmem:[%s3828] sm:$0xff] %vm3253, %v3827
        %v3830 = vpack.c.bf16 %v3827, %v3827
        %3832 = vrot.lane.b32.xlu0 %v3203, 64
        %v3833 = vpop.permute.xlu0 %3832
        %v3835 = vsel %vm3253, %v3830, 0
        %v3838 = vsel %vm3270, %v3833, 0
        %3840 = vmatprep.subr.bf16.mxu0 0
        %3841 = vmatpush1.bf16.msra.mxu0 0
        %3842 = vmatprep.subr.bf16.mxu0 0
        %3843 = vmatpush1.bf16.msra.mxu0 0
        %3844 = vmatprep.subr.bf16.mxu0 0
        %3845 = vmatpush1.bf16.msra.mxu0 0
        %3846 = vmatprep.subr.bf16.mxu0 0
        %3847 = vmatpush1.bf16.msra.mxu0 0
        %3848 = vmatprep.subr.bf16.mxu0 0
        %3849 = vmatpush1.bf16.msra.mxu0 0
        %3850 = vmatprep.subr.bf16.mxu0 0
        %3851 = vmatpush1.bf16.msra.mxu0 0
        %3852 = vmatprep.subr.bf16.mxu0 0
        %3853 = vmatpush1.bf16.msra.mxu0 0
        %3854 = vmatprep.subr.bf16.mxu0 0
        %3855 = vmatpush1.bf16.msra.mxu0 %v3838
        %3856 = vmatprep.subr.bf16.mxu0 0
        %3857 = vmatpush2.bf16.msra.mxu0 0
        %3858 = vmatprep.subr.bf16.mxu0 0
        %3859 = vmatpush2.bf16.msra.mxu0 0
        %3860 = vmatprep.subr.bf16.mxu0 0
        %3861 = vmatpush2.bf16.msra.mxu0 0
        %3862 = vmatprep.subr.bf16.mxu0 0
        %3863 = vmatpush2.bf16.msra.mxu0 0
        %3864 = vmatprep.subr.bf16.mxu0 0
        %3865 = vmatpush2.bf16.msra.mxu0 0
        %3866 = vmatprep.subr.bf16.mxu0 0
        %3867 = vmatpush2.bf16.msra.mxu0 0
        %3868 = vmatprep.subr.bf16.mxu0 0
        %3869 = vmatpush2.bf16.msra.mxu0 0
        %3870 = vmatprep.subr.bf16.mxu0 0
        %3871 = vmatpush2.bf16.msra.mxu0 0
        %3872 = vmatprep.mubr.bf16.mxu0 0
        %3873 = vmatmul.mubr.bf16.gmra.mxu0 %v3835
        %v3874 = vpop.f32.mrf.mxu0
        %v3875 = vadd.f32 0.0, %v3874
        %v3876 = vpop.f32.mrf.mxu0
        %v3877 = vpop.f32.mrf.mxu0
        %v3878 = vpop.f32.mrf.mxu0
        %3879 = vdwg.mxu0
        %s3880 = scalar_lea.vmem %s308, 40 [#allocation10]
        %3881 = vst.msk [vmem:[%s3880] sm:$0xff] %vm3206, %v3875
        %v3883 = vsel %vm3206, %v3196, 0
        %v3886 = vsel %vm3206, %v3200, 0
        %3888 = vmatprep.subr.bf16.mxu0 0
        %3889 = vmatpush1.bf16.xpose.msra.mxu0 0
        %3890 = vmatprep.subr.bf16.mxu0 0
        %3891 = vmatpush1.bf16.xpose.msra.mxu0 0
        %3892 = vmatprep.subr.bf16.mxu0 0
        %3893 = vmatpush1.bf16.xpose.msra.mxu0 0
        %3894 = vmatprep.subr.bf16.mxu0 0
        %3895 = vmatpush1.bf16.xpose.msra.mxu0 0
        %3896 = vmatprep.subr.bf16.mxu0 0
        %3897 = vmatpush1.bf16.xpose.msra.mxu0 0
        %3898 = vmatprep.subr.bf16.mxu0 0
        %3899 = vmatpush1.bf16.xpose.msra.mxu0 0
        %3900 = vmatprep.subr.bf16.mxu0 0
        %3901 = vmatpush1.bf16.xpose.msra.mxu0 0
        %3902 = vmatprep.subr.bf16.mxu0 0
        %3903 = vmatpush1.bf16.xpose.msra.mxu0 %v3886
        %3904 = vmatprep.subr.bf16.mxu0 0
        %3905 = vmatpush2.bf16.xpose.msra.mxu0 0
        %3906 = vmatprep.subr.bf16.mxu0 0
        %3907 = vmatpush2.bf16.xpose.msra.mxu0 0
        %3908 = vmatprep.subr.bf16.mxu0 0
        %3909 = vmatpush2.bf16.xpose.msra.mxu0 0
        %3910 = vmatprep.subr.bf16.mxu0 0
        %3911 = vmatpush2.bf16.xpose.msra.mxu0 0
        %3912 = vmatprep.subr.bf16.mxu0 0
        %3913 = vmatpush2.bf16.xpose.msra.mxu0 0
        %3914 = vmatprep.subr.bf16.mxu0 0
        %3915 = vmatpush2.bf16.xpose.msra.mxu0 0
        %3916 = vmatprep.subr.bf16.mxu0 0
        %3917 = vmatpush2.bf16.xpose.msra.mxu0 0
        %3918 = vmatprep.subr.bf16.mxu0 0
        %3919 = vmatpush2.bf16.xpose.msra.mxu0 0
        %3920 = vmatprep.mubr.bf16.mxu0 0
        %3921 = vmatmul.mubr.bf16.gmra.mxu0 %v3883
        %v3922 = vpop.f32.mrf.mxu0
        %v3923 = vadd.f32 %v3205, %v3922
        %v3924 = vpop.f32.mrf.mxu0
        %v3925 = vpop.f32.mrf.mxu0
        %v3926 = vpop.f32.mrf.mxu0
        %3927 = vdwg.mxu0
        %v3928 = vsel %vm3253, %v3923, -inf
        %3929 = vmax.xlane.f32.xlu0 %v3928
        %v3930 = vpop.xlane.xlu0 %3929
        %v3931 = vsub.f32 %v3923, %v3930
        %v3932 = vmul.f32 %v3931, 1.442695
        %v3933 = vpow.pop %v3932
        %v3934 = vsel %vm3253, %v3933, 0.0
        %3935 = vadd.xlane.f32.xlu0 %v3934
        %v3936 = vpop.xlane.xlu0 %3935
        %v3937 = vrcp.pop %v3936
        %v3938 = vmul.f32 %v3933, %v3937
        %s3939 = scalar_lea.vmem %s315, 48 [#allocation11]
        %3940 = vst.msk [vmem:[%s3939] sm:$0xff] %vm3253, %v3938
        %v3941 = vpack.c.bf16 %v3938, %v3938
        %v3943 = vsel %vm3253, %v3941, 0
        %v3946 = vsel %vm3270, %v3204, 0
        %3948 = vmatprep.subr.bf16.mxu0 0
        %3949 = vmatpush1.bf16.msra.mxu0 0
        %3950 = vmatprep.subr.bf16.mxu0 0
        %3951 = vmatpush1.bf16.msra.mxu0 0
        %3952 = vmatprep.subr.bf16.mxu0 0
        %3953 = vmatpush1.bf16.msra.mxu0 0
        %3954 = vmatprep.subr.bf16.mxu0 0
        %3955 = vmatpush1.bf16.msra.mxu0 0
        %3956 = vmatprep.subr.bf16.mxu0 0
        %3957 = vmatpush1.bf16.msra.mxu0 0
        %3958 = vmatprep.subr.bf16.mxu0 0
        %3959 = vmatpush1.bf16.msra.mxu0 0
        %3960 = vmatprep.subr.bf16.mxu0 0
        %3961 = vmatpush1.bf16.msra.mxu0 0
        %3962 = vmatprep.subr.bf16.mxu0 0
        %3963 = vmatpush1.bf16.msra.mxu0 %v3946
        %3964 = vmatprep.subr.bf16.mxu0 0
        %3965 = vmatpush2.bf16.msra.mxu0 0
        %3966 = vmatprep.subr.bf16.mxu0 0
        %3967 = vmatpush2.bf16.msra.mxu0 0
        %3968 = vmatprep.subr.bf16.mxu0 0
        %3969 = vmatpush2.bf16.msra.mxu0 0
        %3970 = vmatprep.subr.bf16.mxu0 0
        %3971 = vmatpush2.bf16.msra.mxu0 0
        %3972 = vmatprep.subr.bf16.mxu0 0
        %3973 = vmatpush2.bf16.msra.mxu0 0
        %3974 = vmatprep.subr.bf16.mxu0 0
        %3975 = vmatpush2.bf16.msra.mxu0 0
        %3976 = vmatprep.subr.bf16.mxu0 0
        %3977 = vmatpush2.bf16.msra.mxu0 0
        %3978 = vmatprep.subr.bf16.mxu0 0
        %3979 = vmatpush2.bf16.msra.mxu0 0
        %3980 = vmatprep.mubr.bf16.mxu0 0
        %3981 = vmatmul.mubr.bf16.gmra.mxu0 %v3943
        %v3982 = vpop.f32.mrf.mxu0
        %v3983 = vadd.f32 0.0, %v3982
        %v3984 = vpop.f32.mrf.mxu0
        %v3985 = vpop.f32.mrf.mxu0
        %v3986 = vpop.f32.mrf.mxu0
        %3987 = vdwg.mxu0
        %s3988 = scalar_lea.vmem %s308, 48 [#allocation10]
        %3989 = vst.msk [vmem:[%s3988] sm:$0xff] %vm3206, %v3983
        %3991 = vrot.lane.b32.xlu0 %v3196, 64
        %v3992 = vpop.permute.xlu0 %3991
        %3994 = vrot.lane.b32.xlu0 %v3200, 64
        %v3995 = vpop.permute.xlu0 %3994
        %v3997 = vsel %vm3206, %v3992, 0
        %v4000 = vsel %vm3206, %v3995, 0
        %4002 = vmatprep.subr.bf16.mxu0 0
        %4003 = vmatpush1.bf16.xpose.msra.mxu0 0
        %4004 = vmatprep.subr.bf16.mxu0 0
        %4005 = vmatpush1.bf16.xpose.msra.mxu0 0
        %4006 = vmatprep.subr.bf16.mxu0 0
        %4007 = vmatpush1.bf16.xpose.msra.mxu0 0
        %4008 = vmatprep.subr.bf16.mxu0 0
        %4009 = vmatpush1.bf16.xpose.msra.mxu0 0
        %4010 = vmatprep.subr.bf16.mxu0 0
        %4011 = vmatpush1.bf16.xpose.msra.mxu0 0
        %4012 = vmatprep.subr.bf16.mxu0 0
        %4013 = vmatpush1.bf16.xpose.msra.mxu0 0
        %4014 = vmatprep.subr.bf16.mxu0 0
        %4015 = vmatpush1.bf16.xpose.msra.mxu0 0
        %4016 = vmatprep.subr.bf16.mxu0 0
        %4017 = vmatpush1.bf16.xpose.msra.mxu0 %v4000
        %4018 = vmatprep.subr.bf16.mxu0 0
        %4019 = vmatpush2.bf16.xpose.msra.mxu0 0
        %4020 = vmatprep.subr.bf16.mxu0 0
        %4021 = vmatpush2.bf16.xpose.msra.mxu0 0
        %4022 = vmatprep.subr.bf16.mxu0 0
        %4023 = vmatpush2.bf16.xpose.msra.mxu0 0
        %4024 = vmatprep.subr.bf16.mxu0 0
        %4025 = vmatpush2.bf16.xpose.msra.mxu0 0
        %4026 = vmatprep.subr.bf16.mxu0 0
        %4027 = vmatpush2.bf16.xpose.msra.mxu0 0
        %4028 = vmatprep.subr.bf16.mxu0 0
        %4029 = vmatpush2.bf16.xpose.msra.mxu0 0
        %4030 = vmatprep.subr.bf16.mxu0 0
        %4031 = vmatpush2.bf16.xpose.msra.mxu0 0
        %4032 = vmatprep.subr.bf16.mxu0 0
        %4033 = vmatpush2.bf16.xpose.msra.mxu0 0
        %4034 = vmatprep.mubr.bf16.mxu0 0
        %4035 = vmatmul.mubr.bf16.gmra.mxu0 %v3997
        %v4036 = vpop.f32.mrf.mxu0
        %v4037 = vadd.f32 %v3205, %v4036
        %v4038 = vpop.f32.mrf.mxu0
        %v4039 = vpop.f32.mrf.mxu0
        %v4040 = vpop.f32.mrf.mxu0
        %4041 = vdwg.mxu0
        %v4042 = vsel %vm3253, %v4037, -inf
        %4043 = vmax.xlane.f32.xlu0 %v4042
        %v4044 = vpop.xlane.xlu0 %4043
        %v4045 = vsub.f32 %v4037, %v4044
        %v4046 = vmul.f32 %v4045, 1.442695
        %v4047 = vpow.pop %v4046
        %v4048 = vsel %vm3253, %v4047, 0.0
        %4049 = vadd.xlane.f32.xlu0 %v4048
        %v4050 = vpop.xlane.xlu0 %4049
        %v4051 = vrcp.pop %v4050
        %v4052 = vmul.f32 %v4047, %v4051
        %s4053 = scalar_lea.vmem %s315, 56 [#allocation11]
        %4054 = vst.msk [vmem:[%s4053] sm:$0xff] %vm3253, %v4052
        %v4055 = vpack.c.bf16 %v4052, %v4052
        %4057 = vrot.lane.b32.xlu0 %v3204, 64
        %v4058 = vpop.permute.xlu0 %4057
        %v4060 = vsel %vm3253, %v4055, 0
        %v4063 = vsel %vm3270, %v4058, 0
        %4065 = vmatprep.subr.bf16.mxu0 0
        %4066 = vmatpush1.bf16.msra.mxu0 0
        %4067 = vmatprep.subr.bf16.mxu0 0
        %4068 = vmatpush1.bf16.msra.mxu0 0
        %4069 = vmatprep.subr.bf16.mxu0 0
        %4070 = vmatpush1.bf16.msra.mxu0 0
        %4071 = vmatprep.subr.bf16.mxu0 0
        %4072 = vmatpush1.bf16.msra.mxu0 0
        %4073 = vmatprep.subr.bf16.mxu0 0
        %4074 = vmatpush1.bf16.msra.mxu0 0
        %4075 = vmatprep.subr.bf16.mxu0 0
        %4076 = vmatpush1.bf16.msra.mxu0 0
        %4077 = vmatprep.subr.bf16.mxu0 0
        %4078 = vmatpush1.bf16.msra.mxu0 0
        %4079 = vmatprep.subr.bf16.mxu0 0
        %4080 = vmatpush1.bf16.msra.mxu0 %v4063
        %4081 = vmatprep.subr.bf16.mxu0 0
        %4082 = vmatpush2.bf16.msra.mxu0 0
        %4083 = vmatprep.subr.bf16.mxu0 0
        %4084 = vmatpush2.bf16.msra.mxu0 0
        %4085 = vmatprep.subr.bf16.mxu0 0
        %4086 = vmatpush2.bf16.msra.mxu0 0
        %4087 = vmatprep.subr.bf16.mxu0 0
        %4088 = vmatpush2.bf16.msra.mxu0 0
        %4089 = vmatprep.subr.bf16.mxu0 0
        %4090 = vmatpush2.bf16.msra.mxu0 0
        %4091 = vmatprep.subr.bf16.mxu0 0
        %4092 = vmatpush2.bf16.msra.mxu0 0
        %4093 = vmatprep.subr.bf16.mxu0 0
        %4094 = vmatpush2.bf16.msra.mxu0 0
        %4095 = vmatprep.subr.bf16.mxu0 0
        %4096 = vmatpush2.bf16.msra.mxu0 0
        %4097 = vmatprep.mubr.bf16.mxu0 0
        %4098 = vmatmul.mubr.bf16.gmra.mxu0 %v4060
        %v4099 = vpop.f32.mrf.mxu0
        %v4100 = vadd.f32 0.0, %v4099
        %v4101 = vpop.f32.mrf.mxu0
        %v4102 = vpop.f32.mrf.mxu0
        %v4103 = vpop.f32.mrf.mxu0
        %4104 = vdwg.mxu0
        %s4105 = scalar_lea.vmem %s308, 56 [#allocation10]
        %4106 = vst.msk [vmem:[%s4105] sm:$0xff] %vm3206, %v4100
        %s4107 = sand.u32 %s132, 1
        %s4108 = scalar_lea.sflag [#allocation4], %s4107
        %s4109 = sand.u32 %s132, 1
        %s4110 = smul.addr %s4109, 64
        %s4111 = scalar_lea.vmem [#allocation10], %s4110
        %s4112 = sand.u32 %s158, 1
        %s4113 = scalar_lea.sflag [#allocation12], %s4112
        %s4114 = sand.u32 %s158, 1
        %s4115 = smul.addr %s4114, 64
        %s4116 = scalar_lea.vmem [#allocation11], %s4115
        // Predicated region
        $region53: #{tpu_custom_call.1} parent=35 // pred_check
          %p4117 = pneg %p142
        $region54: #{tpu_custom_call.1} parent=35 // pred_check_branch
          %4119 = sbr.rel (%p4117) target = $region56
        $region55: #{tpu_custom_call.1} parent=35 // pred_region
          %s4121 = ssub.s32 1024, 1024
          %4122 = vsyncadd %s4108, %s4121
          %s4123 = smul.addr %s30, 8
          %s4124 = smul.addr %s4123, 128
          %s4125 = scalar_lea.hbm %s4, %s4124
          %s4126 = sshll.u32 %s4111, 4
          %s4127 = int_to_ptr.vmem [resolvable:$true] %s4126
          %4132 = dma.vmem_to_hbm [thread:$0]  %s4127, 1024, %s4125, %s4108, 128, 128, 8
        $region56: #{tpu_custom_call.1} parent=35 // pred_fallthru
          _
        // Predicated region
        $region57: #{tpu_custom_call.1} parent=35 // pred_check
          %p4133 = pneg %p168
        $region58: #{tpu_custom_call.1} parent=35 // pred_check_branch
          %4135 = sbr.rel (%p4133) target = $region60
        $region59: #{tpu_custom_call.1} parent=35 // pred_region
          %s4137 = ssub.s32 1024, 1024
          %4138 = vsyncadd %s4113, %s4137
          %s4139 = smul.addr %s30, 8
          %s4140 = smul.addr %s4139, 128
          %s4141 = scalar_lea.hbm %s5, %s4140
          %s4142 = sshll.u32 %s4116, 4
          %s4143 = int_to_ptr.vmem [resolvable:$true] %s4142
          %4148 = dma.vmem_to_hbm [thread:$0]  %s4143, 1024, %s4141, %s4113, 128, 128, 8
        $region60: #{tpu_custom_call.1} parent=35 // pred_fallthru
          _
      $region36: #{tpu_custom_call.1} parent=5 // pred_fallthru
        _
      %p4149 = scmp.le.s32.totalorder 2, %s25
      // Predicated region
      $region61: #{tpu_custom_call.1} parent=5 // pred_check
        %p4150 = pneg %p4149
      $region62: #{tpu_custom_call.1} parent=5 // pred_check_branch
        %4152 = sbr.rel (%p4150) target = $region64
      $region63: #{tpu_custom_call.1} parent=5 // pred_region
        %s4153 = ssub.s32 %s25, 2
        // Predicated region
        $region65: #{tpu_custom_call.1} parent=63 // pred_check
          %p4154 = pneg %p148
        $region66: #{tpu_custom_call.1} parent=63 // pred_check_branch
          %4156 = sbr.rel (%p4154) target = $region68
        $region67: #{tpu_custom_call.1} parent=63 // pred_region
          %s4157 = sand.u32 %s133, 1
          %s4158 = scalar_lea.sflag [#allocation4], %s4157
          %s4159 = sand.u32 %s133, 1
          %s4160 = smul.addr %s4159, 64
          %s4161 = scalar_lea.vmem [#allocation10], %s4160
          %4162 = dma.done %s4158, 1024
        $region68: #{tpu_custom_call.1} parent=63 // pred_fallthru
          _
        // Predicated region
        $region69: #{tpu_custom_call.1} parent=63 // pred_check
          %p4163 = pneg %p174
        $region70: #{tpu_custom_call.1} parent=63 // pred_check_branch
          %4165 = sbr.rel (%p4163) target = $region72
        $region71: #{tpu_custom_call.1} parent=63 // pred_region
          %s4166 = sand.u32 %s159, 1
          %s4167 = scalar_lea.sflag [#allocation12], %s4166
          %s4168 = sand.u32 %s159, 1
          %s4169 = smul.addr %s4168, 64
          %s4170 = scalar_lea.vmem [#allocation11], %s4169
          %4171 = dma.done %s4167, 1024
        $region72: #{tpu_custom_call.1} parent=63 // pred_fallthru
          _
      $region64: #{tpu_custom_call.1} parent=5 // pred_fallthru
        _
    $region6: #{tpu_custom_call.1} parent=1 // loop_footer
      %s29 = sadd.s32 1, %s25
    $region7: #{tpu_custom_call.1} parent=1 // loop_footer_branch
      %24 = sbr.rel target = $region3
    $region8: #{tpu_custom_call.1} parent=1 // loop_exit
      _
    %4172 = vsyncpa [#allocation3], 1
    %s4173 = scalar_lea.sflag [#allocation3], 1
    %4174 = vsyncpa %s4173, 1
    %4175 = vsyncpa [#allocation6], 1
    %4176 = vsyncpa [#allocation9], 1
    %s4177 = scalar_lea.sflag [#allocation9], 1
    %4178 = vsyncpa %s4177, 1
    %4179 = vsyncpa [#allocation4], 1
    %s4180 = scalar_lea.sflag [#allocation4], 1
    %4181 = vsyncpa %s4180, 1
    %4182 = vsyncpa [#allocation12], 1
    %s4183 = scalar_lea.sflag [#allocation12], 1
    %4184 = vsyncpa %s4183, 1

</llo_original>
